<compile_context>
chip_gen: v7x
topology: tpu7x:2x2x1
jax: 0.10.0
libtpu: 0.0.40
codegen_flags: <defaults>
</compile_context>

<pallas_src>
import jax
import jax.numpy as jnp
import numpy as np
from jax.experimental import pallas as pl
from jax.experimental.pallas import tpu as pltpu

EPS = 1e-5
NUM_CLASSES = 10
OUT_PAD = 128          # lane-dense padded width of the final logits
IN_FEATURES = 128 * 5 * 5


def _round_up(v, m):
    return ((v + m - 1) // m) * m


# ---------------------------------------------------------------------------
# Pallas kernel: fused 3-layer MLP (BN already folded into weights/biases)
# ---------------------------------------------------------------------------
def _mlp_kernel(x_ref, w1_ref, b1_ref, w2_ref, b2_ref, w3_ref, b3_ref, o_ref):
    # In-kernel bf16 cast of x (no-op if x is already bf16) -> HBM streams
    # 4 B/elem (f32) or 2 B/elem (bf16) instead of 8 B/elem with a wrapper cast.
    x = x_ref[...].astype(jnp.bfloat16)

    # layer 1: Linear (+folded BN) + ReLU        -- bf16 operands, f32 accum
    h1 = jnp.dot(x, w1_ref[...], preferred_element_type=jnp.float32)
    h1 = jnp.maximum(h1 + b1_ref[...], 0.0)

    # layer 2: Linear (+folded BN) + ReLU
    h2 = jnp.dot(h1.astype(jnp.bfloat16), w2_ref[...],
                 preferred_element_type=jnp.float32)
    h2 = jnp.maximum(h2 + b2_ref[...], 0.0)

    # layer 3: Linear (output columns zero-padded to 128 lanes), bf16 store
    o = jnp.dot(h2.astype(jnp.bfloat16), w3_ref[...],
                preferred_element_type=jnp.float32)
    o_ref[...] = (o + b3_ref[...]).astype(o_ref.dtype)


# ---------------------------------------------------------------------------
# Host-side, one-time parameter transform: fold BN + cast matmul weights bf16
# ---------------------------------------------------------------------------
def fold_params(params):
    g1, be1, m1, v1 = params["bn1"]
    s1 = g1 / jnp.sqrt(v1 + EPS)
    w1 = (params["w1"] * s1[None, :]).astype(jnp.bfloat16)
    b1 = ((params["b1"] - m1) * s1 + be1).astype(jnp.float32)

    g2, be2, m2, v2 = params["bn2"]
    s2 = g2 / jnp.sqrt(v2 + EPS)
    w2 = (params["w2"] * s2[None, :]).astype(jnp.bfloat16)
    b2 = ((params["b2"] - m2) * s2 + be2).astype(jnp.float32)

    pad = OUT_PAD - params["w3"].shape[1]
    w3 = jnp.pad(params["w3"], ((0, 0), (0, pad))).astype(jnp.bfloat16)
    b3 = jnp.pad(params["b3"], (0, pad)).astype(jnp.float32)

    return {
        "w1": w1, "b1": b1.reshape(1, -1),
        "w2": w2, "b2": b2.reshape(1, -1),
        "w3": w3, "b3": b3.reshape(1, -1),
    }


# ---------------------------------------------------------------------------
# Forward pass (Pallas)
# ---------------------------------------------------------------------------
@jax.jit
def adda_classifier_forward(x, fp):
    N, D0 = x.shape
    D1 = fp["w1"].shape[1]
    D2 = fp["w2"].shape[1]
    D3 = fp["w3"].shape[1]          # padded (128) output width

    # Batch tile: big enough to fill the 256-wide MXU and amortize the
    # ~0.35 us/step overhead; capped at 512 for VMEM; split in two so the
    # "parallel" grid axis has >= 2 steps for v7x's two TensorCores whenever
    # the batch allows it.  Rounded to 16 (f32 + bf16 sublane friendly).
    tm = max(16, min(512, _round_up(pl.cdiv(N, 2), 16)))
    grid_m = pl.cdiv(N, tm)          # ragged last block handled by Pallas

    out = pl.pallas_call(
        _mlp_kernel,
        out_shape=jax.ShapeDtypeStruct((N, D3), jnp.bfloat16),
        grid_spec=pltpu.PrefetchScalarGridSpec(
            num_scalar_prefetch=0,
            grid=(grid_m,),
            in_specs=[
                pl.BlockSpec((tm, D0), lambda i: (i, 0)),   # x tile (f32/bf16)
                pl.BlockSpec((D0, D1), lambda i: (0, 0)),   # w1 (folded, bf16)
                pl.BlockSpec((1, D1), lambda i: (0, 0)),    # b1 (folded, f32)
                pl.BlockSpec((D1, D2), lambda i: (0, 0)),   # w2
                pl.BlockSpec((1, D2), lambda i: (0, 0)),    # b2
                pl.BlockSpec((D2, D3), lambda i: (0, 0)),   # w3 (lane-padded)
                pl.BlockSpec((1, D3), lambda i: (0, 0)),    # b3
            ],
            out_specs=pl.BlockSpec((tm, D3), lambda i: (i, 0)),
        ),
        compiler_params=pltpu.CompilerParams(
            dimension_semantics=("parallel",),
            # ~17 MiB worst case (tm=512, f32 x double-buffered + weights);
            # bump above v5e's 16 MiB default scoped limit, under v7x's 64 MiB.
            vmem_limit_bytes=40 * 1024 * 1024,
        ),
    )(x, fp["w1"], fp["b1"], fp["w2"], fp["b2"], fp["w3"], fp["b3"])

    return out[:, :NUM_CLASSES]


# ---------------------------------------------------------------------------
# Deterministic parameters (PyTorch-like init) + references
# ---------------------------------------------------------------------------
def make_params(key):
    ks = jax.random.split(key, 6)

    def linear(kw, kb, fin, fout):
        bound = 1.0 / np.sqrt(fin)
        w = jax.random.uniform(kw, (fin, fout), jnp.float32, -bound, bound)
        b = jax.random.uniform(kb, (fout,), jnp.float32, -bound, bound)
        return w, b

    def bn(c):
        gamma = 1.0 + 0.01 * jnp.arange(c, dtype=jnp.float32)
        beta = 0.02 * jnp.arange(c, dtype=jnp.float32)
        mean = 0.005 * jnp.arange(c, dtype=jnp.float32)
        var = 1.0 + 0.02 * jnp.arange(c, dtype=jnp.float32)
        return gamma, beta, mean, var

    w1, b1 = linear(ks[0], ks[1], IN_FEATURES, 256)
    w2, b2 = linear(ks[2], ks[3], 256, 128)
    w3, b3 = linear(ks[4], ks[5], 128, NUM_CLASSES)
    return {"w1": w1, "b1": b1, "bn1": bn(256),
            "w2": w2, "b2": b2, "bn2": bn(128),
            "w3": w3, "b3": b3}


def ref_forward(x, params):
    """Full-precision f32 reference with unfused eval-mode BatchNorm."""
    def bn(y, stats):
        gamma, beta, mean, var = stats
        return (y - mean) / jnp.sqrt(var + EPS) * gamma + beta

    y = x @ params["w1"] + params["b1"]
    y = jnp.maximum(bn(y, params["bn1"]), 0.0)
    y = y @ params["w2"] + params["b2"]
    y = jnp.maximum(bn(y, params["bn2"]), 0.0)
    return y @ params["w3"] + params["b3"]


def ref_forward_matched(x, fp):
    """Pure-JAX reference with the same bf16 operands / f32 accumulation
    as the kernel (tight tolerance check)."""
    h = jnp.dot(x.astype(jnp.bfloat16), fp["w1"],
                preferred_element_type=jnp.float32) + fp["b1"]
    h = jnp.maximum(h, 0.0)
    h = jnp.dot(h.astype(jnp.bfloat16), fp["w2"],
                preferred_element_type=jnp.float32) + fp["b2"]
    h = jnp.maximum(h, 0.0)
    o = jnp.dot(h.astype(jnp.bfloat16), fp["w3"],
                preferred_element_type=jnp.float32) + fp["b3"]
    return o[:, :NUM_CLASSES]


# ---------------------------------------------------------------------------
if __name__ == "__main__":
    key = jax.random.PRNGKey(0)
    kx, kp = jax.random.split(key)

    x = jax.random.normal(kx, (2, IN_FEATURES), jnp.float32)   # flattened features
    params = make_params(kp)
    fparams = fold_params(params)                               # one-time fold

    out = jax.block_until_ready(adda_classifier_forward(x, fparams))
    assert out.shape == (2, NUM_CLASSES), out.shape

    out_f32 = np.asarray(jnp.asarray(out, dtype=jnp.float32))
    ref_match = np.asarray(ref_forward_matched(x, fparams))     # same bf16 operands
    ref_full = np.asarray(ref_forward(x, params))               # f32 reference

    # Tight check vs. a bf16-operand reference (same numerics as the kernel).
    np.testing.assert_allclose(out_f32, ref_match, rtol=2e-2, atol=2e-2)
    # Loose check vs. the full-precision PyTorch-equivalent semantics.
    np.testing.assert_allclose(out_f32, ref_full, rtol=6e-2, atol=6e-2)
    print("KERNEL_OK")
</pallas_src>

<mosaic_0001>
module attributes {stable_mosaic.version = 11 : i64} {
  func.func @_mlp_kernel(%arg0: i32, %arg1: memref<16x3200xf32, #tpu.memory_space<vmem>>, %arg2: memref<3200x256xbf16, #tpu.memory_space<vmem>>, %arg3: memref<1x256xf32, #tpu.memory_space<vmem>>, %arg4: memref<256x128xbf16, #tpu.memory_space<vmem>>, %arg5: memref<1x128xf32, #tpu.memory_space<vmem>>, %arg6: memref<128x128xbf16, #tpu.memory_space<vmem>>, %arg7: memref<1x128xf32, #tpu.memory_space<vmem>>, %arg8: memref<16x128xbf16, #tpu.memory_space<vmem>>) attributes {dimension_semantics = [#tpu.dimension_semantics<parallel>], iteration_bounds = array<i64: 1>, scalar_prefetch = 0 : i64, scratch_operands = 0 : i64, tpu.core_type = #tpu.core_type<tc>, window_params = [{transform_indices = @transform_0, window_bounds = array<i64: 16, 3200>}, {pipeline_mode = #tpu.pipeline_mode<synchronous>, transform_indices = @transform_1, window_bounds = array<i64: 3200, 256>}, {pipeline_mode = #tpu.pipeline_mode<synchronous>, transform_indices = @transform_2, window_bounds = array<i64: 1, 256>}, {pipeline_mode = #tpu.pipeline_mode<synchronous>, transform_indices = @transform_3, window_bounds = array<i64: 256, 128>}, {pipeline_mode = #tpu.pipeline_mode<synchronous>, transform_indices = @transform_4, window_bounds = array<i64: 1, 128>}, {pipeline_mode = #tpu.pipeline_mode<synchronous>, transform_indices = @transform_5, window_bounds = array<i64: 128, 128>}, {pipeline_mode = #tpu.pipeline_mode<synchronous>, transform_indices = @transform_6, window_bounds = array<i64: 1, 128>}, {transform_indices = @transform_7, window_bounds = array<i64: 16, 128>}]} {
    %c0 = arith.constant 0 : index
    %c0_0 = arith.constant 0 : index
    %0 = vector.load %arg1[%c0, %c0_0] : memref<16x3200xf32, #tpu.memory_space<vmem>>, vector<16x3200xf32>
    %1 = arith.truncf %0 : vector<16x3200xf32> to vector<16x3200xbf16>
    %c0_1 = arith.constant 0 : index
    %c0_2 = arith.constant 0 : index
    %2 = vector.load %arg2[%c0_1, %c0_2] : memref<3200x256xbf16, #tpu.memory_space<vmem>>, vector<3200x256xbf16>
    %cst = arith.constant dense<0.000000e+00> : vector<16x256xf32>
    %3 = tpu.matmul %1, %2, %cst {dimension_numbers = #tpu.dot_dimension_numbers<[1], [0], [0], [1], [0, 0, 1, 1], [], []>} : vector<16x3200xbf16>, vector<3200x256xbf16>, vector<16x256xf32> -> vector<16x256xf32>
    %c0_3 = arith.constant 0 : index
    %c0_4 = arith.constant 0 : index
    %4 = vector.load %arg3[%c0_3, %c0_4] : memref<1x256xf32, #tpu.memory_space<vmem>>, vector<1x256xf32>
    %5 = vector.broadcast %4 : vector<1x256xf32> to vector<16x256xf32>
    %6 = arith.addf %3, %5 : vector<16x256xf32>
    %cst_5 = arith.constant 0.000000e+00 : f32
    %7 = vector.broadcast %cst_5 : f32 to vector<16x256xf32>
    %8 = arith.maximumf %6, %7 : vector<16x256xf32>
    %9 = arith.truncf %8 : vector<16x256xf32> to vector<16x256xbf16>
    %c0_6 = arith.constant 0 : index
    %c0_7 = arith.constant 0 : index
    %10 = vector.load %arg4[%c0_6, %c0_7] : memref<256x128xbf16, #tpu.memory_space<vmem>>, vector<256x128xbf16>
    %cst_8 = arith.constant dense<0.000000e+00> : vector<16x128xf32>
    %11 = tpu.matmul %9, %10, %cst_8 {dimension_numbers = #tpu.dot_dimension_numbers<[1], [0], [0], [1], [0, 0, 1, 1], [], []>} : vector<16x256xbf16>, vector<256x128xbf16>, vector<16x128xf32> -> vector<16x128xf32>
    %c0_9 = arith.constant 0 : index
    %c0_10 = arith.constant 0 : index
    %12 = vector.load %arg5[%c0_9, %c0_10] : memref<1x128xf32, #tpu.memory_space<vmem>>, vector<1x128xf32>
    %13 = vector.broadcast %12 : vector<1x128xf32> to vector<16x128xf32>
    %14 = arith.addf %11, %13 : vector<16x128xf32>
    %cst_11 = arith.constant 0.000000e+00 : f32
    %15 = vector.broadcast %cst_11 : f32 to vector<16x128xf32>
    %16 = arith.maximumf %14, %15 : vector<16x128xf32>
    %17 = arith.truncf %16 : vector<16x128xf32> to vector<16x128xbf16>
    %c0_12 = arith.constant 0 : index
    %c0_13 = arith.constant 0 : index
    %18 = vector.load %arg6[%c0_12, %c0_13] : memref<128x128xbf16, #tpu.memory_space<vmem>>, vector<128x128xbf16>
    %cst_14 = arith.constant dense<0.000000e+00> : vector<16x128xf32>
    %19 = tpu.matmul %17, %18, %cst_14 {dimension_numbers = #tpu.dot_dimension_numbers<[1], [0], [0], [1], [0, 0, 1, 1], [], []>} : vector<16x128xbf16>, vector<128x128xbf16>, vector<16x128xf32> -> vector<16x128xf32>
    %c0_15 = arith.constant 0 : index
    %c0_16 = arith.constant 0 : index
    %20 = vector.load %arg7[%c0_15, %c0_16] : memref<1x128xf32, #tpu.memory_space<vmem>>, vector<1x128xf32>
    %21 = vector.broadcast %20 : vector<1x128xf32> to vector<16x128xf32>
    %22 = arith.addf %19, %21 : vector<16x128xf32>
    %23 = arith.truncf %22 : vector<16x128xf32> to vector<16x128xbf16>
    %c0_17 = arith.constant 0 : index
    %c0_18 = arith.constant 0 : index
    %24 = vector.load %arg8[%c0_17, %c0_18] : memref<16x128xbf16, #tpu.memory_space<vmem>>, vector<16x128xbf16>
    tpu.vector_store %arg8[%c0_17, %c0_18], %23 {strides = array<i32>} : memref<16x128xbf16, #tpu.memory_space<vmem>>, vector<16x128xbf16>,
    return
  }
  func.func @transform_0(%arg0: i32) -> (i32, i32) {
    %c0_i32 = arith.constant 0 : i32
    %c0_i32_0 = arith.constant 0 : i32
    return %arg0, %c0_i32 : i32, i32
  }
  func.func @transform_1(%arg0: i32) -> (i32, i32) {
    %c0_i32 = arith.constant 0 : i32
    %c0_i32_0 = arith.constant 0 : i32
    %c0_i32_1 = arith.constant 0 : i32
    return %c0_i32, %c0_i32_0 : i32, i32
  }
  func.func @transform_2(%arg0: i32) -> (i32, i32) {
    %c0_i32 = arith.constant 0 : i32
    %c0_i32_0 = arith.constant 0 : i32
    %c0_i32_1 = arith.constant 0 : i32
    return %c0_i32, %c0_i32_0 : i32, i32
  }
  func.func @transform_3(%arg0: i32) -> (i32, i32) {
    %c0_i32 = arith.constant 0 : i32
    %c0_i32_0 = arith.constant 0 : i32
    %c0_i32_1 = arith.constant 0 : i32
    return %c0_i32, %c0_i32_0 : i32, i32
  }
  func.func @transform_4(%arg0: i32) -> (i32, i32) {
    %c0_i32 = arith.constant 0 : i32
    %c0_i32_0 = arith.constant 0 : i32
    %c0_i32_1 = arith.constant 0 : i32
    return %c0_i32, %c0_i32_0 : i32, i32
  }
  func.func @transform_5(%arg0: i32) -> (i32, i32) {
    %c0_i32 = arith.constant 0 : i32
    %c0_i32_0 = arith.constant 0 : i32
    %c0_i32_1 = arith.constant 0 : i32
    return %c0_i32, %c0_i32_0 : i32, i32
  }
  func.func @transform_6(%arg0: i32) -> (i32, i32) {
    %c0_i32 = arith.constant 0 : i32
    %c0_i32_0 = arith.constant 0 : i32
    %c0_i32_1 = arith.constant 0 : i32
    return %c0_i32, %c0_i32_0 : i32, i32
  }
  func.func @transform_7(%arg0: i32) -> (i32, i32) {
    %c0_i32 = arith.constant 0 : i32
    %c0_i32_0 = arith.constant 0 : i32
    return %arg0, %c0_i32 : i32, i32
  }
}

</mosaic_0001>

<llo_original>
// kernel: adda_classifier_forward.1
$region0: #{adda_classifier_forward.1}
  #allocation0 [shape = 'u32[]', space=smem, size = 0x4, offset = 0x4, fixed_abs, tag = 'smem constant byte address 0x4 - core index']
  #allocation1 [shape = 'u32[144,128]{1,0:T(1,128)}', space=vmem, size = 0x12000, scoped, tag = 'internal scratch']
  %s0 = inlined_call_operand.hbm [shape: f32[2,3200], index: 0, kind: input, shape index: {}]
  %s1 = inlined_call_operand.hbm [shape: bf16[3200,256], index: 1, kind: input, shape index: {}]
  %s2 = inlined_call_operand.hbm [shape: f32[1,256], index: 2, kind: input, shape index: {}]
  %s3 = inlined_call_operand.hbm [shape: bf16[256,128], index: 3, kind: input, shape index: {}]
  %s4 = inlined_call_operand.hbm [shape: f32[1,128], index: 4, kind: input, shape index: {}]
  %s5 = inlined_call_operand.hbm [shape: bf16[128,128], index: 5, kind: input, shape index: {}]
  %s6 = inlined_call_operand.hbm [shape: f32[1,128], index: 6, kind: input, shape index: {}]
  %s7 = inlined_call_operand.hbm [shape: bf16[2,128], index: 7, kind: output, shape index: {}]
  %s8 = sld [smem:[#allocation0]]
  $region66: #{adda_classifier_forward.1} parent=0
    _
  %s10 = ssub.s32 1, %s8
  %s11 = scalar_select 0, %s10, %s8
  $region1: #{adda_classifier_forward.1} parent=0
    #allocation2 [shape = 'u8[204800]{0}', space=vmem, size = 0x32000, scoped, tag = 'input window, operand 0, single buffered']
    #allocation3 [shape = 's32[1]{0}', space=sflag, size = 0x4, scoped, tag = 'scoped memory for adda_classifier_forward.1']
    #allocation4 [shape = 's32[1]{0}', space=sflag, size = 0x4, scoped, tag = 'scoped memory for adda_classifier_forward.1']
    #allocation5 [shape = 'u8[1638400]{0}', space=vmem, size = 0x190000, scoped, tag = 'input window, operand 1, single buffered']
    #allocation6 [shape = 's32[1]{0}', space=sflag, size = 0x4, scoped, tag = 'scoped memory for adda_classifier_forward.1']
    #allocation7 [shape = 'u8[1024]{0}', space=vmem, size = 0x400, scoped, tag = 'input window, operand 2, single buffered']
    #allocation8 [shape = 'u8[65536]{0}', space=vmem, size = 0x10000, scoped, tag = 'input window, operand 3, single buffered']
    #allocation9 [shape = 's32[1]{0}', space=sflag, size = 0x4, scoped, tag = 'scoped memory for adda_classifier_forward.1']
    #allocation10 [shape = 'u8[512]{0}', space=vmem, size = 0x400, scoped, tag = 'input window, operand 4, single buffered']
    #allocation11 [shape = 'u8[32768]{0}', space=vmem, size = 0x8000, scoped, tag = 'input window, operand 5, single buffered']
    #allocation12 [shape = 's32[1]{0}', space=sflag, size = 0x4, scoped, tag = 'scoped memory for adda_classifier_forward.1']
    #allocation13 [shape = 'u8[512]{0}', space=vmem, size = 0x400, scoped, tag = 'input window, operand 6, single buffered']
    #allocation14 [shape = 'u8[4096]{0}', space=vmem, size = 0x1000, scoped, tag = 'output window, operand 0, single buffered']
    %12 = vsyncpa [#allocation3], 0
    %13 = vsyncpa [#allocation6], 0
    %14 = vsyncpa [#allocation9], 0
    %15 = vsyncpa [#allocation12], 0
    %16 = vsyncpa [#allocation4], 0
    // Predicated region
    $region2: #{adda_classifier_forward.1} parent=1 // pred_check
      _
    $region3: #{adda_classifier_forward.1} parent=1 // pred_check_branch
      %18 = sbr.rel (0) target = $region5
    $region4: #{adda_classifier_forward.1} parent=1 // pred_region
      %s20 = ssub.s32 6400, 800
      %21 = vsyncadd [#allocation3], %s20
      %s22 = sshll.u32 [#allocation2], 4
      %s23 = int_to_ptr.vmem [resolvable:$true] %s22
      %28 = dma.hbm_to_vmem [thread:$0]  %s0, 800, %s23, [#allocation3], 800, 800, 50
    $region5: #{adda_classifier_forward.1} parent=1 // pred_fallthru
      _
    // Predicated region
    $region6: #{adda_classifier_forward.1} parent=1 // pred_check
      _
    $region7: #{adda_classifier_forward.1} parent=1 // pred_check_branch
      %30 = sbr.rel (0) target = $region9
    $region8: #{adda_classifier_forward.1} parent=1 // pred_region
      %s32 = ssub.s32 51200, 51200
      %33 = vsyncadd [#allocation6], %s32
      %s34 = sshll.u32 [#allocation5], 4
      %s35 = int_to_ptr.vmem [resolvable:$true] %s34
      %40 = dma.hbm_to_vmem [thread:$0]  %s1, 51200, %s35, [#allocation6], 128, 128, 8
    $region9: #{adda_classifier_forward.1} parent=1 // pred_fallthru
      _
    // Predicated region
    $region10: #{adda_classifier_forward.1} parent=1 // pred_check
      _
    $region11: #{adda_classifier_forward.1} parent=1 // pred_check_branch
      %42 = sbr.rel (0) target = $region13
    $region12: #{adda_classifier_forward.1} parent=1 // pred_region
      %s44 = ssub.s32 32, 32
      %45 = vsyncadd [#allocation6], %s44
      %s47 = sshll.u32 [#allocation7], 4
      %s48 = int_to_ptr.vmem [resolvable:$true] %s47
      %50 = dma.hbm_to_vmem [thread:$0]  %s2, 32, %s48, [#allocation6]
    $region13: #{adda_classifier_forward.1} parent=1 // pred_fallthru
      _
    // Predicated region
    $region14: #{adda_classifier_forward.1} parent=1 // pred_check
      _
    $region15: #{adda_classifier_forward.1} parent=1 // pred_check_branch
      %52 = sbr.rel (0) target = $region17
    $region16: #{adda_classifier_forward.1} parent=1 // pred_region
      %s54 = ssub.s32 2048, 2048
      %55 = vsyncadd [#allocation9], %s54
      %s56 = sshll.u32 [#allocation8], 4
      %s57 = int_to_ptr.vmem [resolvable:$true] %s56
      %62 = dma.hbm_to_vmem [thread:$0]  %s3, 2048, %s57, [#allocation9], 64, 64, 4
    $region17: #{adda_classifier_forward.1} parent=1 // pred_fallthru
      _
    // Predicated region
    $region18: #{adda_classifier_forward.1} parent=1 // pred_check
      _
    $region19: #{adda_classifier_forward.1} parent=1 // pred_check_branch
      %64 = sbr.rel (0) target = $region21
    $region20: #{adda_classifier_forward.1} parent=1 // pred_region
      %s66 = ssub.s32 16, 16
      %67 = vsyncadd [#allocation9], %s66
      %s69 = sshll.u32 [#allocation10], 4
      %s70 = int_to_ptr.vmem [resolvable:$true] %s69
      %72 = dma.hbm_to_vmem [thread:$0]  %s4, 16, %s70, [#allocation9]
    $region21: #{adda_classifier_forward.1} parent=1 // pred_fallthru
      _
    // Predicated region
    $region22: #{adda_classifier_forward.1} parent=1 // pred_check
      _
    $region23: #{adda_classifier_forward.1} parent=1 // pred_check_branch
      %74 = sbr.rel (0) target = $region25
    $region24: #{adda_classifier_forward.1} parent=1 // pred_region
      %s76 = ssub.s32 1024, 1024
      %77 = vsyncadd [#allocation12], %s76
      %s78 = sshll.u32 [#allocation11], 4
      %s79 = int_to_ptr.vmem [resolvable:$true] %s78
      %84 = dma.hbm_to_vmem [thread:$0]  %s5, 1024, %s79, [#allocation12], 64, 64, 4
    $region25: #{adda_classifier_forward.1} parent=1 // pred_fallthru
      _
    // Predicated region
    $region26: #{adda_classifier_forward.1} parent=1 // pred_check
      _
    $region27: #{adda_classifier_forward.1} parent=1 // pred_check_branch
      %86 = sbr.rel (0) target = $region29
    $region28: #{adda_classifier_forward.1} parent=1 // pred_region
      %s88 = ssub.s32 16, 16
      %89 = vsyncadd [#allocation12], %s88
      %s91 = sshll.u32 [#allocation13], 4
      %s92 = int_to_ptr.vmem [resolvable:$true] %s91
      %94 = dma.hbm_to_vmem [thread:$0]  %s6, 16, %s92, [#allocation12]
    $region29: #{adda_classifier_forward.1} parent=1 // pred_fallthru
      _
    // Predicated region
    $region30: #{adda_classifier_forward.1} parent=1 // pred_check
      _
    $region31: #{adda_classifier_forward.1} parent=1 // pred_check_branch
      %96 = sbr.rel (0) target = $region33
    $region32: #{adda_classifier_forward.1} parent=1 // pred_region
      %97 = dma.done [#allocation3], 6400
    $region33: #{adda_classifier_forward.1} parent=1 // pred_fallthru
      _
    // Predicated region
    $region34: #{adda_classifier_forward.1} parent=1 // pred_check
      _
    $region35: #{adda_classifier_forward.1} parent=1 // pred_check_branch
      %99 = sbr.rel (0) target = $region37
    $region36: #{adda_classifier_forward.1} parent=1 // pred_region
      %100 = dma.done [#allocation6], 51200
    $region37: #{adda_classifier_forward.1} parent=1 // pred_fallthru
      _
    // Predicated region
    $region38: #{adda_classifier_forward.1} parent=1 // pred_check
      _
    $region39: #{adda_classifier_forward.1} parent=1 // pred_check_branch
      %102 = sbr.rel (0) target = $region41
    $region40: #{adda_classifier_forward.1} parent=1 // pred_region
      %103 = dma.done [#allocation6], 32
    $region41: #{adda_classifier_forward.1} parent=1 // pred_fallthru
      _
    // Predicated region
    $region42: #{adda_classifier_forward.1} parent=1 // pred_check
      _
    $region43: #{adda_classifier_forward.1} parent=1 // pred_check_branch
      %105 = sbr.rel (0) target = $region45
    $region44: #{adda_classifier_forward.1} parent=1 // pred_region
      %106 = dma.done [#allocation9], 2048
    $region45: #{adda_classifier_forward.1} parent=1 // pred_fallthru
      _
    // Predicated region
    $region46: #{adda_classifier_forward.1} parent=1 // pred_check
      _
    $region47: #{adda_classifier_forward.1} parent=1 // pred_check_branch
      %108 = sbr.rel (0) target = $region49
    $region48: #{adda_classifier_forward.1} parent=1 // pred_region
      %109 = dma.done [#allocation9], 16
    $region49: #{adda_classifier_forward.1} parent=1 // pred_fallthru
      _
    // Predicated region
    $region50: #{adda_classifier_forward.1} parent=1 // pred_check
      _
    $region51: #{adda_classifier_forward.1} parent=1 // pred_check_branch
      %111 = sbr.rel (0) target = $region53
    $region52: #{adda_classifier_forward.1} parent=1 // pred_region
      %112 = dma.done [#allocation12], 1024
    $region53: #{adda_classifier_forward.1} parent=1 // pred_fallthru
      _
    // Predicated region
    $region54: #{adda_classifier_forward.1} parent=1 // pred_check
      _
    $region55: #{adda_classifier_forward.1} parent=1 // pred_check_branch
      %114 = sbr.rel (0) target = $region57
    $region56: #{adda_classifier_forward.1} parent=1 // pred_region
      %115 = dma.done [#allocation12], 16
    $region57: #{adda_classifier_forward.1} parent=1 // pred_fallthru
      _
    %v117 = vld [vmem:[#allocation2] sm:$0xff]
    %v118 = vld [vmem:[#allocation2 + $0x8] sm:$0xff]
    %v119 = vld [vmem:[#allocation2 + $0x10] sm:$0xff]
    %v120 = vld [vmem:[#allocation2 + $0x18] sm:$0xff]
    %v121 = vld [vmem:[#allocation2 + $0x20] sm:$0xff]
    %v122 = vld [vmem:[#allocation2 + $0x28] sm:$0xff]
    %v123 = vld [vmem:[#allocation2 + $0x30] sm:$0x3]
    %v124 = vld [vmem:[#allocation2 + $0x32] sm:$0xff]
    %v125 = vld [vmem:[#allocation2 + $0x3a] sm:$0xff]
    %v126 = vld [vmem:[#allocation2 + $0x42] sm:$0xff]
    %v127 = vld [vmem:[#allocation2 + $0x4a] sm:$0xff]
    %v128 = vld [vmem:[#allocation2 + $0x52] sm:$0xff]
    %v129 = vld [vmem:[#allocation2 + $0x5a] sm:$0xff]
    %v130 = vld [vmem:[#allocation2 + $0x62] sm:$0x3]
    %v131 = vld [vmem:[#allocation2 + $0x64] sm:$0xff]
    %v132 = vld [vmem:[#allocation2 + $0x6c] sm:$0xff]
    %v133 = vld [vmem:[#allocation2 + $0x74] sm:$0xff]
    %v134 = vld [vmem:[#allocation2 + $0x7c] sm:$0xff]
    %v135 = vld [vmem:[#allocation2 + $0x84] sm:$0xff]
    %v136 = vld [vmem:[#allocation2 + $0x8c] sm:$0xff]
    %v137 = vld [vmem:[#allocation2 + $0x94] sm:$0x3]
    %v138 = vld [vmem:[#allocation2 + $0x96] sm:$0xff]
    %v139 = vld [vmem:[#allocation2 + $0x9e] sm:$0xff]
    %v140 = vld [vmem:[#allocation2 + $0xa6] sm:$0xff]
    %v141 = vld [vmem:[#allocation2 + $0xae] sm:$0xff]
    %v142 = vld [vmem:[#allocation2 + $0xb6] sm:$0xff]
    %v143 = vld [vmem:[#allocation2 + $0xbe] sm:$0xff]
    %v144 = vld [vmem:[#allocation2 + $0xc6] sm:$0x3]
    %v145 = vld [vmem:[#allocation2 + $0xc8] sm:$0xff]
    %v146 = vld [vmem:[#allocation2 + $0xd0] sm:$0xff]
    %v147 = vld [vmem:[#allocation2 + $0xd8] sm:$0xff]
    %v148 = vld [vmem:[#allocation2 + $0xe0] sm:$0xff]
    %v149 = vld [vmem:[#allocation2 + $0xe8] sm:$0xff]
    %v150 = vld [vmem:[#allocation2 + $0xf0] sm:$0xff]
    %v151 = vld [vmem:[#allocation2 + $0xf8] sm:$0x3]
    %v152 = vld [vmem:[#allocation2 + $0xfa] sm:$0xff]
    %v153 = vld [vmem:[#allocation2 + $0x102] sm:$0xff]
    %v154 = vld [vmem:[#allocation2 + $0x10a] sm:$0xff]
    %v155 = vld [vmem:[#allocation2 + $0x112] sm:$0xff]
    %v156 = vld [vmem:[#allocation2 + $0x11a] sm:$0xff]
    %v157 = vld [vmem:[#allocation2 + $0x122] sm:$0xff]
    %v158 = vld [vmem:[#allocation2 + $0x12a] sm:$0x3]
    %v159 = vld [vmem:[#allocation2 + $0x12c] sm:$0xff]
    %v160 = vld [vmem:[#allocation2 + $0x134] sm:$0xff]
    %v161 = vld [vmem:[#allocation2 + $0x13c] sm:$0xff]
    %v162 = vld [vmem:[#allocation2 + $0x144] sm:$0xff]
    %v163 = vld [vmem:[#allocation2 + $0x14c] sm:$0xff]
    %v164 = vld [vmem:[#allocation2 + $0x154] sm:$0xff]
    %v165 = vld [vmem:[#allocation2 + $0x15c] sm:$0x3]
    %v166 = vld [vmem:[#allocation2 + $0x15e] sm:$0xff]
    %v167 = vld [vmem:[#allocation2 + $0x166] sm:$0xff]
    %v168 = vld [vmem:[#allocation2 + $0x16e] sm:$0xff]
    %v169 = vld [vmem:[#allocation2 + $0x176] sm:$0xff]
    %v170 = vld [vmem:[#allocation2 + $0x17e] sm:$0xff]
    %v171 = vld [vmem:[#allocation2 + $0x186] sm:$0xff]
    %v172 = vld [vmem:[#allocation2 + $0x18e] sm:$0x3]
    %v229 = vcombine.low %v117, %v124
    %v230 = vcombine.high %v117, %v124
    %v231 = vcombine.low %v131, %v138
    %v232 = vcombine.high %v131, %v138
    %v234 = vunpack.c.l.s4 1983009808
    %v235 = vunpack.c.0.s8 %v234
    %v236 = vlaneseq
    %v237 = vshrl.u32 %v236, 7
    %v238 = vsub.s32 %v235, %v237
    %v239 = vrot.slane %v229, %v238
    %v241 = vunpack.c.l.s4 1983009808
    %v242 = vunpack.c.0.s8 %v241
    %v243 = vlaneseq
    %v244 = vshrl.u32 %v243, 7
    %v245 = vsub.s32 %v242, %v244
    %v246 = vrot.slane %v230, %v245
    %v248 = vunpack.c.l.s4 1983009808
    %v249 = vunpack.c.0.s8 %v248
    %v250 = vlaneseq
    %v251 = vshrl.u32 %v250, 7
    %v252 = vsub.s32 %v249, %v251
    %v253 = vrot.slane %v231, %v252
    %v255 = vunpack.c.l.s4 1983009808
    %v256 = vunpack.c.0.s8 %v255
    %v257 = vlaneseq
    %v258 = vshrl.u32 %v257, 7
    %v259 = vsub.s32 %v256, %v258
    %v260 = vrot.slane %v232, %v259
    %v261 = vcombine.low %v239, %v253
    %v262 = vcombine.high %v239, %v253
    %v263 = vcombine.low %v246, %v260
    %v264 = vcombine.high %v246, %v260
    %v265 = vcombine.low %v118, %v125
    %v266 = vcombine.high %v118, %v125
    %v267 = vcombine.low %v132, %v139
    %v268 = vcombine.high %v132, %v139
    %v270 = vunpack.c.l.s4 1983009808
    %v271 = vunpack.c.0.s8 %v270
    %v272 = vlaneseq
    %v273 = vshrl.u32 %v272, 7
    %v274 = vsub.s32 %v271, %v273
    %v275 = vrot.slane %v265, %v274
    %v277 = vunpack.c.l.s4 1983009808
    %v278 = vunpack.c.0.s8 %v277
    %v279 = vlaneseq
    %v280 = vshrl.u32 %v279, 7
    %v281 = vsub.s32 %v278, %v280
    %v282 = vrot.slane %v266, %v281
    %v284 = vunpack.c.l.s4 1983009808
    %v285 = vunpack.c.0.s8 %v284
    %v286 = vlaneseq
    %v287 = vshrl.u32 %v286, 7
    %v288 = vsub.s32 %v285, %v287
    %v289 = vrot.slane %v267, %v288
    %v291 = vunpack.c.l.s4 1983009808
    %v292 = vunpack.c.0.s8 %v291
    %v293 = vlaneseq
    %v294 = vshrl.u32 %v293, 7
    %v295 = vsub.s32 %v292, %v294
    %v296 = vrot.slane %v268, %v295
    %v297 = vcombine.low %v275, %v289
    %v298 = vcombine.high %v275, %v289
    %v299 = vcombine.low %v282, %v296
    %v300 = vcombine.high %v282, %v296
    %v301 = vcombine.low %v119, %v126
    %v302 = vcombine.high %v119, %v126
    %v303 = vcombine.low %v133, %v140
    %v304 = vcombine.high %v133, %v140
    %v306 = vunpack.c.l.s4 1983009808
    %v307 = vunpack.c.0.s8 %v306
    %v308 = vlaneseq
    %v309 = vshrl.u32 %v308, 7
    %v310 = vsub.s32 %v307, %v309
    %v311 = vrot.slane %v301, %v310
    %v313 = vunpack.c.l.s4 1983009808
    %v314 = vunpack.c.0.s8 %v313
    %v315 = vlaneseq
    %v316 = vshrl.u32 %v315, 7
    %v317 = vsub.s32 %v314, %v316
    %v318 = vrot.slane %v302, %v317
    %v320 = vunpack.c.l.s4 1983009808
    %v321 = vunpack.c.0.s8 %v320
    %v322 = vlaneseq
    %v323 = vshrl.u32 %v322, 7
    %v324 = vsub.s32 %v321, %v323
    %v325 = vrot.slane %v303, %v324
    %v327 = vunpack.c.l.s4 1983009808
    %v328 = vunpack.c.0.s8 %v327
    %v329 = vlaneseq
    %v330 = vshrl.u32 %v329, 7
    %v331 = vsub.s32 %v328, %v330
    %v332 = vrot.slane %v304, %v331
    %v333 = vcombine.low %v311, %v325
    %v334 = vcombine.high %v311, %v325
    %v335 = vcombine.low %v318, %v332
    %v336 = vcombine.high %v318, %v332
    %v337 = vcombine.low %v120, %v127
    %v338 = vcombine.high %v120, %v127
    %v339 = vcombine.low %v134, %v141
    %v340 = vcombine.high %v134, %v141
    %v342 = vunpack.c.l.s4 1983009808
    %v343 = vunpack.c.0.s8 %v342
    %v344 = vlaneseq
    %v345 = vshrl.u32 %v344, 7
    %v346 = vsub.s32 %v343, %v345
    %v347 = vrot.slane %v337, %v346
    %v349 = vunpack.c.l.s4 1983009808
    %v350 = vunpack.c.0.s8 %v349
    %v351 = vlaneseq
    %v352 = vshrl.u32 %v351, 7
    %v353 = vsub.s32 %v350, %v352
    %v354 = vrot.slane %v338, %v353
    %v356 = vunpack.c.l.s4 1983009808
    %v357 = vunpack.c.0.s8 %v356
    %v358 = vlaneseq
    %v359 = vshrl.u32 %v358, 7
    %v360 = vsub.s32 %v357, %v359
    %v361 = vrot.slane %v339, %v360
    %v363 = vunpack.c.l.s4 1983009808
    %v364 = vunpack.c.0.s8 %v363
    %v365 = vlaneseq
    %v366 = vshrl.u32 %v365, 7
    %v367 = vsub.s32 %v364, %v366
    %v368 = vrot.slane %v340, %v367
    %v369 = vcombine.low %v347, %v361
    %v370 = vcombine.high %v347, %v361
    %v371 = vcombine.low %v354, %v368
    %v372 = vcombine.high %v354, %v368
    %v373 = vcombine.low %v121, %v128
    %v374 = vcombine.high %v121, %v128
    %v375 = vcombine.low %v135, %v142
    %v376 = vcombine.high %v135, %v142
    %v378 = vunpack.c.l.s4 1983009808
    %v379 = vunpack.c.0.s8 %v378
    %v380 = vlaneseq
    %v381 = vshrl.u32 %v380, 7
    %v382 = vsub.s32 %v379, %v381
    %v383 = vrot.slane %v373, %v382
    %v385 = vunpack.c.l.s4 1983009808
    %v386 = vunpack.c.0.s8 %v385
    %v387 = vlaneseq
    %v388 = vshrl.u32 %v387, 7
    %v389 = vsub.s32 %v386, %v388
    %v390 = vrot.slane %v374, %v389
    %v392 = vunpack.c.l.s4 1983009808
    %v393 = vunpack.c.0.s8 %v392
    %v394 = vlaneseq
    %v395 = vshrl.u32 %v394, 7
    %v396 = vsub.s32 %v393, %v395
    %v397 = vrot.slane %v375, %v396
    %v399 = vunpack.c.l.s4 1983009808
    %v400 = vunpack.c.0.s8 %v399
    %v401 = vlaneseq
    %v402 = vshrl.u32 %v401, 7
    %v403 = vsub.s32 %v400, %v402
    %v404 = vrot.slane %v376, %v403
    %v405 = vcombine.low %v383, %v397
    %v406 = vcombine.high %v383, %v397
    %v407 = vcombine.low %v390, %v404
    %v408 = vcombine.high %v390, %v404
    %v409 = vcombine.low %v122, %v129
    %v410 = vcombine.high %v122, %v129
    %v411 = vcombine.low %v136, %v143
    %v412 = vcombine.high %v136, %v143
    %v414 = vunpack.c.l.s4 1983009808
    %v415 = vunpack.c.0.s8 %v414
    %v416 = vlaneseq
    %v417 = vshrl.u32 %v416, 7
    %v418 = vsub.s32 %v415, %v417
    %v419 = vrot.slane %v409, %v418
    %v421 = vunpack.c.l.s4 1983009808
    %v422 = vunpack.c.0.s8 %v421
    %v423 = vlaneseq
    %v424 = vshrl.u32 %v423, 7
    %v425 = vsub.s32 %v422, %v424
    %v426 = vrot.slane %v410, %v425
    %v428 = vunpack.c.l.s4 1983009808
    %v429 = vunpack.c.0.s8 %v428
    %v430 = vlaneseq
    %v431 = vshrl.u32 %v430, 7
    %v432 = vsub.s32 %v429, %v431
    %v433 = vrot.slane %v411, %v432
    %v435 = vunpack.c.l.s4 1983009808
    %v436 = vunpack.c.0.s8 %v435
    %v437 = vlaneseq
    %v438 = vshrl.u32 %v437, 7
    %v439 = vsub.s32 %v436, %v438
    %v440 = vrot.slane %v412, %v439
    %v441 = vcombine.low %v419, %v433
    %v442 = vcombine.high %v419, %v433
    %v443 = vcombine.low %v426, %v440
    %v444 = vcombine.high %v426, %v440
    %v445 = vcombine.low %v123, %v130
    %v446 = vcombine.low %v137, %v144
    %v448 = vunpack.c.l.s4 1983009808
    %v449 = vunpack.c.0.s8 %v448
    %v450 = vlaneseq
    %v451 = vshrl.u32 %v450, 7
    %v452 = vsub.s32 %v449, %v451
    %v453 = vrot.slane %v445, %v452
    %v455 = vunpack.c.l.s4 1983009808
    %v456 = vunpack.c.0.s8 %v455
    %v457 = vlaneseq
    %v458 = vshrl.u32 %v457, 7
    %v459 = vsub.s32 %v456, %v458
    %v460 = vrot.slane %v446, %v459
    %v461 = vcombine.low %v453, %v460
    %v462 = vcombine.low %v145, %v152
    %v463 = vcombine.high %v145, %v152
    %v464 = vcombine.low %v159, %v166
    %v465 = vcombine.high %v159, %v166
    %v467 = vunpack.c.l.s4 1983009808
    %v468 = vunpack.c.0.s8 %v467
    %v469 = vlaneseq
    %v470 = vshrl.u32 %v469, 7
    %v471 = vsub.s32 %v468, %v470
    %v472 = vrot.slane %v462, %v471
    %v474 = vunpack.c.l.s4 1983009808
    %v475 = vunpack.c.0.s8 %v474
    %v476 = vlaneseq
    %v477 = vshrl.u32 %v476, 7
    %v478 = vsub.s32 %v475, %v477
    %v479 = vrot.slane %v463, %v478
    %v481 = vunpack.c.l.s4 1983009808
    %v482 = vunpack.c.0.s8 %v481
    %v483 = vlaneseq
    %v484 = vshrl.u32 %v483, 7
    %v485 = vsub.s32 %v482, %v484
    %v486 = vrot.slane %v464, %v485
    %v488 = vunpack.c.l.s4 1983009808
    %v489 = vunpack.c.0.s8 %v488
    %v490 = vlaneseq
    %v491 = vshrl.u32 %v490, 7
    %v492 = vsub.s32 %v489, %v491
    %v493 = vrot.slane %v465, %v492
    %v494 = vcombine.low %v472, %v486
    %v495 = vcombine.high %v472, %v486
    %v496 = vcombine.low %v479, %v493
    %v497 = vcombine.high %v479, %v493
    %v498 = vcombine.low %v146, %v153
    %v499 = vcombine.high %v146, %v153
    %v500 = vcombine.low %v160, %v167
    %v501 = vcombine.high %v160, %v167
    %v503 = vunpack.c.l.s4 1983009808
    %v504 = vunpack.c.0.s8 %v503
    %v505 = vlaneseq
    %v506 = vshrl.u32 %v505, 7
    %v507 = vsub.s32 %v504, %v506
    %v508 = vrot.slane %v498, %v507
    %v510 = vunpack.c.l.s4 1983009808
    %v511 = vunpack.c.0.s8 %v510
    %v512 = vlaneseq
    %v513 = vshrl.u32 %v512, 7
    %v514 = vsub.s32 %v511, %v513
    %v515 = vrot.slane %v499, %v514
    %v517 = vunpack.c.l.s4 1983009808
    %v518 = vunpack.c.0.s8 %v517
    %v519 = vlaneseq
    %v520 = vshrl.u32 %v519, 7
    %v521 = vsub.s32 %v518, %v520
    %v522 = vrot.slane %v500, %v521
    %v524 = vunpack.c.l.s4 1983009808
    %v525 = vunpack.c.0.s8 %v524
    %v526 = vlaneseq
    %v527 = vshrl.u32 %v526, 7
    %v528 = vsub.s32 %v525, %v527
    %v529 = vrot.slane %v501, %v528
    %v530 = vcombine.low %v508, %v522
    %v531 = vcombine.high %v508, %v522
    %v532 = vcombine.low %v515, %v529
    %v533 = vcombine.high %v515, %v529
    %v534 = vcombine.low %v147, %v154
    %v535 = vcombine.high %v147, %v154
    %v536 = vcombine.low %v161, %v168
    %v537 = vcombine.high %v161, %v168
    %v539 = vunpack.c.l.s4 1983009808
    %v540 = vunpack.c.0.s8 %v539
    %v541 = vlaneseq
    %v542 = vshrl.u32 %v541, 7
    %v543 = vsub.s32 %v540, %v542
    %v544 = vrot.slane %v534, %v543
    %v546 = vunpack.c.l.s4 1983009808
    %v547 = vunpack.c.0.s8 %v546
    %v548 = vlaneseq
    %v549 = vshrl.u32 %v548, 7
    %v550 = vsub.s32 %v547, %v549
    %v551 = vrot.slane %v535, %v550
    %v553 = vunpack.c.l.s4 1983009808
    %v554 = vunpack.c.0.s8 %v553
    %v555 = vlaneseq
    %v556 = vshrl.u32 %v555, 7
    %v557 = vsub.s32 %v554, %v556
    %v558 = vrot.slane %v536, %v557
    %v560 = vunpack.c.l.s4 1983009808
    %v561 = vunpack.c.0.s8 %v560
    %v562 = vlaneseq
    %v563 = vshrl.u32 %v562, 7
    %v564 = vsub.s32 %v561, %v563
    %v565 = vrot.slane %v537, %v564
    %v566 = vcombine.low %v544, %v558
    %v567 = vcombine.high %v544, %v558
    %v568 = vcombine.low %v551, %v565
    %v569 = vcombine.high %v551, %v565
    %v570 = vcombine.low %v148, %v155
    %v571 = vcombine.high %v148, %v155
    %v572 = vcombine.low %v162, %v169
    %v573 = vcombine.high %v162, %v169
    %v575 = vunpack.c.l.s4 1983009808
    %v576 = vunpack.c.0.s8 %v575
    %v577 = vlaneseq
    %v578 = vshrl.u32 %v577, 7
    %v579 = vsub.s32 %v576, %v578
    %v580 = vrot.slane %v570, %v579
    %v582 = vunpack.c.l.s4 1983009808
    %v583 = vunpack.c.0.s8 %v582
    %v584 = vlaneseq
    %v585 = vshrl.u32 %v584, 7
    %v586 = vsub.s32 %v583, %v585
    %v587 = vrot.slane %v571, %v586
    %v589 = vunpack.c.l.s4 1983009808
    %v590 = vunpack.c.0.s8 %v589
    %v591 = vlaneseq
    %v592 = vshrl.u32 %v591, 7
    %v593 = vsub.s32 %v590, %v592
    %v594 = vrot.slane %v572, %v593
    %v596 = vunpack.c.l.s4 1983009808
    %v597 = vunpack.c.0.s8 %v596
    %v598 = vlaneseq
    %v599 = vshrl.u32 %v598, 7
    %v600 = vsub.s32 %v597, %v599
    %v601 = vrot.slane %v573, %v600
    %v602 = vcombine.low %v580, %v594
    %v603 = vcombine.high %v580, %v594
    %v604 = vcombine.low %v587, %v601
    %v605 = vcombine.high %v587, %v601
    %v606 = vcombine.low %v149, %v156
    %v607 = vcombine.high %v149, %v156
    %v608 = vcombine.low %v163, %v170
    %v609 = vcombine.high %v163, %v170
    %v611 = vunpack.c.l.s4 1983009808
    %v612 = vunpack.c.0.s8 %v611
    %v613 = vlaneseq
    %v614 = vshrl.u32 %v613, 7
    %v615 = vsub.s32 %v612, %v614
    %v616 = vrot.slane %v606, %v615
    %v618 = vunpack.c.l.s4 1983009808
    %v619 = vunpack.c.0.s8 %v618
    %v620 = vlaneseq
    %v621 = vshrl.u32 %v620, 7
    %v622 = vsub.s32 %v619, %v621
    %v623 = vrot.slane %v607, %v622
    %v625 = vunpack.c.l.s4 1983009808
    %v626 = vunpack.c.0.s8 %v625
    %v627 = vlaneseq
    %v628 = vshrl.u32 %v627, 7
    %v629 = vsub.s32 %v626, %v628
    %v630 = vrot.slane %v608, %v629
    %v632 = vunpack.c.l.s4 1983009808
    %v633 = vunpack.c.0.s8 %v632
    %v634 = vlaneseq
    %v635 = vshrl.u32 %v634, 7
    %v636 = vsub.s32 %v633, %v635
    %v637 = vrot.slane %v609, %v636
    %v638 = vcombine.low %v616, %v630
    %v639 = vcombine.high %v616, %v630
    %v640 = vcombine.low %v623, %v637
    %v641 = vcombine.high %v623, %v637
    %v642 = vcombine.low %v150, %v157
    %v643 = vcombine.high %v150, %v157
    %v644 = vcombine.low %v164, %v171
    %v645 = vcombine.high %v164, %v171
    %v647 = vunpack.c.l.s4 1983009808
    %v648 = vunpack.c.0.s8 %v647
    %v649 = vlaneseq
    %v650 = vshrl.u32 %v649, 7
    %v651 = vsub.s32 %v648, %v650
    %v652 = vrot.slane %v642, %v651
    %v654 = vunpack.c.l.s4 1983009808
    %v655 = vunpack.c.0.s8 %v654
    %v656 = vlaneseq
    %v657 = vshrl.u32 %v656, 7
    %v658 = vsub.s32 %v655, %v657
    %v659 = vrot.slane %v643, %v658
    %v661 = vunpack.c.l.s4 1983009808
    %v662 = vunpack.c.0.s8 %v661
    %v663 = vlaneseq
    %v664 = vshrl.u32 %v663, 7
    %v665 = vsub.s32 %v662, %v664
    %v666 = vrot.slane %v644, %v665
    %v668 = vunpack.c.l.s4 1983009808
    %v669 = vunpack.c.0.s8 %v668
    %v670 = vlaneseq
    %v671 = vshrl.u32 %v670, 7
    %v672 = vsub.s32 %v669, %v671
    %v673 = vrot.slane %v645, %v672
    %v674 = vcombine.low %v652, %v666
    %v675 = vcombine.high %v652, %v666
    %v676 = vcombine.low %v659, %v673
    %v677 = vcombine.high %v659, %v673
    %v678 = vcombine.low %v151, %v158
    %v679 = vcombine.low %v165, %v172
    %v681 = vunpack.c.l.s4 1983009808
    %v682 = vunpack.c.0.s8 %v681
    %v683 = vlaneseq
    %v684 = vshrl.u32 %v683, 7
    %v685 = vsub.s32 %v682, %v684
    %v686 = vrot.slane %v678, %v685
    %v688 = vunpack.c.l.s4 1983009808
    %v689 = vunpack.c.0.s8 %v688
    %v690 = vlaneseq
    %v691 = vshrl.u32 %v690, 7
    %v692 = vsub.s32 %v689, %v691
    %v693 = vrot.slane %v679, %v692
    %v694 = vcombine.low %v686, %v693
    %v745 = vpack.c.bf16 %v494, %v261
    %v746 = vpack.c.bf16 %v495, %v262
    %v747 = vpack.c.bf16 %v496, %v263
    %v748 = vpack.c.bf16 %v497, %v264
    %v749 = vpack.c.bf16 %v530, %v297
    %v750 = vpack.c.bf16 %v531, %v298
    %v751 = vpack.c.bf16 %v532, %v299
    %v752 = vpack.c.bf16 %v533, %v300
    %v753 = vpack.c.bf16 %v566, %v333
    %v754 = vpack.c.bf16 %v567, %v334
    %v755 = vpack.c.bf16 %v568, %v335
    %v756 = vpack.c.bf16 %v569, %v336
    %v757 = vpack.c.bf16 %v602, %v369
    %v758 = vpack.c.bf16 %v603, %v370
    %v759 = vpack.c.bf16 %v604, %v371
    %v760 = vpack.c.bf16 %v605, %v372
    %v761 = vpack.c.bf16 %v638, %v405
    %v762 = vpack.c.bf16 %v639, %v406
    %v763 = vpack.c.bf16 %v640, %v407
    %v764 = vpack.c.bf16 %v641, %v408
    %v765 = vpack.c.bf16 %v674, %v441
    %v766 = vpack.c.bf16 %v675, %v442
    %v767 = vpack.c.bf16 %v676, %v443
    %v768 = vpack.c.bf16 %v677, %v444
    %v769 = vpack.c.bf16 %v694, %v461
    %v770 = vld [vmem:[#allocation5] sm:$0xff]
    %v771 = vld [vmem:[#allocation5 + $0x8] sm:$0xff]
    %v772 = vld [vmem:[#allocation5 + $0x10] sm:$0xff]
    %v773 = vld [vmem:[#allocation5 + $0x18] sm:$0xff]
    %v774 = vld [vmem:[#allocation5 + $0x20] sm:$0xff]
    %v775 = vld [vmem:[#allocation5 + $0x28] sm:$0xff]
    %v776 = vld [vmem:[#allocation5 + $0x30] sm:$0xff]
    %v777 = vld [vmem:[#allocation5 + $0x38] sm:$0xff]
    %v778 = vld [vmem:[#allocation5 + $0x40] sm:$0xff]
    %v779 = vld [vmem:[#allocation5 + $0x48] sm:$0xff]
    %v780 = vld [vmem:[#allocation5 + $0x50] sm:$0xff]
    %v781 = vld [vmem:[#allocation5 + $0x58] sm:$0xff]
    %v782 = vld [vmem:[#allocation5 + $0x60] sm:$0xff]
    %v783 = vld [vmem:[#allocation5 + $0x68] sm:$0xff]
    %v784 = vld [vmem:[#allocation5 + $0x70] sm:$0xff]
    %v785 = vld [vmem:[#allocation5 + $0x78] sm:$0xff]
    %v786 = vld [vmem:[#allocation5 + $0x80] sm:$0xff]
    %v787 = vld [vmem:[#allocation5 + $0x88] sm:$0xff]
    %v788 = vld [vmem:[#allocation5 + $0x90] sm:$0xff]
    %v789 = vld [vmem:[#allocation5 + $0x98] sm:$0xff]
    %v790 = vld [vmem:[#allocation5 + $0xa0] sm:$0xff]
    %v791 = vld [vmem:[#allocation5 + $0xa8] sm:$0xff]
    %v792 = vld [vmem:[#allocation5 + $0xb0] sm:$0xff]
    %v793 = vld [vmem:[#allocation5 + $0xb8] sm:$0xff]
    %v794 = vld [vmem:[#allocation5 + $0xc0] sm:$0xff]
    %v795 = vld [vmem:[#allocation5 + $0xc8] sm:$0xff]
    %v796 = vld [vmem:[#allocation5 + $0xd0] sm:$0xff]
    %v797 = vld [vmem:[#allocation5 + $0xd8] sm:$0xff]
    %v798 = vld [vmem:[#allocation5 + $0xe0] sm:$0xff]
    %v799 = vld [vmem:[#allocation5 + $0xe8] sm:$0xff]
    %v800 = vld [vmem:[#allocation5 + $0xf0] sm:$0xff]
    %v801 = vld [vmem:[#allocation5 + $0xf8] sm:$0xff]
    %v802 = vld [vmem:[#allocation5 + $0x100] sm:$0xff]
    %v803 = vld [vmem:[#allocation5 + $0x108] sm:$0xff]
    %v804 = vld [vmem:[#allocation5 + $0x110] sm:$0xff]
    %v805 = vld [vmem:[#allocation5 + $0x118] sm:$0xff]
    %v806 = vld [vmem:[#allocation5 + $0x120] sm:$0xff]
    %v807 = vld [vmem:[#allocation5 + $0x128] sm:$0xff]
    %v808 = vld [vmem:[#allocation5 + $0x130] sm:$0xff]
    %v809 = vld [vmem:[#allocation5 + $0x138] sm:$0xff]
    %v810 = vld [vmem:[#allocation5 + $0x140] sm:$0xff]
    %v811 = vld [vmem:[#allocation5 + $0x148] sm:$0xff]
    %v812 = vld [vmem:[#allocation5 + $0x150] sm:$0xff]
    %v813 = vld [vmem:[#allocation5 + $0x158] sm:$0xff]
    %v814 = vld [vmem:[#allocation5 + $0x160] sm:$0xff]
    %v815 = vld [vmem:[#allocation5 + $0x168] sm:$0xff]
    %v816 = vld [vmem:[#allocation5 + $0x170] sm:$0xff]
    %v817 = vld [vmem:[#allocation5 + $0x178] sm:$0xff]
    %v818 = vld [vmem:[#allocation5 + $0x180] sm:$0xff]
    %v819 = vld [vmem:[#allocation5 + $0x188] sm:$0xff]
    %v820 = vld [vmem:[#allocation5 + $0x190] sm:$0xff]
    %v821 = vld [vmem:[#allocation5 + $0x198] sm:$0xff]
    %v822 = vld [vmem:[#allocation5 + $0x1a0] sm:$0xff]
    %v823 = vld [vmem:[#allocation5 + $0x1a8] sm:$0xff]
    %v824 = vld [vmem:[#allocation5 + $0x1b0] sm:$0xff]
    %v825 = vld [vmem:[#allocation5 + $0x1b8] sm:$0xff]
    %v826 = vld [vmem:[#allocation5 + $0x1c0] sm:$0xff]
    %v827 = vld [vmem:[#allocation5 + $0x1c8] sm:$0xff]
    %v828 = vld [vmem:[#allocation5 + $0x1d0] sm:$0xff]
    %v829 = vld [vmem:[#allocation5 + $0x1d8] sm:$0xff]
    %v830 = vld [vmem:[#allocation5 + $0x1e0] sm:$0xff]
    %v831 = vld [vmem:[#allocation5 + $0x1e8] sm:$0xff]
    %v832 = vld [vmem:[#allocation5 + $0x1f0] sm:$0xff]
    %v833 = vld [vmem:[#allocation5 + $0x1f8] sm:$0xff]
    %v834 = vld [vmem:[#allocation5 + $0x200] sm:$0xff]
    %v835 = vld [vmem:[#allocation5 + $0x208] sm:$0xff]
    %v836 = vld [vmem:[#allocation5 + $0x210] sm:$0xff]
    %v837 = vld [vmem:[#allocation5 + $0x218] sm:$0xff]
    %v838 = vld [vmem:[#allocation5 + $0x220] sm:$0xff]
    %v839 = vld [vmem:[#allocation5 + $0x228] sm:$0xff]
    %v840 = vld [vmem:[#allocation5 + $0x230] sm:$0xff]
    %v841 = vld [vmem:[#allocation5 + $0x238] sm:$0xff]
    %v842 = vld [vmem:[#allocation5 + $0x240] sm:$0xff]
    %v843 = vld [vmem:[#allocation5 + $0x248] sm:$0xff]
    %v844 = vld [vmem:[#allocation5 + $0x250] sm:$0xff]
    %v845 = vld [vmem:[#allocation5 + $0x258] sm:$0xff]
    %v846 = vld [vmem:[#allocation5 + $0x260] sm:$0xff]
    %v847 = vld [vmem:[#allocation5 + $0x268] sm:$0xff]
    %v848 = vld [vmem:[#allocation5 + $0x270] sm:$0xff]
    %v849 = vld [vmem:[#allocation5 + $0x278] sm:$0xff]
    %v850 = vld [vmem:[#allocation5 + $0x280] sm:$0xff]
    %v851 = vld [vmem:[#allocation5 + $0x288] sm:$0xff]
    %v852 = vld [vmem:[#allocation5 + $0x290] sm:$0xff]
    %v853 = vld [vmem:[#allocation5 + $0x298] sm:$0xff]
    %v854 = vld [vmem:[#allocation5 + $0x2a0] sm:$0xff]
    %v855 = vld [vmem:[#allocation5 + $0x2a8] sm:$0xff]
    %v856 = vld [vmem:[#allocation5 + $0x2b0] sm:$0xff]
    %v857 = vld [vmem:[#allocation5 + $0x2b8] sm:$0xff]
    %v858 = vld [vmem:[#allocation5 + $0x2c0] sm:$0xff]
    %v859 = vld [vmem:[#allocation5 + $0x2c8] sm:$0xff]
    %v860 = vld [vmem:[#allocation5 + $0x2d0] sm:$0xff]
    %v861 = vld [vmem:[#allocation5 + $0x2d8] sm:$0xff]
    %v862 = vld [vmem:[#allocation5 + $0x2e0] sm:$0xff]
    %v863 = vld [vmem:[#allocation5 + $0x2e8] sm:$0xff]
    %v864 = vld [vmem:[#allocation5 + $0x2f0] sm:$0xff]
    %v865 = vld [vmem:[#allocation5 + $0x2f8] sm:$0xff]
    %v866 = vld [vmem:[#allocation5 + $0x300] sm:$0xff]
    %v867 = vld [vmem:[#allocation5 + $0x308] sm:$0xff]
    %v868 = vld [vmem:[#allocation5 + $0x310] sm:$0xff]
    %v869 = vld [vmem:[#allocation5 + $0x318] sm:$0xff]
    %v870 = vld [vmem:[#allocation5 + $0x320] sm:$0xff]
    %v871 = vld [vmem:[#allocation5 + $0x328] sm:$0xff]
    %v872 = vld [vmem:[#allocation5 + $0x330] sm:$0xff]
    %v873 = vld [vmem:[#allocation5 + $0x338] sm:$0xff]
    %v874 = vld [vmem:[#allocation5 + $0x340] sm:$0xff]
    %v875 = vld [vmem:[#allocation5 + $0x348] sm:$0xff]
    %v876 = vld [vmem:[#allocation5 + $0x350] sm:$0xff]
    %v877 = vld [vmem:[#allocation5 + $0x358] sm:$0xff]
    %v878 = vld [vmem:[#allocation5 + $0x360] sm:$0xff]
    %v879 = vld [vmem:[#allocation5 + $0x368] sm:$0xff]
    %v880 = vld [vmem:[#allocation5 + $0x370] sm:$0xff]
    %v881 = vld [vmem:[#allocation5 + $0x378] sm:$0xff]
    %v882 = vld [vmem:[#allocation5 + $0x380] sm:$0xff]
    %v883 = vld [vmem:[#allocation5 + $0x388] sm:$0xff]
    %v884 = vld [vmem:[#allocation5 + $0x390] sm:$0xff]
    %v885 = vld [vmem:[#allocation5 + $0x398] sm:$0xff]
    %v886 = vld [vmem:[#allocation5 + $0x3a0] sm:$0xff]
    %v887 = vld [vmem:[#allocation5 + $0x3a8] sm:$0xff]
    %v888 = vld [vmem:[#allocation5 + $0x3b0] sm:$0xff]
    %v889 = vld [vmem:[#allocation5 + $0x3b8] sm:$0xff]
    %v890 = vld [vmem:[#allocation5 + $0x3c0] sm:$0xff]
    %v891 = vld [vmem:[#allocation5 + $0x3c8] sm:$0xff]
    %v892 = vld [vmem:[#allocation5 + $0x3d0] sm:$0xff]
    %v893 = vld [vmem:[#allocation5 + $0x3d8] sm:$0xff]
    %v894 = vld [vmem:[#allocation5 + $0x3e0] sm:$0xff]
    %v895 = vld [vmem:[#allocation5 + $0x3e8] sm:$0xff]
    %v896 = vld [vmem:[#allocation5 + $0x3f0] sm:$0xff]
    %v897 = vld [vmem:[#allocation5 + $0x3f8] sm:$0xff]
    %v898 = vld [vmem:[#allocation5 + $0x400] sm:$0xff]
    %v899 = vld [vmem:[#allocation5 + $0x408] sm:$0xff]
    %v900 = vld [vmem:[#allocation5 + $0x410] sm:$0xff]
    %v901 = vld [vmem:[#allocation5 + $0x418] sm:$0xff]
    %v902 = vld [vmem:[#allocation5 + $0x420] sm:$0xff]
    %v903 = vld [vmem:[#allocation5 + $0x428] sm:$0xff]
    %v904 = vld [vmem:[#allocation5 + $0x430] sm:$0xff]
    %v905 = vld [vmem:[#allocation5 + $0x438] sm:$0xff]
    %v906 = vld [vmem:[#allocation5 + $0x440] sm:$0xff]
    %v907 = vld [vmem:[#allocation5 + $0x448] sm:$0xff]
    %v908 = vld [vmem:[#allocation5 + $0x450] sm:$0xff]
    %v909 = vld [vmem:[#allocation5 + $0x458] sm:$0xff]
    %v910 = vld [vmem:[#allocation5 + $0x460] sm:$0xff]
    %v911 = vld [vmem:[#allocation5 + $0x468] sm:$0xff]
    %v912 = vld [vmem:[#allocation5 + $0x470] sm:$0xff]
    %v913 = vld [vmem:[#allocation5 + $0x478] sm:$0xff]
    %v914 = vld [vmem:[#allocation5 + $0x480] sm:$0xff]
    %v915 = vld [vmem:[#allocation5 + $0x488] sm:$0xff]
    %v916 = vld [vmem:[#allocation5 + $0x490] sm:$0xff]
    %v917 = vld [vmem:[#allocation5 + $0x498] sm:$0xff]
    %v918 = vld [vmem:[#allocation5 + $0x4a0] sm:$0xff]
    %v919 = vld [vmem:[#allocation5 + $0x4a8] sm:$0xff]
    %v920 = vld [vmem:[#allocation5 + $0x4b0] sm:$0xff]
    %v921 = vld [vmem:[#allocation5 + $0x4b8] sm:$0xff]
    %v922 = vld [vmem:[#allocation5 + $0x4c0] sm:$0xff]
    %v923 = vld [vmem:[#allocation5 + $0x4c8] sm:$0xff]
    %v924 = vld [vmem:[#allocation5 + $0x4d0] sm:$0xff]
    %v925 = vld [vmem:[#allocation5 + $0x4d8] sm:$0xff]
    %v926 = vld [vmem:[#allocation5 + $0x4e0] sm:$0xff]
    %v927 = vld [vmem:[#allocation5 + $0x4e8] sm:$0xff]
    %v928 = vld [vmem:[#allocation5 + $0x4f0] sm:$0xff]
    %v929 = vld [vmem:[#allocation5 + $0x4f8] sm:$0xff]
    %v930 = vld [vmem:[#allocation5 + $0x500] sm:$0xff]
    %v931 = vld [vmem:[#allocation5 + $0x508] sm:$0xff]
    %v932 = vld [vmem:[#allocation5 + $0x510] sm:$0xff]
    %v933 = vld [vmem:[#allocation5 + $0x518] sm:$0xff]
    %v934 = vld [vmem:[#allocation5 + $0x520] sm:$0xff]
    %v935 = vld [vmem:[#allocation5 + $0x528] sm:$0xff]
    %v936 = vld [vmem:[#allocation5 + $0x530] sm:$0xff]
    %v937 = vld [vmem:[#allocation5 + $0x538] sm:$0xff]
    %v938 = vld [vmem:[#allocation5 + $0x540] sm:$0xff]
    %v939 = vld [vmem:[#allocation5 + $0x548] sm:$0xff]
    %v940 = vld [vmem:[#allocation5 + $0x550] sm:$0xff]
    %v941 = vld [vmem:[#allocation5 + $0x558] sm:$0xff]
    %v942 = vld [vmem:[#allocation5 + $0x560] sm:$0xff]
    %v943 = vld [vmem:[#allocation5 + $0x568] sm:$0xff]
    %v944 = vld [vmem:[#allocation5 + $0x570] sm:$0xff]
    %v945 = vld [vmem:[#allocation5 + $0x578] sm:$0xff]
    %v946 = vld [vmem:[#allocation5 + $0x580] sm:$0xff]
    %v947 = vld [vmem:[#allocation5 + $0x588] sm:$0xff]
    %v948 = vld [vmem:[#allocation5 + $0x590] sm:$0xff]
    %v949 = vld [vmem:[#allocation5 + $0x598] sm:$0xff]
    %v950 = vld [vmem:[#allocation5 + $0x5a0] sm:$0xff]
    %v951 = vld [vmem:[#allocation5 + $0x5a8] sm:$0xff]
    %v952 = vld [vmem:[#allocation5 + $0x5b0] sm:$0xff]
    %v953 = vld [vmem:[#allocation5 + $0x5b8] sm:$0xff]
    %v954 = vld [vmem:[#allocation5 + $0x5c0] sm:$0xff]
    %v955 = vld [vmem:[#allocation5 + $0x5c8] sm:$0xff]
    %v956 = vld [vmem:[#allocation5 + $0x5d0] sm:$0xff]
    %v957 = vld [vmem:[#allocation5 + $0x5d8] sm:$0xff]
    %v958 = vld [vmem:[#allocation5 + $0x5e0] sm:$0xff]
    %v959 = vld [vmem:[#allocation5 + $0x5e8] sm:$0xff]
    %v960 = vld [vmem:[#allocation5 + $0x5f0] sm:$0xff]
    %v961 = vld [vmem:[#allocation5 + $0x5f8] sm:$0xff]
    %v962 = vld [vmem:[#allocation5 + $0x600] sm:$0xff]
    %v963 = vld [vmem:[#allocation5 + $0x608] sm:$0xff]
    %v964 = vld [vmem:[#allocation5 + $0x610] sm:$0xff]
    %v965 = vld [vmem:[#allocation5 + $0x618] sm:$0xff]
    %v966 = vld [vmem:[#allocation5 + $0x620] sm:$0xff]
    %v967 = vld [vmem:[#allocation5 + $0x628] sm:$0xff]
    %v968 = vld [vmem:[#allocation5 + $0x630] sm:$0xff]
    %v969 = vld [vmem:[#allocation5 + $0x638] sm:$0xff]
    %v970 = vld [vmem:[#allocation5 + $0x640] sm:$0xff]
    %v971 = vld [vmem:[#allocation5 + $0x648] sm:$0xff]
    %v972 = vld [vmem:[#allocation5 + $0x650] sm:$0xff]
    %v973 = vld [vmem:[#allocation5 + $0x658] sm:$0xff]
    %v974 = vld [vmem:[#allocation5 + $0x660] sm:$0xff]
    %v975 = vld [vmem:[#allocation5 + $0x668] sm:$0xff]
    %v976 = vld [vmem:[#allocation5 + $0x670] sm:$0xff]
    %v977 = vld [vmem:[#allocation5 + $0x678] sm:$0xff]
    %v978 = vld [vmem:[#allocation5 + $0x680] sm:$0xff]
    %v979 = vld [vmem:[#allocation5 + $0x688] sm:$0xff]
    %v980 = vld [vmem:[#allocation5 + $0x690] sm:$0xff]
    %v981 = vld [vmem:[#allocation5 + $0x698] sm:$0xff]
    %v982 = vld [vmem:[#allocation5 + $0x6a0] sm:$0xff]
    %v983 = vld [vmem:[#allocation5 + $0x6a8] sm:$0xff]
    %v984 = vld [vmem:[#allocation5 + $0x6b0] sm:$0xff]
    %v985 = vld [vmem:[#allocation5 + $0x6b8] sm:$0xff]
    %v986 = vld [vmem:[#allocation5 + $0x6c0] sm:$0xff]
    %v987 = vld [vmem:[#allocation5 + $0x6c8] sm:$0xff]
    %v988 = vld [vmem:[#allocation5 + $0x6d0] sm:$0xff]
    %v989 = vld [vmem:[#allocation5 + $0x6d8] sm:$0xff]
    %v990 = vld [vmem:[#allocation5 + $0x6e0] sm:$0xff]
    %v991 = vld [vmem:[#allocation5 + $0x6e8] sm:$0xff]
    %v992 = vld [vmem:[#allocation5 + $0x6f0] sm:$0xff]
    %v993 = vld [vmem:[#allocation5 + $0x6f8] sm:$0xff]
    %v994 = vld [vmem:[#allocation5 + $0x700] sm:$0xff]
    %v995 = vld [vmem:[#allocation5 + $0x708] sm:$0xff]
    %v996 = vld [vmem:[#allocation5 + $0x710] sm:$0xff]
    %v997 = vld [vmem:[#allocation5 + $0x718] sm:$0xff]
    %v998 = vld [vmem:[#allocation5 + $0x720] sm:$0xff]
    %v999 = vld [vmem:[#allocation5 + $0x728] sm:$0xff]
    %v1000 = vld [vmem:[#allocation5 + $0x730] sm:$0xff]
    %v1001 = vld [vmem:[#allocation5 + $0x738] sm:$0xff]
    %v1002 = vld [vmem:[#allocation5 + $0x740] sm:$0xff]
    %v1003 = vld [vmem:[#allocation5 + $0x748] sm:$0xff]
    %v1004 = vld [vmem:[#allocation5 + $0x750] sm:$0xff]
    %v1005 = vld [vmem:[#allocation5 + $0x758] sm:$0xff]
    %v1006 = vld [vmem:[#allocation5 + $0x760] sm:$0xff]
    %v1007 = vld [vmem:[#allocation5 + $0x768] sm:$0xff]
    %v1008 = vld [vmem:[#allocation5 + $0x770] sm:$0xff]
    %v1009 = vld [vmem:[#allocation5 + $0x778] sm:$0xff]
    %v1010 = vld [vmem:[#allocation5 + $0x780] sm:$0xff]
    %v1011 = vld [vmem:[#allocation5 + $0x788] sm:$0xff]
    %v1012 = vld [vmem:[#allocation5 + $0x790] sm:$0xff]
    %v1013 = vld [vmem:[#allocation5 + $0x798] sm:$0xff]
    %v1014 = vld [vmem:[#allocation5 + $0x7a0] sm:$0xff]
    %v1015 = vld [vmem:[#allocation5 + $0x7a8] sm:$0xff]
    %v1016 = vld [vmem:[#allocation5 + $0x7b0] sm:$0xff]
    %v1017 = vld [vmem:[#allocation5 + $0x7b8] sm:$0xff]
    %v1018 = vld [vmem:[#allocation5 + $0x7c0] sm:$0xff]
    %v1019 = vld [vmem:[#allocation5 + $0x7c8] sm:$0xff]
    %v1020 = vld [vmem:[#allocation5 + $0x7d0] sm:$0xff]
    %v1021 = vld [vmem:[#allocation5 + $0x7d8] sm:$0xff]
    %v1022 = vld [vmem:[#allocation5 + $0x7e0] sm:$0xff]
    %v1023 = vld [vmem:[#allocation5 + $0x7e8] sm:$0xff]
    %v1024 = vld [vmem:[#allocation5 + $0x7f0] sm:$0xff]
    %v1025 = vld [vmem:[#allocation5 + $0x7f8] sm:$0xff]
    %v1026 = vld [vmem:[#allocation5 + $0x800] sm:$0xff]
    %v1027 = vld [vmem:[#allocation5 + $0x808] sm:$0xff]
    %v1028 = vld [vmem:[#allocation5 + $0x810] sm:$0xff]
    %v1029 = vld [vmem:[#allocation5 + $0x818] sm:$0xff]
    %v1030 = vld [vmem:[#allocation5 + $0x820] sm:$0xff]
    %v1031 = vld [vmem:[#allocation5 + $0x828] sm:$0xff]
    %v1032 = vld [vmem:[#allocation5 + $0x830] sm:$0xff]
    %v1033 = vld [vmem:[#allocation5 + $0x838] sm:$0xff]
    %v1034 = vld [vmem:[#allocation5 + $0x840] sm:$0xff]
    %v1035 = vld [vmem:[#allocation5 + $0x848] sm:$0xff]
    %v1036 = vld [vmem:[#allocation5 + $0x850] sm:$0xff]
    %v1037 = vld [vmem:[#allocation5 + $0x858] sm:$0xff]
    %v1038 = vld [vmem:[#allocation5 + $0x860] sm:$0xff]
    %v1039 = vld [vmem:[#allocation5 + $0x868] sm:$0xff]
    %v1040 = vld [vmem:[#allocation5 + $0x870] sm:$0xff]
    %v1041 = vld [vmem:[#allocation5 + $0x878] sm:$0xff]
    %v1042 = vld [vmem:[#allocation5 + $0x880] sm:$0xff]
    %v1043 = vld [vmem:[#allocation5 + $0x888] sm:$0xff]
    %v1044 = vld [vmem:[#allocation5 + $0x890] sm:$0xff]
    %v1045 = vld [vmem:[#allocation5 + $0x898] sm:$0xff]
    %v1046 = vld [vmem:[#allocation5 + $0x8a0] sm:$0xff]
    %v1047 = vld [vmem:[#allocation5 + $0x8a8] sm:$0xff]
    %v1048 = vld [vmem:[#allocation5 + $0x8b0] sm:$0xff]
    %v1049 = vld [vmem:[#allocation5 + $0x8b8] sm:$0xff]
    %v1050 = vld [vmem:[#allocation5 + $0x8c0] sm:$0xff]
    %v1051 = vld [vmem:[#allocation5 + $0x8c8] sm:$0xff]
    %v1052 = vld [vmem:[#allocation5 + $0x8d0] sm:$0xff]
    %v1053 = vld [vmem:[#allocation5 + $0x8d8] sm:$0xff]
    %v1054 = vld [vmem:[#allocation5 + $0x8e0] sm:$0xff]
    %v1055 = vld [vmem:[#allocation5 + $0x8e8] sm:$0xff]
    %v1056 = vld [vmem:[#allocation5 + $0x8f0] sm:$0xff]
    %v1057 = vld [vmem:[#allocation5 + $0x8f8] sm:$0xff]
    %v1058 = vld [vmem:[#allocation5 + $0x900] sm:$0xff]
    %v1059 = vld [vmem:[#allocation5 + $0x908] sm:$0xff]
    %v1060 = vld [vmem:[#allocation5 + $0x910] sm:$0xff]
    %v1061 = vld [vmem:[#allocation5 + $0x918] sm:$0xff]
    %v1062 = vld [vmem:[#allocation5 + $0x920] sm:$0xff]
    %v1063 = vld [vmem:[#allocation5 + $0x928] sm:$0xff]
    %v1064 = vld [vmem:[#allocation5 + $0x930] sm:$0xff]
    %v1065 = vld [vmem:[#allocation5 + $0x938] sm:$0xff]
    %v1066 = vld [vmem:[#allocation5 + $0x940] sm:$0xff]
    %v1067 = vld [vmem:[#allocation5 + $0x948] sm:$0xff]
    %v1068 = vld [vmem:[#allocation5 + $0x950] sm:$0xff]
    %v1069 = vld [vmem:[#allocation5 + $0x958] sm:$0xff]
    %v1070 = vld [vmem:[#allocation5 + $0x960] sm:$0xff]
    %v1071 = vld [vmem:[#allocation5 + $0x968] sm:$0xff]
    %v1072 = vld [vmem:[#allocation5 + $0x970] sm:$0xff]
    %v1073 = vld [vmem:[#allocation5 + $0x978] sm:$0xff]
    %v1074 = vld [vmem:[#allocation5 + $0x980] sm:$0xff]
    %v1075 = vld [vmem:[#allocation5 + $0x988] sm:$0xff]
    %v1076 = vld [vmem:[#allocation5 + $0x990] sm:$0xff]
    %v1077 = vld [vmem:[#allocation5 + $0x998] sm:$0xff]
    %v1078 = vld [vmem:[#allocation5 + $0x9a0] sm:$0xff]
    %v1079 = vld [vmem:[#allocation5 + $0x9a8] sm:$0xff]
    %v1080 = vld [vmem:[#allocation5 + $0x9b0] sm:$0xff]
    %v1081 = vld [vmem:[#allocation5 + $0x9b8] sm:$0xff]
    %v1082 = vld [vmem:[#allocation5 + $0x9c0] sm:$0xff]
    %v1083 = vld [vmem:[#allocation5 + $0x9c8] sm:$0xff]
    %v1084 = vld [vmem:[#allocation5 + $0x9d0] sm:$0xff]
    %v1085 = vld [vmem:[#allocation5 + $0x9d8] sm:$0xff]
    %v1086 = vld [vmem:[#allocation5 + $0x9e0] sm:$0xff]
    %v1087 = vld [vmem:[#allocation5 + $0x9e8] sm:$0xff]
    %v1088 = vld [vmem:[#allocation5 + $0x9f0] sm:$0xff]
    %v1089 = vld [vmem:[#allocation5 + $0x9f8] sm:$0xff]
    %v1090 = vld [vmem:[#allocation5 + $0xa00] sm:$0xff]
    %v1091 = vld [vmem:[#allocation5 + $0xa08] sm:$0xff]
    %v1092 = vld [vmem:[#allocation5 + $0xa10] sm:$0xff]
    %v1093 = vld [vmem:[#allocation5 + $0xa18] sm:$0xff]
    %v1094 = vld [vmem:[#allocation5 + $0xa20] sm:$0xff]
    %v1095 = vld [vmem:[#allocation5 + $0xa28] sm:$0xff]
    %v1096 = vld [vmem:[#allocation5 + $0xa30] sm:$0xff]
    %v1097 = vld [vmem:[#allocation5 + $0xa38] sm:$0xff]
    %v1098 = vld [vmem:[#allocation5 + $0xa40] sm:$0xff]
    %v1099 = vld [vmem:[#allocation5 + $0xa48] sm:$0xff]
    %v1100 = vld [vmem:[#allocation5 + $0xa50] sm:$0xff]
    %v1101 = vld [vmem:[#allocation5 + $0xa58] sm:$0xff]
    %v1102 = vld [vmem:[#allocation5 + $0xa60] sm:$0xff]
    %v1103 = vld [vmem:[#allocation5 + $0xa68] sm:$0xff]
    %v1104 = vld [vmem:[#allocation5 + $0xa70] sm:$0xff]
    %v1105 = vld [vmem:[#allocation5 + $0xa78] sm:$0xff]
    %v1106 = vld [vmem:[#allocation5 + $0xa80] sm:$0xff]
    %v1107 = vld [vmem:[#allocation5 + $0xa88] sm:$0xff]
    %v1108 = vld [vmem:[#allocation5 + $0xa90] sm:$0xff]
    %v1109 = vld [vmem:[#allocation5 + $0xa98] sm:$0xff]
    %v1110 = vld [vmem:[#allocation5 + $0xaa0] sm:$0xff]
    %v1111 = vld [vmem:[#allocation5 + $0xaa8] sm:$0xff]
    %v1112 = vld [vmem:[#allocation5 + $0xab0] sm:$0xff]
    %v1113 = vld [vmem:[#allocation5 + $0xab8] sm:$0xff]
    %v1114 = vld [vmem:[#allocation5 + $0xac0] sm:$0xff]
    %v1115 = vld [vmem:[#allocation5 + $0xac8] sm:$0xff]
    %v1116 = vld [vmem:[#allocation5 + $0xad0] sm:$0xff]
    %v1117 = vld [vmem:[#allocation5 + $0xad8] sm:$0xff]
    %v1118 = vld [vmem:[#allocation5 + $0xae0] sm:$0xff]
    %v1119 = vld [vmem:[#allocation5 + $0xae8] sm:$0xff]
    %v1120 = vld [vmem:[#allocation5 + $0xaf0] sm:$0xff]
    %v1121 = vld [vmem:[#allocation5 + $0xaf8] sm:$0xff]
    %v1122 = vld [vmem:[#allocation5 + $0xb00] sm:$0xff]
    %v1123 = vld [vmem:[#allocation5 + $0xb08] sm:$0xff]
    %v1124 = vld [vmem:[#allocation5 + $0xb10] sm:$0xff]
    %v1125 = vld [vmem:[#allocation5 + $0xb18] sm:$0xff]
    %v1126 = vld [vmem:[#allocation5 + $0xb20] sm:$0xff]
    %v1127 = vld [vmem:[#allocation5 + $0xb28] sm:$0xff]
    %v1128 = vld [vmem:[#allocation5 + $0xb30] sm:$0xff]
    %v1129 = vld [vmem:[#allocation5 + $0xb38] sm:$0xff]
    %v1130 = vld [vmem:[#allocation5 + $0xb40] sm:$0xff]
    %v1131 = vld [vmem:[#allocation5 + $0xb48] sm:$0xff]
    %v1132 = vld [vmem:[#allocation5 + $0xb50] sm:$0xff]
    %v1133 = vld [vmem:[#allocation5 + $0xb58] sm:$0xff]
    %v1134 = vld [vmem:[#allocation5 + $0xb60] sm:$0xff]
    %v1135 = vld [vmem:[#allocation5 + $0xb68] sm:$0xff]
    %v1136 = vld [vmem:[#allocation5 + $0xb70] sm:$0xff]
    %v1137 = vld [vmem:[#allocation5 + $0xb78] sm:$0xff]
    %v1138 = vld [vmem:[#allocation5 + $0xb80] sm:$0xff]
    %v1139 = vld [vmem:[#allocation5 + $0xb88] sm:$0xff]
    %v1140 = vld [vmem:[#allocation5 + $0xb90] sm:$0xff]
    %v1141 = vld [vmem:[#allocation5 + $0xb98] sm:$0xff]
    %v1142 = vld [vmem:[#allocation5 + $0xba0] sm:$0xff]
    %v1143 = vld [vmem:[#allocation5 + $0xba8] sm:$0xff]
    %v1144 = vld [vmem:[#allocation5 + $0xbb0] sm:$0xff]
    %v1145 = vld [vmem:[#allocation5 + $0xbb8] sm:$0xff]
    %v1146 = vld [vmem:[#allocation5 + $0xbc0] sm:$0xff]
    %v1147 = vld [vmem:[#allocation5 + $0xbc8] sm:$0xff]
    %v1148 = vld [vmem:[#allocation5 + $0xbd0] sm:$0xff]
    %v1149 = vld [vmem:[#allocation5 + $0xbd8] sm:$0xff]
    %v1150 = vld [vmem:[#allocation5 + $0xbe0] sm:$0xff]
    %v1151 = vld [vmem:[#allocation5 + $0xbe8] sm:$0xff]
    %v1152 = vld [vmem:[#allocation5 + $0xbf0] sm:$0xff]
    %v1153 = vld [vmem:[#allocation5 + $0xbf8] sm:$0xff]
    %v1154 = vld [vmem:[#allocation5 + $0xc00] sm:$0xff]
    %v1155 = vld [vmem:[#allocation5 + $0xc08] sm:$0xff]
    %v1156 = vld [vmem:[#allocation5 + $0xc10] sm:$0xff]
    %v1157 = vld [vmem:[#allocation5 + $0xc18] sm:$0xff]
    %v1158 = vld [vmem:[#allocation5 + $0xc20] sm:$0xff]
    %v1159 = vld [vmem:[#allocation5 + $0xc28] sm:$0xff]
    %v1160 = vld [vmem:[#allocation5 + $0xc30] sm:$0xff]
    %v1161 = vld [vmem:[#allocation5 + $0xc38] sm:$0xff]
    %v1162 = vld [vmem:[#allocation5 + $0xc40] sm:$0xff]
    %v1163 = vld [vmem:[#allocation5 + $0xc48] sm:$0xff]
    %v1164 = vld [vmem:[#allocation5 + $0xc50] sm:$0xff]
    %v1165 = vld [vmem:[#allocation5 + $0xc58] sm:$0xff]
    %v1166 = vld [vmem:[#allocation5 + $0xc60] sm:$0xff]
    %v1167 = vld [vmem:[#allocation5 + $0xc68] sm:$0xff]
    %v1168 = vld [vmem:[#allocation5 + $0xc70] sm:$0xff]
    %v1169 = vld [vmem:[#allocation5 + $0xc78] sm:$0xff]
    %v1170 = vld [vmem:[#allocation7] sm:$0x3]
    %v1172 = vlaneseq
    %v1173 = vshrl.u32 %v1172, 7
    %v1174 = vsub.s32 0, %v1173
    %v1175 = vrot.slane %v1170, %v1174
    %v1176 = vlaneseq
    %v1177 = vshrl.u32 %v1176, 7
    %v1178 = vsub.s32 1, %v1177
    %v1179 = vrot.slane %v1170, %v1178
    %v1582 = vunpack.c.l.b16 %v770
    %v1583 = vunpack.c.h.b16 %v770
    %v1584 = vunpack.c.l.b16 %v771
    %v1585 = vunpack.c.h.b16 %v771
    %v1586 = vunpack.c.l.b16 %v772
    %v1587 = vunpack.c.h.b16 %v772
    %v1588 = vunpack.c.l.b16 %v773
    %v1589 = vunpack.c.h.b16 %v773
    %v1590 = vunpack.c.l.b16 %v774
    %v1591 = vunpack.c.h.b16 %v774
    %v1592 = vunpack.c.l.b16 %v775
    %v1593 = vunpack.c.h.b16 %v775
    %v1594 = vunpack.c.l.b16 %v776
    %v1595 = vunpack.c.h.b16 %v776
    %v1596 = vunpack.c.l.b16 %v777
    %v1597 = vunpack.c.h.b16 %v777
    %v1598 = vunpack.c.l.b16 %v778
    %v1599 = vunpack.c.h.b16 %v778
    %v1600 = vunpack.c.l.b16 %v779
    %v1601 = vunpack.c.h.b16 %v779
    %v1602 = vunpack.c.l.b16 %v780
    %v1603 = vunpack.c.h.b16 %v780
    %v1604 = vunpack.c.l.b16 %v781
    %v1605 = vunpack.c.h.b16 %v781
    %v1606 = vunpack.c.l.b16 %v782
    %v1607 = vunpack.c.h.b16 %v782
    %v1608 = vunpack.c.l.b16 %v783
    %v1609 = vunpack.c.h.b16 %v783
    %v1610 = vunpack.c.l.b16 %v784
    %v1611 = vunpack.c.h.b16 %v784
    %v1612 = vunpack.c.l.b16 %v785
    %v1613 = vunpack.c.h.b16 %v785
    %v1614 = vunpack.c.l.b16 %v786
    %v1615 = vunpack.c.h.b16 %v786
    %v1616 = vunpack.c.l.b16 %v787
    %v1617 = vunpack.c.h.b16 %v787
    %v1618 = vunpack.c.l.b16 %v788
    %v1619 = vunpack.c.h.b16 %v788
    %v1620 = vunpack.c.l.b16 %v789
    %v1621 = vunpack.c.h.b16 %v789
    %v1622 = vunpack.c.l.b16 %v790
    %v1623 = vunpack.c.h.b16 %v790
    %v1624 = vunpack.c.l.b16 %v791
    %v1625 = vunpack.c.h.b16 %v791
    %v1626 = vunpack.c.l.b16 %v792
    %v1627 = vunpack.c.h.b16 %v792
    %v1628 = vunpack.c.l.b16 %v793
    %v1629 = vunpack.c.h.b16 %v793
    %v1630 = vunpack.c.l.b16 %v794
    %v1631 = vunpack.c.h.b16 %v794
    %v1632 = vunpack.c.l.b16 %v795
    %v1633 = vunpack.c.h.b16 %v795
    %v1634 = vunpack.c.l.b16 %v796
    %v1635 = vunpack.c.h.b16 %v796
    %v1636 = vunpack.c.l.b16 %v797
    %v1637 = vunpack.c.h.b16 %v797
    %v1638 = vunpack.c.l.b16 %v798
    %v1639 = vunpack.c.h.b16 %v798
    %v1640 = vunpack.c.l.b16 %v799
    %v1641 = vunpack.c.h.b16 %v799
    %v1642 = vunpack.c.l.b16 %v800
    %v1643 = vunpack.c.h.b16 %v800
    %v1644 = vunpack.c.l.b16 %v801
    %v1645 = vunpack.c.h.b16 %v801
    %v1646 = vunpack.c.l.b16 %v802
    %v1647 = vunpack.c.h.b16 %v802
    %v1648 = vunpack.c.l.b16 %v803
    %v1649 = vunpack.c.h.b16 %v803
    %v1650 = vunpack.c.l.b16 %v804
    %v1651 = vunpack.c.h.b16 %v804
    %v1652 = vunpack.c.l.b16 %v805
    %v1653 = vunpack.c.h.b16 %v805
    %v1654 = vunpack.c.l.b16 %v806
    %v1655 = vunpack.c.h.b16 %v806
    %v1656 = vunpack.c.l.b16 %v807
    %v1657 = vunpack.c.h.b16 %v807
    %v1658 = vunpack.c.l.b16 %v808
    %v1659 = vunpack.c.h.b16 %v808
    %v1660 = vunpack.c.l.b16 %v809
    %v1661 = vunpack.c.h.b16 %v809
    %v1662 = vunpack.c.l.b16 %v810
    %v1663 = vunpack.c.h.b16 %v810
    %v1664 = vunpack.c.l.b16 %v811
    %v1665 = vunpack.c.h.b16 %v811
    %v1666 = vunpack.c.l.b16 %v812
    %v1667 = vunpack.c.h.b16 %v812
    %v1668 = vunpack.c.l.b16 %v813
    %v1669 = vunpack.c.h.b16 %v813
    %v1670 = vunpack.c.l.b16 %v814
    %v1671 = vunpack.c.h.b16 %v814
    %v1672 = vunpack.c.l.b16 %v815
    %v1673 = vunpack.c.h.b16 %v815
    %v1674 = vunpack.c.l.b16 %v816
    %v1675 = vunpack.c.h.b16 %v816
    %v1676 = vunpack.c.l.b16 %v817
    %v1677 = vunpack.c.h.b16 %v817
    %v1678 = vunpack.c.l.b16 %v818
    %v1679 = vunpack.c.h.b16 %v818
    %v1680 = vunpack.c.l.b16 %v819
    %v1681 = vunpack.c.h.b16 %v819
    %v1682 = vunpack.c.l.b16 %v820
    %v1683 = vunpack.c.h.b16 %v820
    %v1684 = vunpack.c.l.b16 %v821
    %v1685 = vunpack.c.h.b16 %v821
    %v1686 = vunpack.c.l.b16 %v822
    %v1687 = vunpack.c.h.b16 %v822
    %v1688 = vunpack.c.l.b16 %v823
    %v1689 = vunpack.c.h.b16 %v823
    %v1690 = vunpack.c.l.b16 %v824
    %v1691 = vunpack.c.h.b16 %v824
    %v1692 = vunpack.c.l.b16 %v825
    %v1693 = vunpack.c.h.b16 %v825
    %v1694 = vunpack.c.l.b16 %v826
    %v1695 = vunpack.c.h.b16 %v826
    %v1696 = vunpack.c.l.b16 %v827
    %v1697 = vunpack.c.h.b16 %v827
    %v1698 = vunpack.c.l.b16 %v828
    %v1699 = vunpack.c.h.b16 %v828
    %v1700 = vunpack.c.l.b16 %v829
    %v1701 = vunpack.c.h.b16 %v829
    %v1702 = vunpack.c.l.b16 %v830
    %v1703 = vunpack.c.h.b16 %v830
    %v1704 = vunpack.c.l.b16 %v831
    %v1705 = vunpack.c.h.b16 %v831
    %v1706 = vunpack.c.l.b16 %v832
    %v1707 = vunpack.c.h.b16 %v832
    %v1708 = vunpack.c.l.b16 %v833
    %v1709 = vunpack.c.h.b16 %v833
    %v1710 = vunpack.c.l.b16 %v834
    %v1711 = vunpack.c.h.b16 %v834
    %v1712 = vunpack.c.l.b16 %v835
    %v1713 = vunpack.c.h.b16 %v835
    %v1714 = vunpack.c.l.b16 %v836
    %v1715 = vunpack.c.h.b16 %v836
    %v1716 = vunpack.c.l.b16 %v837
    %v1717 = vunpack.c.h.b16 %v837
    %v1718 = vunpack.c.l.b16 %v838
    %v1719 = vunpack.c.h.b16 %v838
    %v1720 = vunpack.c.l.b16 %v839
    %v1721 = vunpack.c.h.b16 %v839
    %v1722 = vunpack.c.l.b16 %v840
    %v1723 = vunpack.c.h.b16 %v840
    %v1724 = vunpack.c.l.b16 %v841
    %v1725 = vunpack.c.h.b16 %v841
    %v1726 = vunpack.c.l.b16 %v842
    %v1727 = vunpack.c.h.b16 %v842
    %v1728 = vunpack.c.l.b16 %v843
    %v1729 = vunpack.c.h.b16 %v843
    %v1730 = vunpack.c.l.b16 %v844
    %v1731 = vunpack.c.h.b16 %v844
    %v1732 = vunpack.c.l.b16 %v845
    %v1733 = vunpack.c.h.b16 %v845
    %v1734 = vunpack.c.l.b16 %v846
    %v1735 = vunpack.c.h.b16 %v846
    %v1736 = vunpack.c.l.b16 %v847
    %v1737 = vunpack.c.h.b16 %v847
    %v1738 = vunpack.c.l.b16 %v848
    %v1739 = vunpack.c.h.b16 %v848
    %v1740 = vunpack.c.l.b16 %v849
    %v1741 = vunpack.c.h.b16 %v849
    %v1742 = vunpack.c.l.b16 %v850
    %v1743 = vunpack.c.h.b16 %v850
    %v1744 = vunpack.c.l.b16 %v851
    %v1745 = vunpack.c.h.b16 %v851
    %v1746 = vunpack.c.l.b16 %v852
    %v1747 = vunpack.c.h.b16 %v852
    %v1748 = vunpack.c.l.b16 %v853
    %v1749 = vunpack.c.h.b16 %v853
    %v1750 = vunpack.c.l.b16 %v854
    %v1751 = vunpack.c.h.b16 %v854
    %v1752 = vunpack.c.l.b16 %v855
    %v1753 = vunpack.c.h.b16 %v855
    %v1754 = vunpack.c.l.b16 %v856
    %v1755 = vunpack.c.h.b16 %v856
    %v1756 = vunpack.c.l.b16 %v857
    %v1757 = vunpack.c.h.b16 %v857
    %v1758 = vunpack.c.l.b16 %v858
    %v1759 = vunpack.c.h.b16 %v858
    %v1760 = vunpack.c.l.b16 %v859
    %v1761 = vunpack.c.h.b16 %v859
    %v1762 = vunpack.c.l.b16 %v860
    %v1763 = vunpack.c.h.b16 %v860
    %v1764 = vunpack.c.l.b16 %v861
    %v1765 = vunpack.c.h.b16 %v861
    %v1766 = vunpack.c.l.b16 %v862
    %v1767 = vunpack.c.h.b16 %v862
    %v1768 = vunpack.c.l.b16 %v863
    %v1769 = vunpack.c.h.b16 %v863
    %v1770 = vunpack.c.l.b16 %v864
    %v1771 = vunpack.c.h.b16 %v864
    %v1772 = vunpack.c.l.b16 %v865
    %v1773 = vunpack.c.h.b16 %v865
    %v1774 = vunpack.c.l.b16 %v866
    %v1775 = vunpack.c.h.b16 %v866
    %v1776 = vunpack.c.l.b16 %v867
    %v1777 = vunpack.c.h.b16 %v867
    %v1778 = vunpack.c.l.b16 %v868
    %v1779 = vunpack.c.h.b16 %v868
    %v1780 = vunpack.c.l.b16 %v869
    %v1781 = vunpack.c.h.b16 %v869
    %v1782 = vunpack.c.l.b16 %v870
    %v1783 = vunpack.c.h.b16 %v870
    %v1784 = vunpack.c.l.b16 %v871
    %v1785 = vunpack.c.h.b16 %v871
    %v1786 = vunpack.c.l.b16 %v872
    %v1787 = vunpack.c.h.b16 %v872
    %v1788 = vunpack.c.l.b16 %v873
    %v1789 = vunpack.c.h.b16 %v873
    %v1790 = vunpack.c.l.b16 %v874
    %v1791 = vunpack.c.h.b16 %v874
    %v1792 = vunpack.c.l.b16 %v875
    %v1793 = vunpack.c.h.b16 %v875
    %v1794 = vunpack.c.l.b16 %v876
    %v1795 = vunpack.c.h.b16 %v876
    %v1796 = vunpack.c.l.b16 %v877
    %v1797 = vunpack.c.h.b16 %v877
    %v1798 = vunpack.c.l.b16 %v878
    %v1799 = vunpack.c.h.b16 %v878
    %v1800 = vunpack.c.l.b16 %v879
    %v1801 = vunpack.c.h.b16 %v879
    %v1802 = vunpack.c.l.b16 %v880
    %v1803 = vunpack.c.h.b16 %v880
    %v1804 = vunpack.c.l.b16 %v881
    %v1805 = vunpack.c.h.b16 %v881
    %v1806 = vunpack.c.l.b16 %v882
    %v1807 = vunpack.c.h.b16 %v882
    %v1808 = vunpack.c.l.b16 %v883
    %v1809 = vunpack.c.h.b16 %v883
    %v1810 = vunpack.c.l.b16 %v884
    %v1811 = vunpack.c.h.b16 %v884
    %v1812 = vunpack.c.l.b16 %v885
    %v1813 = vunpack.c.h.b16 %v885
    %v1814 = vunpack.c.l.b16 %v886
    %v1815 = vunpack.c.h.b16 %v886
    %v1816 = vunpack.c.l.b16 %v887
    %v1817 = vunpack.c.h.b16 %v887
    %v1818 = vunpack.c.l.b16 %v888
    %v1819 = vunpack.c.h.b16 %v888
    %v1820 = vunpack.c.l.b16 %v889
    %v1821 = vunpack.c.h.b16 %v889
    %v1822 = vunpack.c.l.b16 %v890
    %v1823 = vunpack.c.h.b16 %v890
    %v1824 = vunpack.c.l.b16 %v891
    %v1825 = vunpack.c.h.b16 %v891
    %v1826 = vunpack.c.l.b16 %v892
    %v1827 = vunpack.c.h.b16 %v892
    %v1828 = vunpack.c.l.b16 %v893
    %v1829 = vunpack.c.h.b16 %v893
    %v1830 = vunpack.c.l.b16 %v894
    %v1831 = vunpack.c.h.b16 %v894
    %v1832 = vunpack.c.l.b16 %v895
    %v1833 = vunpack.c.h.b16 %v895
    %v1834 = vunpack.c.l.b16 %v896
    %v1835 = vunpack.c.h.b16 %v896
    %v1836 = vunpack.c.l.b16 %v897
    %v1837 = vunpack.c.h.b16 %v897
    %v1838 = vunpack.c.l.b16 %v898
    %v1839 = vunpack.c.h.b16 %v898
    %v1840 = vunpack.c.l.b16 %v899
    %v1841 = vunpack.c.h.b16 %v899
    %v1842 = vunpack.c.l.b16 %v900
    %v1843 = vunpack.c.h.b16 %v900
    %v1844 = vunpack.c.l.b16 %v901
    %v1845 = vunpack.c.h.b16 %v901
    %v1846 = vunpack.c.l.b16 %v902
    %v1847 = vunpack.c.h.b16 %v902
    %v1848 = vunpack.c.l.b16 %v903
    %v1849 = vunpack.c.h.b16 %v903
    %v1850 = vunpack.c.l.b16 %v904
    %v1851 = vunpack.c.h.b16 %v904
    %v1852 = vunpack.c.l.b16 %v905
    %v1853 = vunpack.c.h.b16 %v905
    %v1854 = vunpack.c.l.b16 %v906
    %v1855 = vunpack.c.h.b16 %v906
    %v1856 = vunpack.c.l.b16 %v907
    %v1857 = vunpack.c.h.b16 %v907
    %v1858 = vunpack.c.l.b16 %v908
    %v1859 = vunpack.c.h.b16 %v908
    %v1860 = vunpack.c.l.b16 %v909
    %v1861 = vunpack.c.h.b16 %v909
    %v1862 = vunpack.c.l.b16 %v910
    %v1863 = vunpack.c.h.b16 %v910
    %v1864 = vunpack.c.l.b16 %v911
    %v1865 = vunpack.c.h.b16 %v911
    %v1866 = vunpack.c.l.b16 %v912
    %v1867 = vunpack.c.h.b16 %v912
    %v1868 = vunpack.c.l.b16 %v913
    %v1869 = vunpack.c.h.b16 %v913
    %v1870 = vunpack.c.l.b16 %v914
    %v1871 = vunpack.c.h.b16 %v914
    %v1872 = vunpack.c.l.b16 %v915
    %v1873 = vunpack.c.h.b16 %v915
    %v1874 = vunpack.c.l.b16 %v916
    %v1875 = vunpack.c.h.b16 %v916
    %v1876 = vunpack.c.l.b16 %v917
    %v1877 = vunpack.c.h.b16 %v917
    %v1878 = vunpack.c.l.b16 %v918
    %v1879 = vunpack.c.h.b16 %v918
    %v1880 = vunpack.c.l.b16 %v919
    %v1881 = vunpack.c.h.b16 %v919
    %v1882 = vunpack.c.l.b16 %v920
    %v1883 = vunpack.c.h.b16 %v920
    %v1884 = vunpack.c.l.b16 %v921
    %v1885 = vunpack.c.h.b16 %v921
    %v1886 = vunpack.c.l.b16 %v922
    %v1887 = vunpack.c.h.b16 %v922
    %v1888 = vunpack.c.l.b16 %v923
    %v1889 = vunpack.c.h.b16 %v923
    %v1890 = vunpack.c.l.b16 %v924
    %v1891 = vunpack.c.h.b16 %v924
    %v1892 = vunpack.c.l.b16 %v925
    %v1893 = vunpack.c.h.b16 %v925
    %v1894 = vunpack.c.l.b16 %v926
    %v1895 = vunpack.c.h.b16 %v926
    %v1896 = vunpack.c.l.b16 %v927
    %v1897 = vunpack.c.h.b16 %v927
    %v1898 = vunpack.c.l.b16 %v928
    %v1899 = vunpack.c.h.b16 %v928
    %v1900 = vunpack.c.l.b16 %v929
    %v1901 = vunpack.c.h.b16 %v929
    %v1902 = vunpack.c.l.b16 %v930
    %v1903 = vunpack.c.h.b16 %v930
    %v1904 = vunpack.c.l.b16 %v931
    %v1905 = vunpack.c.h.b16 %v931
    %v1906 = vunpack.c.l.b16 %v932
    %v1907 = vunpack.c.h.b16 %v932
    %v1908 = vunpack.c.l.b16 %v933
    %v1909 = vunpack.c.h.b16 %v933
    %v1910 = vunpack.c.l.b16 %v934
    %v1911 = vunpack.c.h.b16 %v934
    %v1912 = vunpack.c.l.b16 %v935
    %v1913 = vunpack.c.h.b16 %v935
    %v1914 = vunpack.c.l.b16 %v936
    %v1915 = vunpack.c.h.b16 %v936
    %v1916 = vunpack.c.l.b16 %v937
    %v1917 = vunpack.c.h.b16 %v937
    %v1918 = vunpack.c.l.b16 %v938
    %v1919 = vunpack.c.h.b16 %v938
    %v1920 = vunpack.c.l.b16 %v939
    %v1921 = vunpack.c.h.b16 %v939
    %v1922 = vunpack.c.l.b16 %v940
    %v1923 = vunpack.c.h.b16 %v940
    %v1924 = vunpack.c.l.b16 %v941
    %v1925 = vunpack.c.h.b16 %v941
    %v1926 = vunpack.c.l.b16 %v942
    %v1927 = vunpack.c.h.b16 %v942
    %v1928 = vunpack.c.l.b16 %v943
    %v1929 = vunpack.c.h.b16 %v943
    %v1930 = vunpack.c.l.b16 %v944
    %v1931 = vunpack.c.h.b16 %v944
    %v1932 = vunpack.c.l.b16 %v945
    %v1933 = vunpack.c.h.b16 %v945
    %v1934 = vunpack.c.l.b16 %v946
    %v1935 = vunpack.c.h.b16 %v946
    %v1936 = vunpack.c.l.b16 %v947
    %v1937 = vunpack.c.h.b16 %v947
    %v1938 = vunpack.c.l.b16 %v948
    %v1939 = vunpack.c.h.b16 %v948
    %v1940 = vunpack.c.l.b16 %v949
    %v1941 = vunpack.c.h.b16 %v949
    %v1942 = vunpack.c.l.b16 %v950
    %v1943 = vunpack.c.h.b16 %v950
    %v1944 = vunpack.c.l.b16 %v951
    %v1945 = vunpack.c.h.b16 %v951
    %v1946 = vunpack.c.l.b16 %v952
    %v1947 = vunpack.c.h.b16 %v952
    %v1948 = vunpack.c.l.b16 %v953
    %v1949 = vunpack.c.h.b16 %v953
    %v1950 = vunpack.c.l.b16 %v954
    %v1951 = vunpack.c.h.b16 %v954
    %v1952 = vunpack.c.l.b16 %v955
    %v1953 = vunpack.c.h.b16 %v955
    %v1954 = vunpack.c.l.b16 %v956
    %v1955 = vunpack.c.h.b16 %v956
    %v1956 = vunpack.c.l.b16 %v957
    %v1957 = vunpack.c.h.b16 %v957
    %v1958 = vunpack.c.l.b16 %v958
    %v1959 = vunpack.c.h.b16 %v958
    %v1960 = vunpack.c.l.b16 %v959
    %v1961 = vunpack.c.h.b16 %v959
    %v1962 = vunpack.c.l.b16 %v960
    %v1963 = vunpack.c.h.b16 %v960
    %v1964 = vunpack.c.l.b16 %v961
    %v1965 = vunpack.c.h.b16 %v961
    %v1966 = vunpack.c.l.b16 %v962
    %v1967 = vunpack.c.h.b16 %v962
    %v1968 = vunpack.c.l.b16 %v963
    %v1969 = vunpack.c.h.b16 %v963
    %v1970 = vunpack.c.l.b16 %v964
    %v1971 = vunpack.c.h.b16 %v964
    %v1972 = vunpack.c.l.b16 %v965
    %v1973 = vunpack.c.h.b16 %v965
    %v1974 = vunpack.c.l.b16 %v966
    %v1975 = vunpack.c.h.b16 %v966
    %v1976 = vunpack.c.l.b16 %v967
    %v1977 = vunpack.c.h.b16 %v967
    %v1978 = vunpack.c.l.b16 %v968
    %v1979 = vunpack.c.h.b16 %v968
    %v1980 = vunpack.c.l.b16 %v969
    %v1981 = vunpack.c.h.b16 %v969
    %v1982 = vunpack.c.l.b16 %v970
    %v1983 = vunpack.c.h.b16 %v970
    %v1984 = vunpack.c.l.b16 %v971
    %v1985 = vunpack.c.h.b16 %v971
    %v1986 = vunpack.c.l.b16 %v972
    %v1987 = vunpack.c.h.b16 %v972
    %v1988 = vunpack.c.l.b16 %v973
    %v1989 = vunpack.c.h.b16 %v973
    %v1990 = vunpack.c.l.b16 %v974
    %v1991 = vunpack.c.h.b16 %v974
    %v1992 = vunpack.c.l.b16 %v975
    %v1993 = vunpack.c.h.b16 %v975
    %v1994 = vunpack.c.l.b16 %v976
    %v1995 = vunpack.c.h.b16 %v976
    %v1996 = vunpack.c.l.b16 %v977
    %v1997 = vunpack.c.h.b16 %v977
    %v1998 = vunpack.c.l.b16 %v978
    %v1999 = vunpack.c.h.b16 %v978
    %v2000 = vunpack.c.l.b16 %v979
    %v2001 = vunpack.c.h.b16 %v979
    %v2002 = vunpack.c.l.b16 %v980
    %v2003 = vunpack.c.h.b16 %v980
    %v2004 = vunpack.c.l.b16 %v981
    %v2005 = vunpack.c.h.b16 %v981
    %v2006 = vunpack.c.l.b16 %v982
    %v2007 = vunpack.c.h.b16 %v982
    %v2008 = vunpack.c.l.b16 %v983
    %v2009 = vunpack.c.h.b16 %v983
    %v2010 = vunpack.c.l.b16 %v984
    %v2011 = vunpack.c.h.b16 %v984
    %v2012 = vunpack.c.l.b16 %v985
    %v2013 = vunpack.c.h.b16 %v985
    %v2014 = vunpack.c.l.b16 %v986
    %v2015 = vunpack.c.h.b16 %v986
    %v2016 = vunpack.c.l.b16 %v987
    %v2017 = vunpack.c.h.b16 %v987
    %v2018 = vunpack.c.l.b16 %v988
    %v2019 = vunpack.c.h.b16 %v988
    %v2020 = vunpack.c.l.b16 %v989
    %v2021 = vunpack.c.h.b16 %v989
    %v2022 = vunpack.c.l.b16 %v990
    %v2023 = vunpack.c.h.b16 %v990
    %v2024 = vunpack.c.l.b16 %v991
    %v2025 = vunpack.c.h.b16 %v991
    %v2026 = vunpack.c.l.b16 %v992
    %v2027 = vunpack.c.h.b16 %v992
    %v2028 = vunpack.c.l.b16 %v993
    %v2029 = vunpack.c.h.b16 %v993
    %v2030 = vunpack.c.l.b16 %v994
    %v2031 = vunpack.c.h.b16 %v994
    %v2032 = vunpack.c.l.b16 %v995
    %v2033 = vunpack.c.h.b16 %v995
    %v2034 = vunpack.c.l.b16 %v996
    %v2035 = vunpack.c.h.b16 %v996
    %v2036 = vunpack.c.l.b16 %v997
    %v2037 = vunpack.c.h.b16 %v997
    %v2038 = vunpack.c.l.b16 %v998
    %v2039 = vunpack.c.h.b16 %v998
    %v2040 = vunpack.c.l.b16 %v999
    %v2041 = vunpack.c.h.b16 %v999
    %v2042 = vunpack.c.l.b16 %v1000
    %v2043 = vunpack.c.h.b16 %v1000
    %v2044 = vunpack.c.l.b16 %v1001
    %v2045 = vunpack.c.h.b16 %v1001
    %v2046 = vunpack.c.l.b16 %v1002
    %v2047 = vunpack.c.h.b16 %v1002
    %v2048 = vunpack.c.l.b16 %v1003
    %v2049 = vunpack.c.h.b16 %v1003
    %v2050 = vunpack.c.l.b16 %v1004
    %v2051 = vunpack.c.h.b16 %v1004
    %v2052 = vunpack.c.l.b16 %v1005
    %v2053 = vunpack.c.h.b16 %v1005
    %v2054 = vunpack.c.l.b16 %v1006
    %v2055 = vunpack.c.h.b16 %v1006
    %v2056 = vunpack.c.l.b16 %v1007
    %v2057 = vunpack.c.h.b16 %v1007
    %v2058 = vunpack.c.l.b16 %v1008
    %v2059 = vunpack.c.h.b16 %v1008
    %v2060 = vunpack.c.l.b16 %v1009
    %v2061 = vunpack.c.h.b16 %v1009
    %v2062 = vunpack.c.l.b16 %v1010
    %v2063 = vunpack.c.h.b16 %v1010
    %v2064 = vunpack.c.l.b16 %v1011
    %v2065 = vunpack.c.h.b16 %v1011
    %v2066 = vunpack.c.l.b16 %v1012
    %v2067 = vunpack.c.h.b16 %v1012
    %v2068 = vunpack.c.l.b16 %v1013
    %v2069 = vunpack.c.h.b16 %v1013
    %v2070 = vunpack.c.l.b16 %v1014
    %v2071 = vunpack.c.h.b16 %v1014
    %v2072 = vunpack.c.l.b16 %v1015
    %v2073 = vunpack.c.h.b16 %v1015
    %v2074 = vunpack.c.l.b16 %v1016
    %v2075 = vunpack.c.h.b16 %v1016
    %v2076 = vunpack.c.l.b16 %v1017
    %v2077 = vunpack.c.h.b16 %v1017
    %v2078 = vunpack.c.l.b16 %v1018
    %v2079 = vunpack.c.h.b16 %v1018
    %v2080 = vunpack.c.l.b16 %v1019
    %v2081 = vunpack.c.h.b16 %v1019
    %v2082 = vunpack.c.l.b16 %v1020
    %v2083 = vunpack.c.h.b16 %v1020
    %v2084 = vunpack.c.l.b16 %v1021
    %v2085 = vunpack.c.h.b16 %v1021
    %v2086 = vunpack.c.l.b16 %v1022
    %v2087 = vunpack.c.h.b16 %v1022
    %v2088 = vunpack.c.l.b16 %v1023
    %v2089 = vunpack.c.h.b16 %v1023
    %v2090 = vunpack.c.l.b16 %v1024
    %v2091 = vunpack.c.h.b16 %v1024
    %v2092 = vunpack.c.l.b16 %v1025
    %v2093 = vunpack.c.h.b16 %v1025
    %v2094 = vunpack.c.l.b16 %v1026
    %v2095 = vunpack.c.h.b16 %v1026
    %v2096 = vunpack.c.l.b16 %v1027
    %v2097 = vunpack.c.h.b16 %v1027
    %v2098 = vunpack.c.l.b16 %v1028
    %v2099 = vunpack.c.h.b16 %v1028
    %v2100 = vunpack.c.l.b16 %v1029
    %v2101 = vunpack.c.h.b16 %v1029
    %v2102 = vunpack.c.l.b16 %v1030
    %v2103 = vunpack.c.h.b16 %v1030
    %v2104 = vunpack.c.l.b16 %v1031
    %v2105 = vunpack.c.h.b16 %v1031
    %v2106 = vunpack.c.l.b16 %v1032
    %v2107 = vunpack.c.h.b16 %v1032
    %v2108 = vunpack.c.l.b16 %v1033
    %v2109 = vunpack.c.h.b16 %v1033
    %v2110 = vunpack.c.l.b16 %v1034
    %v2111 = vunpack.c.h.b16 %v1034
    %v2112 = vunpack.c.l.b16 %v1035
    %v2113 = vunpack.c.h.b16 %v1035
    %v2114 = vunpack.c.l.b16 %v1036
    %v2115 = vunpack.c.h.b16 %v1036
    %v2116 = vunpack.c.l.b16 %v1037
    %v2117 = vunpack.c.h.b16 %v1037
    %v2118 = vunpack.c.l.b16 %v1038
    %v2119 = vunpack.c.h.b16 %v1038
    %v2120 = vunpack.c.l.b16 %v1039
    %v2121 = vunpack.c.h.b16 %v1039
    %v2122 = vunpack.c.l.b16 %v1040
    %v2123 = vunpack.c.h.b16 %v1040
    %v2124 = vunpack.c.l.b16 %v1041
    %v2125 = vunpack.c.h.b16 %v1041
    %v2126 = vunpack.c.l.b16 %v1042
    %v2127 = vunpack.c.h.b16 %v1042
    %v2128 = vunpack.c.l.b16 %v1043
    %v2129 = vunpack.c.h.b16 %v1043
    %v2130 = vunpack.c.l.b16 %v1044
    %v2131 = vunpack.c.h.b16 %v1044
    %v2132 = vunpack.c.l.b16 %v1045
    %v2133 = vunpack.c.h.b16 %v1045
    %v2134 = vunpack.c.l.b16 %v1046
    %v2135 = vunpack.c.h.b16 %v1046
    %v2136 = vunpack.c.l.b16 %v1047
    %v2137 = vunpack.c.h.b16 %v1047
    %v2138 = vunpack.c.l.b16 %v1048
    %v2139 = vunpack.c.h.b16 %v1048
    %v2140 = vunpack.c.l.b16 %v1049
    %v2141 = vunpack.c.h.b16 %v1049
    %v2142 = vunpack.c.l.b16 %v1050
    %v2143 = vunpack.c.h.b16 %v1050
    %v2144 = vunpack.c.l.b16 %v1051
    %v2145 = vunpack.c.h.b16 %v1051
    %v2146 = vunpack.c.l.b16 %v1052
    %v2147 = vunpack.c.h.b16 %v1052
    %v2148 = vunpack.c.l.b16 %v1053
    %v2149 = vunpack.c.h.b16 %v1053
    %v2150 = vunpack.c.l.b16 %v1054
    %v2151 = vunpack.c.h.b16 %v1054
    %v2152 = vunpack.c.l.b16 %v1055
    %v2153 = vunpack.c.h.b16 %v1055
    %v2154 = vunpack.c.l.b16 %v1056
    %v2155 = vunpack.c.h.b16 %v1056
    %v2156 = vunpack.c.l.b16 %v1057
    %v2157 = vunpack.c.h.b16 %v1057
    %v2158 = vunpack.c.l.b16 %v1058
    %v2159 = vunpack.c.h.b16 %v1058
    %v2160 = vunpack.c.l.b16 %v1059
    %v2161 = vunpack.c.h.b16 %v1059
    %v2162 = vunpack.c.l.b16 %v1060
    %v2163 = vunpack.c.h.b16 %v1060
    %v2164 = vunpack.c.l.b16 %v1061
    %v2165 = vunpack.c.h.b16 %v1061
    %v2166 = vunpack.c.l.b16 %v1062
    %v2167 = vunpack.c.h.b16 %v1062
    %v2168 = vunpack.c.l.b16 %v1063
    %v2169 = vunpack.c.h.b16 %v1063
    %v2170 = vunpack.c.l.b16 %v1064
    %v2171 = vunpack.c.h.b16 %v1064
    %v2172 = vunpack.c.l.b16 %v1065
    %v2173 = vunpack.c.h.b16 %v1065
    %v2174 = vunpack.c.l.b16 %v1066
    %v2175 = vunpack.c.h.b16 %v1066
    %v2176 = vunpack.c.l.b16 %v1067
    %v2177 = vunpack.c.h.b16 %v1067
    %v2178 = vunpack.c.l.b16 %v1068
    %v2179 = vunpack.c.h.b16 %v1068
    %v2180 = vunpack.c.l.b16 %v1069
    %v2181 = vunpack.c.h.b16 %v1069
    %v2182 = vunpack.c.l.b16 %v1070
    %v2183 = vunpack.c.h.b16 %v1070
    %v2184 = vunpack.c.l.b16 %v1071
    %v2185 = vunpack.c.h.b16 %v1071
    %v2186 = vunpack.c.l.b16 %v1072
    %v2187 = vunpack.c.h.b16 %v1072
    %v2188 = vunpack.c.l.b16 %v1073
    %v2189 = vunpack.c.h.b16 %v1073
    %v2190 = vunpack.c.l.b16 %v1074
    %v2191 = vunpack.c.h.b16 %v1074
    %v2192 = vunpack.c.l.b16 %v1075
    %v2193 = vunpack.c.h.b16 %v1075
    %v2194 = vunpack.c.l.b16 %v1076
    %v2195 = vunpack.c.h.b16 %v1076
    %v2196 = vunpack.c.l.b16 %v1077
    %v2197 = vunpack.c.h.b16 %v1077
    %v2198 = vunpack.c.l.b16 %v1078
    %v2199 = vunpack.c.h.b16 %v1078
    %v2200 = vunpack.c.l.b16 %v1079
    %v2201 = vunpack.c.h.b16 %v1079
    %v2202 = vunpack.c.l.b16 %v1080
    %v2203 = vunpack.c.h.b16 %v1080
    %v2204 = vunpack.c.l.b16 %v1081
    %v2205 = vunpack.c.h.b16 %v1081
    %v2206 = vunpack.c.l.b16 %v1082
    %v2207 = vunpack.c.h.b16 %v1082
    %v2208 = vunpack.c.l.b16 %v1083
    %v2209 = vunpack.c.h.b16 %v1083
    %v2210 = vunpack.c.l.b16 %v1084
    %v2211 = vunpack.c.h.b16 %v1084
    %v2212 = vunpack.c.l.b16 %v1085
    %v2213 = vunpack.c.h.b16 %v1085
    %v2214 = vunpack.c.l.b16 %v1086
    %v2215 = vunpack.c.h.b16 %v1086
    %v2216 = vunpack.c.l.b16 %v1087
    %v2217 = vunpack.c.h.b16 %v1087
    %v2218 = vunpack.c.l.b16 %v1088
    %v2219 = vunpack.c.h.b16 %v1088
    %v2220 = vunpack.c.l.b16 %v1089
    %v2221 = vunpack.c.h.b16 %v1089
    %v2222 = vunpack.c.l.b16 %v1090
    %v2223 = vunpack.c.h.b16 %v1090
    %v2224 = vunpack.c.l.b16 %v1091
    %v2225 = vunpack.c.h.b16 %v1091
    %v2226 = vunpack.c.l.b16 %v1092
    %v2227 = vunpack.c.h.b16 %v1092
    %v2228 = vunpack.c.l.b16 %v1093
    %v2229 = vunpack.c.h.b16 %v1093
    %v2230 = vunpack.c.l.b16 %v1094
    %v2231 = vunpack.c.h.b16 %v1094
    %v2232 = vunpack.c.l.b16 %v1095
    %v2233 = vunpack.c.h.b16 %v1095
    %v2234 = vunpack.c.l.b16 %v1096
    %v2235 = vunpack.c.h.b16 %v1096
    %v2236 = vunpack.c.l.b16 %v1097
    %v2237 = vunpack.c.h.b16 %v1097
    %v2238 = vunpack.c.l.b16 %v1098
    %v2239 = vunpack.c.h.b16 %v1098
    %v2240 = vunpack.c.l.b16 %v1099
    %v2241 = vunpack.c.h.b16 %v1099
    %v2242 = vunpack.c.l.b16 %v1100
    %v2243 = vunpack.c.h.b16 %v1100
    %v2244 = vunpack.c.l.b16 %v1101
    %v2245 = vunpack.c.h.b16 %v1101
    %v2246 = vunpack.c.l.b16 %v1102
    %v2247 = vunpack.c.h.b16 %v1102
    %v2248 = vunpack.c.l.b16 %v1103
    %v2249 = vunpack.c.h.b16 %v1103
    %v2250 = vunpack.c.l.b16 %v1104
    %v2251 = vunpack.c.h.b16 %v1104
    %v2252 = vunpack.c.l.b16 %v1105
    %v2253 = vunpack.c.h.b16 %v1105
    %v2254 = vunpack.c.l.b16 %v1106
    %v2255 = vunpack.c.h.b16 %v1106
    %v2256 = vunpack.c.l.b16 %v1107
    %v2257 = vunpack.c.h.b16 %v1107
    %v2258 = vunpack.c.l.b16 %v1108
    %v2259 = vunpack.c.h.b16 %v1108
    %v2260 = vunpack.c.l.b16 %v1109
    %v2261 = vunpack.c.h.b16 %v1109
    %v2262 = vunpack.c.l.b16 %v1110
    %v2263 = vunpack.c.h.b16 %v1110
    %v2264 = vunpack.c.l.b16 %v1111
    %v2265 = vunpack.c.h.b16 %v1111
    %v2266 = vunpack.c.l.b16 %v1112
    %v2267 = vunpack.c.h.b16 %v1112
    %v2268 = vunpack.c.l.b16 %v1113
    %v2269 = vunpack.c.h.b16 %v1113
    %v2270 = vunpack.c.l.b16 %v1114
    %v2271 = vunpack.c.h.b16 %v1114
    %v2272 = vunpack.c.l.b16 %v1115
    %v2273 = vunpack.c.h.b16 %v1115
    %v2274 = vunpack.c.l.b16 %v1116
    %v2275 = vunpack.c.h.b16 %v1116
    %v2276 = vunpack.c.l.b16 %v1117
    %v2277 = vunpack.c.h.b16 %v1117
    %v2278 = vunpack.c.l.b16 %v1118
    %v2279 = vunpack.c.h.b16 %v1118
    %v2280 = vunpack.c.l.b16 %v1119
    %v2281 = vunpack.c.h.b16 %v1119
    %v2282 = vunpack.c.l.b16 %v1120
    %v2283 = vunpack.c.h.b16 %v1120
    %v2284 = vunpack.c.l.b16 %v1121
    %v2285 = vunpack.c.h.b16 %v1121
    %v2286 = vunpack.c.l.b16 %v1122
    %v2287 = vunpack.c.h.b16 %v1122
    %v2288 = vunpack.c.l.b16 %v1123
    %v2289 = vunpack.c.h.b16 %v1123
    %v2290 = vunpack.c.l.b16 %v1124
    %v2291 = vunpack.c.h.b16 %v1124
    %v2292 = vunpack.c.l.b16 %v1125
    %v2293 = vunpack.c.h.b16 %v1125
    %v2294 = vunpack.c.l.b16 %v1126
    %v2295 = vunpack.c.h.b16 %v1126
    %v2296 = vunpack.c.l.b16 %v1127
    %v2297 = vunpack.c.h.b16 %v1127
    %v2298 = vunpack.c.l.b16 %v1128
    %v2299 = vunpack.c.h.b16 %v1128
    %v2300 = vunpack.c.l.b16 %v1129
    %v2301 = vunpack.c.h.b16 %v1129
    %v2302 = vunpack.c.l.b16 %v1130
    %v2303 = vunpack.c.h.b16 %v1130
    %v2304 = vunpack.c.l.b16 %v1131
    %v2305 = vunpack.c.h.b16 %v1131
    %v2306 = vunpack.c.l.b16 %v1132
    %v2307 = vunpack.c.h.b16 %v1132
    %v2308 = vunpack.c.l.b16 %v1133
    %v2309 = vunpack.c.h.b16 %v1133
    %v2310 = vunpack.c.l.b16 %v1134
    %v2311 = vunpack.c.h.b16 %v1134
    %v2312 = vunpack.c.l.b16 %v1135
    %v2313 = vunpack.c.h.b16 %v1135
    %v2314 = vunpack.c.l.b16 %v1136
    %v2315 = vunpack.c.h.b16 %v1136
    %v2316 = vunpack.c.l.b16 %v1137
    %v2317 = vunpack.c.h.b16 %v1137
    %v2318 = vunpack.c.l.b16 %v1138
    %v2319 = vunpack.c.h.b16 %v1138
    %v2320 = vunpack.c.l.b16 %v1139
    %v2321 = vunpack.c.h.b16 %v1139
    %v2322 = vunpack.c.l.b16 %v1140
    %v2323 = vunpack.c.h.b16 %v1140
    %v2324 = vunpack.c.l.b16 %v1141
    %v2325 = vunpack.c.h.b16 %v1141
    %v2326 = vunpack.c.l.b16 %v1142
    %v2327 = vunpack.c.h.b16 %v1142
    %v2328 = vunpack.c.l.b16 %v1143
    %v2329 = vunpack.c.h.b16 %v1143
    %v2330 = vunpack.c.l.b16 %v1144
    %v2331 = vunpack.c.h.b16 %v1144
    %v2332 = vunpack.c.l.b16 %v1145
    %v2333 = vunpack.c.h.b16 %v1145
    %v2334 = vunpack.c.l.b16 %v1146
    %v2335 = vunpack.c.h.b16 %v1146
    %v2336 = vunpack.c.l.b16 %v1147
    %v2337 = vunpack.c.h.b16 %v1147
    %v2338 = vunpack.c.l.b16 %v1148
    %v2339 = vunpack.c.h.b16 %v1148
    %v2340 = vunpack.c.l.b16 %v1149
    %v2341 = vunpack.c.h.b16 %v1149
    %v2342 = vunpack.c.l.b16 %v1150
    %v2343 = vunpack.c.h.b16 %v1150
    %v2344 = vunpack.c.l.b16 %v1151
    %v2345 = vunpack.c.h.b16 %v1151
    %v2346 = vunpack.c.l.b16 %v1152
    %v2347 = vunpack.c.h.b16 %v1152
    %v2348 = vunpack.c.l.b16 %v1153
    %v2349 = vunpack.c.h.b16 %v1153
    %v2350 = vunpack.c.l.b16 %v1154
    %v2351 = vunpack.c.h.b16 %v1154
    %v2352 = vunpack.c.l.b16 %v1155
    %v2353 = vunpack.c.h.b16 %v1155
    %v2354 = vunpack.c.l.b16 %v1156
    %v2355 = vunpack.c.h.b16 %v1156
    %v2356 = vunpack.c.l.b16 %v1157
    %v2357 = vunpack.c.h.b16 %v1157
    %v2358 = vunpack.c.l.b16 %v1158
    %v2359 = vunpack.c.h.b16 %v1158
    %v2360 = vunpack.c.l.b16 %v1159
    %v2361 = vunpack.c.h.b16 %v1159
    %v2362 = vunpack.c.l.b16 %v1160
    %v2363 = vunpack.c.h.b16 %v1160
    %v2364 = vunpack.c.l.b16 %v1161
    %v2365 = vunpack.c.h.b16 %v1161
    %v2366 = vunpack.c.l.b16 %v1162
    %v2367 = vunpack.c.h.b16 %v1162
    %v2368 = vunpack.c.l.b16 %v1163
    %v2369 = vunpack.c.h.b16 %v1163
    %v2370 = vunpack.c.l.b16 %v1164
    %v2371 = vunpack.c.h.b16 %v1164
    %v2372 = vunpack.c.l.b16 %v1165
    %v2373 = vunpack.c.h.b16 %v1165
    %v2374 = vunpack.c.l.b16 %v1166
    %v2375 = vunpack.c.h.b16 %v1166
    %v2376 = vunpack.c.l.b16 %v1167
    %v2377 = vunpack.c.h.b16 %v1167
    %v2378 = vunpack.c.l.b16 %v1168
    %v2379 = vunpack.c.h.b16 %v1168
    %v2380 = vunpack.c.l.b16 %v1169
    %v2381 = vunpack.c.h.b16 %v1169
    %v2382 = vpack.c.b16 %v1584, %v1582
    %v2383 = vpack.c.b16 %v1585, %v1583
    %v2384 = vpack.c.b16 %v1588, %v1586
    %v2385 = vpack.c.b16 %v1589, %v1587
    %v2386 = vpack.c.b16 %v1592, %v1590
    %v2387 = vpack.c.b16 %v1593, %v1591
    %v2388 = vpack.c.b16 %v1596, %v1594
    %v2389 = vpack.c.b16 %v1597, %v1595
    %v2390 = vpack.c.b16 %v1600, %v1598
    %v2391 = vpack.c.b16 %v1601, %v1599
    %v2392 = vpack.c.b16 %v1604, %v1602
    %v2393 = vpack.c.b16 %v1605, %v1603
    %v2394 = vpack.c.b16 %v1608, %v1606
    %v2395 = vpack.c.b16 %v1609, %v1607
    %v2396 = vpack.c.b16 %v1612, %v1610
    %v2397 = vpack.c.b16 %v1613, %v1611
    %v2398 = vpack.c.b16 %v1616, %v1614
    %v2399 = vpack.c.b16 %v1617, %v1615
    %v2400 = vpack.c.b16 %v1620, %v1618
    %v2401 = vpack.c.b16 %v1621, %v1619
    %v2402 = vpack.c.b16 %v1624, %v1622
    %v2403 = vpack.c.b16 %v1625, %v1623
    %v2404 = vpack.c.b16 %v1628, %v1626
    %v2405 = vpack.c.b16 %v1629, %v1627
    %v2406 = vpack.c.b16 %v1632, %v1630
    %v2407 = vpack.c.b16 %v1633, %v1631
    %v2408 = vpack.c.b16 %v1636, %v1634
    %v2409 = vpack.c.b16 %v1637, %v1635
    %v2410 = vpack.c.b16 %v1640, %v1638
    %v2411 = vpack.c.b16 %v1641, %v1639
    %v2412 = vpack.c.b16 %v1644, %v1642
    %v2413 = vpack.c.b16 %v1645, %v1643
    %v2414 = vpack.c.b16 %v1648, %v1646
    %v2415 = vpack.c.b16 %v1649, %v1647
    %v2416 = vpack.c.b16 %v1652, %v1650
    %v2417 = vpack.c.b16 %v1653, %v1651
    %v2418 = vpack.c.b16 %v1656, %v1654
    %v2419 = vpack.c.b16 %v1657, %v1655
    %v2420 = vpack.c.b16 %v1660, %v1658
    %v2421 = vpack.c.b16 %v1661, %v1659
    %v2422 = vpack.c.b16 %v1664, %v1662
    %v2423 = vpack.c.b16 %v1665, %v1663
    %v2424 = vpack.c.b16 %v1668, %v1666
    %v2425 = vpack.c.b16 %v1669, %v1667
    %v2426 = vpack.c.b16 %v1672, %v1670
    %v2427 = vpack.c.b16 %v1673, %v1671
    %v2428 = vpack.c.b16 %v1676, %v1674
    %v2429 = vpack.c.b16 %v1677, %v1675
    %v2430 = vpack.c.b16 %v1680, %v1678
    %v2431 = vpack.c.b16 %v1681, %v1679
    %v2432 = vpack.c.b16 %v1684, %v1682
    %v2433 = vpack.c.b16 %v1685, %v1683
    %v2434 = vpack.c.b16 %v1688, %v1686
    %v2435 = vpack.c.b16 %v1689, %v1687
    %v2436 = vpack.c.b16 %v1692, %v1690
    %v2437 = vpack.c.b16 %v1693, %v1691
    %v2438 = vpack.c.b16 %v1696, %v1694
    %v2439 = vpack.c.b16 %v1697, %v1695
    %v2440 = vpack.c.b16 %v1700, %v1698
    %v2441 = vpack.c.b16 %v1701, %v1699
    %v2442 = vpack.c.b16 %v1704, %v1702
    %v2443 = vpack.c.b16 %v1705, %v1703
    %v2444 = vpack.c.b16 %v1708, %v1706
    %v2445 = vpack.c.b16 %v1709, %v1707
    %v2446 = vpack.c.b16 %v1712, %v1710
    %v2447 = vpack.c.b16 %v1713, %v1711
    %v2448 = vpack.c.b16 %v1716, %v1714
    %v2449 = vpack.c.b16 %v1717, %v1715
    %v2450 = vpack.c.b16 %v1720, %v1718
    %v2451 = vpack.c.b16 %v1721, %v1719
    %v2452 = vpack.c.b16 %v1724, %v1722
    %v2453 = vpack.c.b16 %v1725, %v1723
    %v2454 = vpack.c.b16 %v1728, %v1726
    %v2455 = vpack.c.b16 %v1729, %v1727
    %v2456 = vpack.c.b16 %v1732, %v1730
    %v2457 = vpack.c.b16 %v1733, %v1731
    %v2458 = vpack.c.b16 %v1736, %v1734
    %v2459 = vpack.c.b16 %v1737, %v1735
    %v2460 = vpack.c.b16 %v1740, %v1738
    %v2461 = vpack.c.b16 %v1741, %v1739
    %v2462 = vpack.c.b16 %v1744, %v1742
    %v2463 = vpack.c.b16 %v1745, %v1743
    %v2464 = vpack.c.b16 %v1748, %v1746
    %v2465 = vpack.c.b16 %v1749, %v1747
    %v2466 = vpack.c.b16 %v1752, %v1750
    %v2467 = vpack.c.b16 %v1753, %v1751
    %v2468 = vpack.c.b16 %v1756, %v1754
    %v2469 = vpack.c.b16 %v1757, %v1755
    %v2470 = vpack.c.b16 %v1760, %v1758
    %v2471 = vpack.c.b16 %v1761, %v1759
    %v2472 = vpack.c.b16 %v1764, %v1762
    %v2473 = vpack.c.b16 %v1765, %v1763
    %v2474 = vpack.c.b16 %v1768, %v1766
    %v2475 = vpack.c.b16 %v1769, %v1767
    %v2476 = vpack.c.b16 %v1772, %v1770
    %v2477 = vpack.c.b16 %v1773, %v1771
    %v2478 = vpack.c.b16 %v1776, %v1774
    %v2479 = vpack.c.b16 %v1777, %v1775
    %v2480 = vpack.c.b16 %v1780, %v1778
    %v2481 = vpack.c.b16 %v1781, %v1779
    %v2482 = vpack.c.b16 %v1784, %v1782
    %v2483 = vpack.c.b16 %v1785, %v1783
    %v2484 = vpack.c.b16 %v1788, %v1786
    %v2485 = vpack.c.b16 %v1789, %v1787
    %v2486 = vpack.c.b16 %v1792, %v1790
    %v2487 = vpack.c.b16 %v1793, %v1791
    %v2488 = vpack.c.b16 %v1796, %v1794
    %v2489 = vpack.c.b16 %v1797, %v1795
    %v2490 = vpack.c.b16 %v1800, %v1798
    %v2491 = vpack.c.b16 %v1801, %v1799
    %v2492 = vpack.c.b16 %v1804, %v1802
    %v2493 = vpack.c.b16 %v1805, %v1803
    %v2494 = vpack.c.b16 %v1808, %v1806
    %v2495 = vpack.c.b16 %v1809, %v1807
    %v2496 = vpack.c.b16 %v1812, %v1810
    %v2497 = vpack.c.b16 %v1813, %v1811
    %v2498 = vpack.c.b16 %v1816, %v1814
    %v2499 = vpack.c.b16 %v1817, %v1815
    %v2500 = vpack.c.b16 %v1820, %v1818
    %v2501 = vpack.c.b16 %v1821, %v1819
    %v2502 = vpack.c.b16 %v1824, %v1822
    %v2503 = vpack.c.b16 %v1825, %v1823
    %v2504 = vpack.c.b16 %v1828, %v1826
    %v2505 = vpack.c.b16 %v1829, %v1827
    %v2506 = vpack.c.b16 %v1832, %v1830
    %v2507 = vpack.c.b16 %v1833, %v1831
    %v2508 = vpack.c.b16 %v1836, %v1834
    %v2509 = vpack.c.b16 %v1837, %v1835
    %v2510 = vpack.c.b16 %v1840, %v1838
    %v2511 = vpack.c.b16 %v1841, %v1839
    %v2512 = vpack.c.b16 %v1844, %v1842
    %v2513 = vpack.c.b16 %v1845, %v1843
    %v2514 = vpack.c.b16 %v1848, %v1846
    %v2515 = vpack.c.b16 %v1849, %v1847
    %v2516 = vpack.c.b16 %v1852, %v1850
    %v2517 = vpack.c.b16 %v1853, %v1851
    %v2518 = vpack.c.b16 %v1856, %v1854
    %v2519 = vpack.c.b16 %v1857, %v1855
    %v2520 = vpack.c.b16 %v1860, %v1858
    %v2521 = vpack.c.b16 %v1861, %v1859
    %v2522 = vpack.c.b16 %v1864, %v1862
    %v2523 = vpack.c.b16 %v1865, %v1863
    %v2524 = vpack.c.b16 %v1868, %v1866
    %v2525 = vpack.c.b16 %v1869, %v1867
    %v2526 = vpack.c.b16 %v1872, %v1870
    %v2527 = vpack.c.b16 %v1873, %v1871
    %v2528 = vpack.c.b16 %v1876, %v1874
    %v2529 = vpack.c.b16 %v1877, %v1875
    %v2530 = vpack.c.b16 %v1880, %v1878
    %v2531 = vpack.c.b16 %v1881, %v1879
    %v2532 = vpack.c.b16 %v1884, %v1882
    %v2533 = vpack.c.b16 %v1885, %v1883
    %v2534 = vpack.c.b16 %v1888, %v1886
    %v2535 = vpack.c.b16 %v1889, %v1887
    %v2536 = vpack.c.b16 %v1892, %v1890
    %v2537 = vpack.c.b16 %v1893, %v1891
    %v2538 = vpack.c.b16 %v1896, %v1894
    %v2539 = vpack.c.b16 %v1897, %v1895
    %v2540 = vpack.c.b16 %v1900, %v1898
    %v2541 = vpack.c.b16 %v1901, %v1899
    %v2542 = vpack.c.b16 %v1904, %v1902
    %v2543 = vpack.c.b16 %v1905, %v1903
    %v2544 = vpack.c.b16 %v1908, %v1906
    %v2545 = vpack.c.b16 %v1909, %v1907
    %v2546 = vpack.c.b16 %v1912, %v1910
    %v2547 = vpack.c.b16 %v1913, %v1911
    %v2548 = vpack.c.b16 %v1916, %v1914
    %v2549 = vpack.c.b16 %v1917, %v1915
    %v2550 = vpack.c.b16 %v1920, %v1918
    %v2551 = vpack.c.b16 %v1921, %v1919
    %v2552 = vpack.c.b16 %v1924, %v1922
    %v2553 = vpack.c.b16 %v1925, %v1923
    %v2554 = vpack.c.b16 %v1928, %v1926
    %v2555 = vpack.c.b16 %v1929, %v1927
    %v2556 = vpack.c.b16 %v1932, %v1930
    %v2557 = vpack.c.b16 %v1933, %v1931
    %v2558 = vpack.c.b16 %v1936, %v1934
    %v2559 = vpack.c.b16 %v1937, %v1935
    %v2560 = vpack.c.b16 %v1940, %v1938
    %v2561 = vpack.c.b16 %v1941, %v1939
    %v2562 = vpack.c.b16 %v1944, %v1942
    %v2563 = vpack.c.b16 %v1945, %v1943
    %v2564 = vpack.c.b16 %v1948, %v1946
    %v2565 = vpack.c.b16 %v1949, %v1947
    %v2566 = vpack.c.b16 %v1952, %v1950
    %v2567 = vpack.c.b16 %v1953, %v1951
    %v2568 = vpack.c.b16 %v1956, %v1954
    %v2569 = vpack.c.b16 %v1957, %v1955
    %v2570 = vpack.c.b16 %v1960, %v1958
    %v2571 = vpack.c.b16 %v1961, %v1959
    %v2572 = vpack.c.b16 %v1964, %v1962
    %v2573 = vpack.c.b16 %v1965, %v1963
    %v2574 = vpack.c.b16 %v1968, %v1966
    %v2575 = vpack.c.b16 %v1969, %v1967
    %v2576 = vpack.c.b16 %v1972, %v1970
    %v2577 = vpack.c.b16 %v1973, %v1971
    %v2578 = vpack.c.b16 %v1976, %v1974
    %v2579 = vpack.c.b16 %v1977, %v1975
    %v2580 = vpack.c.b16 %v1980, %v1978
    %v2581 = vpack.c.b16 %v1981, %v1979
    %v2582 = vpack.c.b16 %v1984, %v1982
    %v2583 = vpack.c.b16 %v1985, %v1983
    %v2584 = vpack.c.b16 %v1988, %v1986
    %v2585 = vpack.c.b16 %v1989, %v1987
    %v2586 = vpack.c.b16 %v1992, %v1990
    %v2587 = vpack.c.b16 %v1993, %v1991
    %v2588 = vpack.c.b16 %v1996, %v1994
    %v2589 = vpack.c.b16 %v1997, %v1995
    %v2590 = vpack.c.b16 %v2000, %v1998
    %v2591 = vpack.c.b16 %v2001, %v1999
    %v2592 = vpack.c.b16 %v2004, %v2002
    %v2593 = vpack.c.b16 %v2005, %v2003
    %v2594 = vpack.c.b16 %v2008, %v2006
    %v2595 = vpack.c.b16 %v2009, %v2007
    %v2596 = vpack.c.b16 %v2012, %v2010
    %v2597 = vpack.c.b16 %v2013, %v2011
    %v2598 = vpack.c.b16 %v2016, %v2014
    %v2599 = vpack.c.b16 %v2017, %v2015
    %v2600 = vpack.c.b16 %v2020, %v2018
    %v2601 = vpack.c.b16 %v2021, %v2019
    %v2602 = vpack.c.b16 %v2024, %v2022
    %v2603 = vpack.c.b16 %v2025, %v2023
    %v2604 = vpack.c.b16 %v2028, %v2026
    %v2605 = vpack.c.b16 %v2029, %v2027
    %v2606 = vpack.c.b16 %v2032, %v2030
    %v2607 = vpack.c.b16 %v2033, %v2031
    %v2608 = vpack.c.b16 %v2036, %v2034
    %v2609 = vpack.c.b16 %v2037, %v2035
    %v2610 = vpack.c.b16 %v2040, %v2038
    %v2611 = vpack.c.b16 %v2041, %v2039
    %v2612 = vpack.c.b16 %v2044, %v2042
    %v2613 = vpack.c.b16 %v2045, %v2043
    %v2614 = vpack.c.b16 %v2048, %v2046
    %v2615 = vpack.c.b16 %v2049, %v2047
    %v2616 = vpack.c.b16 %v2052, %v2050
    %v2617 = vpack.c.b16 %v2053, %v2051
    %v2618 = vpack.c.b16 %v2056, %v2054
    %v2619 = vpack.c.b16 %v2057, %v2055
    %v2620 = vpack.c.b16 %v2060, %v2058
    %v2621 = vpack.c.b16 %v2061, %v2059
    %v2622 = vpack.c.b16 %v2064, %v2062
    %v2623 = vpack.c.b16 %v2065, %v2063
    %v2624 = vpack.c.b16 %v2068, %v2066
    %v2625 = vpack.c.b16 %v2069, %v2067
    %v2626 = vpack.c.b16 %v2072, %v2070
    %v2627 = vpack.c.b16 %v2073, %v2071
    %v2628 = vpack.c.b16 %v2076, %v2074
    %v2629 = vpack.c.b16 %v2077, %v2075
    %v2630 = vpack.c.b16 %v2080, %v2078
    %v2631 = vpack.c.b16 %v2081, %v2079
    %v2632 = vpack.c.b16 %v2084, %v2082
    %v2633 = vpack.c.b16 %v2085, %v2083
    %v2634 = vpack.c.b16 %v2088, %v2086
    %v2635 = vpack.c.b16 %v2089, %v2087
    %v2636 = vpack.c.b16 %v2092, %v2090
    %v2637 = vpack.c.b16 %v2093, %v2091
    %v2638 = vpack.c.b16 %v2096, %v2094
    %v2639 = vpack.c.b16 %v2097, %v2095
    %v2640 = vpack.c.b16 %v2100, %v2098
    %v2641 = vpack.c.b16 %v2101, %v2099
    %v2642 = vpack.c.b16 %v2104, %v2102
    %v2643 = vpack.c.b16 %v2105, %v2103
    %v2644 = vpack.c.b16 %v2108, %v2106
    %v2645 = vpack.c.b16 %v2109, %v2107
    %v2646 = vpack.c.b16 %v2112, %v2110
    %v2647 = vpack.c.b16 %v2113, %v2111
    %v2648 = vpack.c.b16 %v2116, %v2114
    %v2649 = vpack.c.b16 %v2117, %v2115
    %v2650 = vpack.c.b16 %v2120, %v2118
    %v2651 = vpack.c.b16 %v2121, %v2119
    %v2652 = vpack.c.b16 %v2124, %v2122
    %v2653 = vpack.c.b16 %v2125, %v2123
    %v2654 = vpack.c.b16 %v2128, %v2126
    %v2655 = vpack.c.b16 %v2129, %v2127
    %v2656 = vpack.c.b16 %v2132, %v2130
    %v2657 = vpack.c.b16 %v2133, %v2131
    %v2658 = vpack.c.b16 %v2136, %v2134
    %v2659 = vpack.c.b16 %v2137, %v2135
    %v2660 = vpack.c.b16 %v2140, %v2138
    %v2661 = vpack.c.b16 %v2141, %v2139
    %v2662 = vpack.c.b16 %v2144, %v2142
    %v2663 = vpack.c.b16 %v2145, %v2143
    %v2664 = vpack.c.b16 %v2148, %v2146
    %v2665 = vpack.c.b16 %v2149, %v2147
    %v2666 = vpack.c.b16 %v2152, %v2150
    %v2667 = vpack.c.b16 %v2153, %v2151
    %v2668 = vpack.c.b16 %v2156, %v2154
    %v2669 = vpack.c.b16 %v2157, %v2155
    %v2670 = vpack.c.b16 %v2160, %v2158
    %v2671 = vpack.c.b16 %v2161, %v2159
    %v2672 = vpack.c.b16 %v2164, %v2162
    %v2673 = vpack.c.b16 %v2165, %v2163
    %v2674 = vpack.c.b16 %v2168, %v2166
    %v2675 = vpack.c.b16 %v2169, %v2167
    %v2676 = vpack.c.b16 %v2172, %v2170
    %v2677 = vpack.c.b16 %v2173, %v2171
    %v2678 = vpack.c.b16 %v2176, %v2174
    %v2679 = vpack.c.b16 %v2177, %v2175
    %v2680 = vpack.c.b16 %v2180, %v2178
    %v2681 = vpack.c.b16 %v2181, %v2179
    %v2682 = vpack.c.b16 %v2184, %v2182
    %v2683 = vpack.c.b16 %v2185, %v2183
    %v2684 = vpack.c.b16 %v2188, %v2186
    %v2685 = vpack.c.b16 %v2189, %v2187
    %v2686 = vpack.c.b16 %v2192, %v2190
    %v2687 = vpack.c.b16 %v2193, %v2191
    %v2688 = vpack.c.b16 %v2196, %v2194
    %v2689 = vpack.c.b16 %v2197, %v2195
    %v2690 = vpack.c.b16 %v2200, %v2198
    %v2691 = vpack.c.b16 %v2201, %v2199
    %v2692 = vpack.c.b16 %v2204, %v2202
    %v2693 = vpack.c.b16 %v2205, %v2203
    %v2694 = vpack.c.b16 %v2208, %v2206
    %v2695 = vpack.c.b16 %v2209, %v2207
    %v2696 = vpack.c.b16 %v2212, %v2210
    %v2697 = vpack.c.b16 %v2213, %v2211
    %v2698 = vpack.c.b16 %v2216, %v2214
    %v2699 = vpack.c.b16 %v2217, %v2215
    %v2700 = vpack.c.b16 %v2220, %v2218
    %v2701 = vpack.c.b16 %v2221, %v2219
    %v2702 = vpack.c.b16 %v2224, %v2222
    %v2703 = vpack.c.b16 %v2225, %v2223
    %v2704 = vpack.c.b16 %v2228, %v2226
    %v2705 = vpack.c.b16 %v2229, %v2227
    %v2706 = vpack.c.b16 %v2232, %v2230
    %v2707 = vpack.c.b16 %v2233, %v2231
    %v2708 = vpack.c.b16 %v2236, %v2234
    %v2709 = vpack.c.b16 %v2237, %v2235
    %v2710 = vpack.c.b16 %v2240, %v2238
    %v2711 = vpack.c.b16 %v2241, %v2239
    %v2712 = vpack.c.b16 %v2244, %v2242
    %v2713 = vpack.c.b16 %v2245, %v2243
    %v2714 = vpack.c.b16 %v2248, %v2246
    %v2715 = vpack.c.b16 %v2249, %v2247
    %v2716 = vpack.c.b16 %v2252, %v2250
    %v2717 = vpack.c.b16 %v2253, %v2251
    %v2718 = vpack.c.b16 %v2256, %v2254
    %v2719 = vpack.c.b16 %v2257, %v2255
    %v2720 = vpack.c.b16 %v2260, %v2258
    %v2721 = vpack.c.b16 %v2261, %v2259
    %v2722 = vpack.c.b16 %v2264, %v2262
    %v2723 = vpack.c.b16 %v2265, %v2263
    %v2724 = vpack.c.b16 %v2268, %v2266
    %v2725 = vpack.c.b16 %v2269, %v2267
    %v2726 = vpack.c.b16 %v2272, %v2270
    %v2727 = vpack.c.b16 %v2273, %v2271
    %v2728 = vpack.c.b16 %v2276, %v2274
    %v2729 = vpack.c.b16 %v2277, %v2275
    %v2730 = vpack.c.b16 %v2280, %v2278
    %v2731 = vpack.c.b16 %v2281, %v2279
    %v2732 = vpack.c.b16 %v2284, %v2282
    %v2733 = vpack.c.b16 %v2285, %v2283
    %v2734 = vpack.c.b16 %v2288, %v2286
    %v2735 = vpack.c.b16 %v2289, %v2287
    %v2736 = vpack.c.b16 %v2292, %v2290
    %v2737 = vpack.c.b16 %v2293, %v2291
    %v2738 = vpack.c.b16 %v2296, %v2294
    %v2739 = vpack.c.b16 %v2297, %v2295
    %v2740 = vpack.c.b16 %v2300, %v2298
    %v2741 = vpack.c.b16 %v2301, %v2299
    %v2742 = vpack.c.b16 %v2304, %v2302
    %v2743 = vpack.c.b16 %v2305, %v2303
    %v2744 = vpack.c.b16 %v2308, %v2306
    %v2745 = vpack.c.b16 %v2309, %v2307
    %v2746 = vpack.c.b16 %v2312, %v2310
    %v2747 = vpack.c.b16 %v2313, %v2311
    %v2748 = vpack.c.b16 %v2316, %v2314
    %v2749 = vpack.c.b16 %v2317, %v2315
    %v2750 = vpack.c.b16 %v2320, %v2318
    %v2751 = vpack.c.b16 %v2321, %v2319
    %v2752 = vpack.c.b16 %v2324, %v2322
    %v2753 = vpack.c.b16 %v2325, %v2323
    %v2754 = vpack.c.b16 %v2328, %v2326
    %v2755 = vpack.c.b16 %v2329, %v2327
    %v2756 = vpack.c.b16 %v2332, %v2330
    %v2757 = vpack.c.b16 %v2333, %v2331
    %v2758 = vpack.c.b16 %v2336, %v2334
    %v2759 = vpack.c.b16 %v2337, %v2335
    %v2760 = vpack.c.b16 %v2340, %v2338
    %v2761 = vpack.c.b16 %v2341, %v2339
    %v2762 = vpack.c.b16 %v2344, %v2342
    %v2763 = vpack.c.b16 %v2345, %v2343
    %v2764 = vpack.c.b16 %v2348, %v2346
    %v2765 = vpack.c.b16 %v2349, %v2347
    %v2766 = vpack.c.b16 %v2352, %v2350
    %v2767 = vpack.c.b16 %v2353, %v2351
    %v2768 = vpack.c.b16 %v2356, %v2354
    %v2769 = vpack.c.b16 %v2357, %v2355
    %v2770 = vpack.c.b16 %v2360, %v2358
    %v2771 = vpack.c.b16 %v2361, %v2359
    %v2772 = vpack.c.b16 %v2364, %v2362
    %v2773 = vpack.c.b16 %v2365, %v2363
    %v2774 = vpack.c.b16 %v2368, %v2366
    %v2775 = vpack.c.b16 %v2369, %v2367
    %v2776 = vpack.c.b16 %v2372, %v2370
    %v2777 = vpack.c.b16 %v2373, %v2371
    %v2778 = vpack.c.b16 %v2376, %v2374
    %v2779 = vpack.c.b16 %v2377, %v2375
    %v2780 = vpack.c.b16 %v2380, %v2378
    %v2781 = vpack.c.b16 %v2381, %v2379
    %3182 = vmatprep.subr.bf16.mxu0 %v2383
    %3183 = vmatpush1.bf16.msra.mxu0 %v2382
    %3184 = vmatprep.subr.bf16.mxu0 %v2385
    %3185 = vmatpush1.bf16.msra.mxu0 %v2384
    %3186 = vmatprep.subr.bf16.mxu0 %v2387
    %3187 = vmatpush1.bf16.msra.mxu0 %v2386
    %3188 = vmatprep.subr.bf16.mxu0 %v2389
    %3189 = vmatpush1.bf16.msra.mxu0 %v2388
    %3190 = vmatprep.subr.bf16.mxu0 %v2391
    %3191 = vmatpush1.bf16.msra.mxu0 %v2390
    %3192 = vmatprep.subr.bf16.mxu0 %v2393
    %3193 = vmatpush1.bf16.msra.mxu0 %v2392
    %3194 = vmatprep.subr.bf16.mxu0 %v2395
    %3195 = vmatpush1.bf16.msra.mxu0 %v2394
    %3196 = vmatprep.subr.bf16.mxu0 %v2397
    %3197 = vmatpush1.bf16.msra.mxu0 %v2396
    %3198 = vmatprep.subr.bf16.mxu0 %v2399
    %3199 = vmatpush1.bf16.msra.mxu0 %v2398
    %3200 = vmatprep.subr.bf16.mxu0 %v2401
    %3201 = vmatpush1.bf16.msra.mxu0 %v2400
    %3202 = vmatprep.subr.bf16.mxu0 %v2403
    %3203 = vmatpush1.bf16.msra.mxu0 %v2402
    %3204 = vmatprep.subr.bf16.mxu0 %v2405
    %3205 = vmatpush1.bf16.msra.mxu0 %v2404
    %3206 = vmatprep.subr.bf16.mxu0 %v2407
    %3207 = vmatpush1.bf16.msra.mxu0 %v2406
    %3208 = vmatprep.subr.bf16.mxu0 %v2409
    %3209 = vmatpush1.bf16.msra.mxu0 %v2408
    %3210 = vmatprep.subr.bf16.mxu0 %v2411
    %3211 = vmatpush1.bf16.msra.mxu0 %v2410
    %3212 = vmatprep.subr.bf16.mxu0 %v2413
    %3213 = vmatpush1.bf16.msra.mxu0 %v2412
    %3214 = vmatprep.mubr.bf16.mxu0 %v746
    %3215 = vmatmul.mubr.bf16.gmra.mrb[0].mxu0 %v745
    %v3216 = vpop.f32.mrb[0].mxu0
    %v3217 = vadd.f32 %v1175, %v3216
    %v3218 = vpop.f32.mrb[0].mxu0
    %v3219 = vadd.f32 %v1179, %v3218
    %v3220 = vpop.f32.mrb[0].mxu0
    %v3221 = vadd.f32 %v1175, %v3220
    %v3222 = vpop.f32.mrb[0].mxu0
    %v3223 = vadd.f32 %v1179, %v3222
    %3224 = vdwg.mxu0
    %3225 = vmatprep.subr.bf16.mxu0 %v2415
    %3226 = vmatpush1.bf16.msra.mxu0 %v2414
    %3227 = vmatprep.subr.bf16.mxu0 %v2417
    %3228 = vmatpush1.bf16.msra.mxu0 %v2416
    %3229 = vmatprep.subr.bf16.mxu0 %v2419
    %3230 = vmatpush1.bf16.msra.mxu0 %v2418
    %3231 = vmatprep.subr.bf16.mxu0 %v2421
    %3232 = vmatpush1.bf16.msra.mxu0 %v2420
    %3233 = vmatprep.subr.bf16.mxu0 %v2423
    %3234 = vmatpush1.bf16.msra.mxu0 %v2422
    %3235 = vmatprep.subr.bf16.mxu0 %v2425
    %3236 = vmatpush1.bf16.msra.mxu0 %v2424
    %3237 = vmatprep.subr.bf16.mxu0 %v2427
    %3238 = vmatpush1.bf16.msra.mxu0 %v2426
    %3239 = vmatprep.subr.bf16.mxu0 %v2429
    %3240 = vmatpush1.bf16.msra.mxu0 %v2428
    %3241 = vmatprep.subr.bf16.mxu0 %v2431
    %3242 = vmatpush1.bf16.msra.mxu0 %v2430
    %3243 = vmatprep.subr.bf16.mxu0 %v2433
    %3244 = vmatpush1.bf16.msra.mxu0 %v2432
    %3245 = vmatprep.subr.bf16.mxu0 %v2435
    %3246 = vmatpush1.bf16.msra.mxu0 %v2434
    %3247 = vmatprep.subr.bf16.mxu0 %v2437
    %3248 = vmatpush1.bf16.msra.mxu0 %v2436
    %3249 = vmatprep.subr.bf16.mxu0 %v2439
    %3250 = vmatpush1.bf16.msra.mxu0 %v2438
    %3251 = vmatprep.subr.bf16.mxu0 %v2441
    %3252 = vmatpush1.bf16.msra.mxu0 %v2440
    %3253 = vmatprep.subr.bf16.mxu0 %v2443
    %3254 = vmatpush1.bf16.msra.mxu0 %v2442
    %3255 = vmatprep.subr.bf16.mxu0 %v2445
    %3256 = vmatpush1.bf16.msra.mxu0 %v2444
    %3257 = vmatprep.mubr.bf16.mxu0 %v748
    %3258 = vmatmul.mubr.bf16.gmra.mrb[0].mxu0 %v747
    %v3259 = vpop.f32.mrb[0].mxu0
    %v3260 = vadd.f32 %v3217, %v3259
    %v3261 = vpop.f32.mrb[0].mxu0
    %v3262 = vadd.f32 %v3219, %v3261
    %v3263 = vpop.f32.mrb[0].mxu0
    %v3264 = vadd.f32 %v3221, %v3263
    %v3265 = vpop.f32.mrb[0].mxu0
    %v3266 = vadd.f32 %v3223, %v3265
    %3267 = vdwg.mxu0
    %3268 = vmatprep.subr.bf16.mxu0 %v2447
    %3269 = vmatpush1.bf16.msra.mxu0 %v2446
    %3270 = vmatprep.subr.bf16.mxu0 %v2449
    %3271 = vmatpush1.bf16.msra.mxu0 %v2448
    %3272 = vmatprep.subr.bf16.mxu0 %v2451
    %3273 = vmatpush1.bf16.msra.mxu0 %v2450
    %3274 = vmatprep.subr.bf16.mxu0 %v2453
    %3275 = vmatpush1.bf16.msra.mxu0 %v2452
    %3276 = vmatprep.subr.bf16.mxu0 %v2455
    %3277 = vmatpush1.bf16.msra.mxu0 %v2454
    %3278 = vmatprep.subr.bf16.mxu0 %v2457
    %3279 = vmatpush1.bf16.msra.mxu0 %v2456
    %3280 = vmatprep.subr.bf16.mxu0 %v2459
    %3281 = vmatpush1.bf16.msra.mxu0 %v2458
    %3282 = vmatprep.subr.bf16.mxu0 %v2461
    %3283 = vmatpush1.bf16.msra.mxu0 %v2460
    %3284 = vmatprep.subr.bf16.mxu0 %v2463
    %3285 = vmatpush1.bf16.msra.mxu0 %v2462
    %3286 = vmatprep.subr.bf16.mxu0 %v2465
    %3287 = vmatpush1.bf16.msra.mxu0 %v2464
    %3288 = vmatprep.subr.bf16.mxu0 %v2467
    %3289 = vmatpush1.bf16.msra.mxu0 %v2466
    %3290 = vmatprep.subr.bf16.mxu0 %v2469
    %3291 = vmatpush1.bf16.msra.mxu0 %v2468
    %3292 = vmatprep.subr.bf16.mxu0 %v2471
    %3293 = vmatpush1.bf16.msra.mxu0 %v2470
    %3294 = vmatprep.subr.bf16.mxu0 %v2473
    %3295 = vmatpush1.bf16.msra.mxu0 %v2472
    %3296 = vmatprep.subr.bf16.mxu0 %v2475
    %3297 = vmatpush1.bf16.msra.mxu0 %v2474
    %3298 = vmatprep.subr.bf16.mxu0 %v2477
    %3299 = vmatpush1.bf16.msra.mxu0 %v2476
    %3300 = vmatprep.mubr.bf16.mxu0 %v750
    %3301 = vmatmul.mubr.bf16.gmra.mrb[0].mxu0 %v749
    %v3302 = vpop.f32.mrb[0].mxu0
    %v3303 = vadd.f32 %v3260, %v3302
    %v3304 = vpop.f32.mrb[0].mxu0
    %v3305 = vadd.f32 %v3262, %v3304
    %v3306 = vpop.f32.mrb[0].mxu0
    %v3307 = vadd.f32 %v3264, %v3306
    %v3308 = vpop.f32.mrb[0].mxu0
    %v3309 = vadd.f32 %v3266, %v3308
    %3310 = vdwg.mxu0
    %3311 = vmatprep.subr.bf16.mxu0 %v2479
    %3312 = vmatpush1.bf16.msra.mxu0 %v2478
    %3313 = vmatprep.subr.bf16.mxu0 %v2481
    %3314 = vmatpush1.bf16.msra.mxu0 %v2480
    %3315 = vmatprep.subr.bf16.mxu0 %v2483
    %3316 = vmatpush1.bf16.msra.mxu0 %v2482
    %3317 = vmatprep.subr.bf16.mxu0 %v2485
    %3318 = vmatpush1.bf16.msra.mxu0 %v2484
    %3319 = vmatprep.subr.bf16.mxu0 %v2487
    %3320 = vmatpush1.bf16.msra.mxu0 %v2486
    %3321 = vmatprep.subr.bf16.mxu0 %v2489
    %3322 = vmatpush1.bf16.msra.mxu0 %v2488
    %3323 = vmatprep.subr.bf16.mxu0 %v2491
    %3324 = vmatpush1.bf16.msra.mxu0 %v2490
    %3325 = vmatprep.subr.bf16.mxu0 %v2493
    %3326 = vmatpush1.bf16.msra.mxu0 %v2492
    %3327 = vmatprep.subr.bf16.mxu0 %v2495
    %3328 = vmatpush1.bf16.msra.mxu0 %v2494
    %3329 = vmatprep.subr.bf16.mxu0 %v2497
    %3330 = vmatpush1.bf16.msra.mxu0 %v2496
    %3331 = vmatprep.subr.bf16.mxu0 %v2499
    %3332 = vmatpush1.bf16.msra.mxu0 %v2498
    %3333 = vmatprep.subr.bf16.mxu0 %v2501
    %3334 = vmatpush1.bf16.msra.mxu0 %v2500
    %3335 = vmatprep.subr.bf16.mxu0 %v2503
    %3336 = vmatpush1.bf16.msra.mxu0 %v2502
    %3337 = vmatprep.subr.bf16.mxu0 %v2505
    %3338 = vmatpush1.bf16.msra.mxu0 %v2504
    %3339 = vmatprep.subr.bf16.mxu0 %v2507
    %3340 = vmatpush1.bf16.msra.mxu0 %v2506
    %3341 = vmatprep.subr.bf16.mxu0 %v2509
    %3342 = vmatpush1.bf16.msra.mxu0 %v2508
    %3343 = vmatprep.mubr.bf16.mxu0 %v752
    %3344 = vmatmul.mubr.bf16.gmra.mrb[0].mxu0 %v751
    %v3345 = vpop.f32.mrb[0].mxu0
    %v3346 = vadd.f32 %v3303, %v3345
    %v3347 = vpop.f32.mrb[0].mxu0
    %v3348 = vadd.f32 %v3305, %v3347
    %v3349 = vpop.f32.mrb[0].mxu0
    %v3350 = vadd.f32 %v3307, %v3349
    %v3351 = vpop.f32.mrb[0].mxu0
    %v3352 = vadd.f32 %v3309, %v3351
    %3353 = vdwg.mxu0
    %3354 = vmatprep.subr.bf16.mxu0 %v2511
    %3355 = vmatpush1.bf16.msra.mxu0 %v2510
    %3356 = vmatprep.subr.bf16.mxu0 %v2513
    %3357 = vmatpush1.bf16.msra.mxu0 %v2512
    %3358 = vmatprep.subr.bf16.mxu0 %v2515
    %3359 = vmatpush1.bf16.msra.mxu0 %v2514
    %3360 = vmatprep.subr.bf16.mxu0 %v2517
    %3361 = vmatpush1.bf16.msra.mxu0 %v2516
    %3362 = vmatprep.subr.bf16.mxu0 %v2519
    %3363 = vmatpush1.bf16.msra.mxu0 %v2518
    %3364 = vmatprep.subr.bf16.mxu0 %v2521
    %3365 = vmatpush1.bf16.msra.mxu0 %v2520
    %3366 = vmatprep.subr.bf16.mxu0 %v2523
    %3367 = vmatpush1.bf16.msra.mxu0 %v2522
    %3368 = vmatprep.subr.bf16.mxu0 %v2525
    %3369 = vmatpush1.bf16.msra.mxu0 %v2524
    %3370 = vmatprep.subr.bf16.mxu0 %v2527
    %3371 = vmatpush1.bf16.msra.mxu0 %v2526
    %3372 = vmatprep.subr.bf16.mxu0 %v2529
    %3373 = vmatpush1.bf16.msra.mxu0 %v2528
    %3374 = vmatprep.subr.bf16.mxu0 %v2531
    %3375 = vmatpush1.bf16.msra.mxu0 %v2530
    %3376 = vmatprep.subr.bf16.mxu0 %v2533
    %3377 = vmatpush1.bf16.msra.mxu0 %v2532
    %3378 = vmatprep.subr.bf16.mxu0 %v2535
    %3379 = vmatpush1.bf16.msra.mxu0 %v2534
    %3380 = vmatprep.subr.bf16.mxu0 %v2537
    %3381 = vmatpush1.bf16.msra.mxu0 %v2536
    %3382 = vmatprep.subr.bf16.mxu0 %v2539
    %3383 = vmatpush1.bf16.msra.mxu0 %v2538
    %3384 = vmatprep.subr.bf16.mxu0 %v2541
    %3385 = vmatpush1.bf16.msra.mxu0 %v2540
    %3386 = vmatprep.mubr.bf16.mxu0 %v754
    %3387 = vmatmul.mubr.bf16.gmra.mrb[0].mxu0 %v753
    %v3388 = vpop.f32.mrb[0].mxu0
    %v3389 = vadd.f32 %v3346, %v3388
    %v3390 = vpop.f32.mrb[0].mxu0
    %v3391 = vadd.f32 %v3348, %v3390
    %v3392 = vpop.f32.mrb[0].mxu0
    %v3393 = vadd.f32 %v3350, %v3392
    %v3394 = vpop.f32.mrb[0].mxu0
    %v3395 = vadd.f32 %v3352, %v3394
    %3396 = vdwg.mxu0
    %3397 = vmatprep.subr.bf16.mxu0 %v2543
    %3398 = vmatpush1.bf16.msra.mxu0 %v2542
    %3399 = vmatprep.subr.bf16.mxu0 %v2545
    %3400 = vmatpush1.bf16.msra.mxu0 %v2544
    %3401 = vmatprep.subr.bf16.mxu0 %v2547
    %3402 = vmatpush1.bf16.msra.mxu0 %v2546
    %3403 = vmatprep.subr.bf16.mxu0 %v2549
    %3404 = vmatpush1.bf16.msra.mxu0 %v2548
    %3405 = vmatprep.subr.bf16.mxu0 %v2551
    %3406 = vmatpush1.bf16.msra.mxu0 %v2550
    %3407 = vmatprep.subr.bf16.mxu0 %v2553
    %3408 = vmatpush1.bf16.msra.mxu0 %v2552
    %3409 = vmatprep.subr.bf16.mxu0 %v2555
    %3410 = vmatpush1.bf16.msra.mxu0 %v2554
    %3411 = vmatprep.subr.bf16.mxu0 %v2557
    %3412 = vmatpush1.bf16.msra.mxu0 %v2556
    %3413 = vmatprep.subr.bf16.mxu0 %v2559
    %3414 = vmatpush1.bf16.msra.mxu0 %v2558
    %3415 = vmatprep.subr.bf16.mxu0 %v2561
    %3416 = vmatpush1.bf16.msra.mxu0 %v2560
    %3417 = vmatprep.subr.bf16.mxu0 %v2563
    %3418 = vmatpush1.bf16.msra.mxu0 %v2562
    %3419 = vmatprep.subr.bf16.mxu0 %v2565
    %3420 = vmatpush1.bf16.msra.mxu0 %v2564
    %3421 = vmatprep.subr.bf16.mxu0 %v2567
    %3422 = vmatpush1.bf16.msra.mxu0 %v2566
    %3423 = vmatprep.subr.bf16.mxu0 %v2569
    %3424 = vmatpush1.bf16.msra.mxu0 %v2568
    %3425 = vmatprep.subr.bf16.mxu0 %v2571
    %3426 = vmatpush1.bf16.msra.mxu0 %v2570
    %3427 = vmatprep.subr.bf16.mxu0 %v2573
    %3428 = vmatpush1.bf16.msra.mxu0 %v2572
    %3429 = vmatprep.mubr.bf16.mxu0 %v756
    %3430 = vmatmul.mubr.bf16.gmra.mrb[0].mxu0 %v755
    %v3431 = vpop.f32.mrb[0].mxu0
    %v3432 = vadd.f32 %v3389, %v3431
    %v3433 = vpop.f32.mrb[0].mxu0
    %v3434 = vadd.f32 %v3391, %v3433
    %v3435 = vpop.f32.mrb[0].mxu0
    %v3436 = vadd.f32 %v3393, %v3435
    %v3437 = vpop.f32.mrb[0].mxu0
    %v3438 = vadd.f32 %v3395, %v3437
    %3439 = vdwg.mxu0
    %3440 = vmatprep.subr.bf16.mxu0 %v2575
    %3441 = vmatpush1.bf16.msra.mxu0 %v2574
    %3442 = vmatprep.subr.bf16.mxu0 %v2577
    %3443 = vmatpush1.bf16.msra.mxu0 %v2576
    %3444 = vmatprep.subr.bf16.mxu0 %v2579
    %3445 = vmatpush1.bf16.msra.mxu0 %v2578
    %3446 = vmatprep.subr.bf16.mxu0 %v2581
    %3447 = vmatpush1.bf16.msra.mxu0 %v2580
    %3448 = vmatprep.subr.bf16.mxu0 %v2583
    %3449 = vmatpush1.bf16.msra.mxu0 %v2582
    %3450 = vmatprep.subr.bf16.mxu0 %v2585
    %3451 = vmatpush1.bf16.msra.mxu0 %v2584
    %3452 = vmatprep.subr.bf16.mxu0 %v2587
    %3453 = vmatpush1.bf16.msra.mxu0 %v2586
    %3454 = vmatprep.subr.bf16.mxu0 %v2589
    %3455 = vmatpush1.bf16.msra.mxu0 %v2588
    %3456 = vmatprep.subr.bf16.mxu0 %v2591
    %3457 = vmatpush1.bf16.msra.mxu0 %v2590
    %3458 = vmatprep.subr.bf16.mxu0 %v2593
    %3459 = vmatpush1.bf16.msra.mxu0 %v2592
    %3460 = vmatprep.subr.bf16.mxu0 %v2595
    %3461 = vmatpush1.bf16.msra.mxu0 %v2594
    %3462 = vmatprep.subr.bf16.mxu0 %v2597
    %3463 = vmatpush1.bf16.msra.mxu0 %v2596
    %3464 = vmatprep.subr.bf16.mxu0 %v2599
    %3465 = vmatpush1.bf16.msra.mxu0 %v2598
    %3466 = vmatprep.subr.bf16.mxu0 %v2601
    %3467 = vmatpush1.bf16.msra.mxu0 %v2600
    %3468 = vmatprep.subr.bf16.mxu0 %v2603
    %3469 = vmatpush1.bf16.msra.mxu0 %v2602
    %3470 = vmatprep.subr.bf16.mxu0 %v2605
    %3471 = vmatpush1.bf16.msra.mxu0 %v2604
    %3472 = vmatprep.mubr.bf16.mxu0 %v758
    %3473 = vmatmul.mubr.bf16.gmra.mrb[0].mxu0 %v757
    %v3474 = vpop.f32.mrb[0].mxu0
    %v3475 = vadd.f32 %v3432, %v3474
    %v3476 = vpop.f32.mrb[0].mxu0
    %v3477 = vadd.f32 %v3434, %v3476
    %v3478 = vpop.f32.mrb[0].mxu0
    %v3479 = vadd.f32 %v3436, %v3478
    %v3480 = vpop.f32.mrb[0].mxu0
    %v3481 = vadd.f32 %v3438, %v3480
    %3482 = vdwg.mxu0
    %3483 = vmatprep.subr.bf16.mxu0 %v2607
    %3484 = vmatpush1.bf16.msra.mxu0 %v2606
    %3485 = vmatprep.subr.bf16.mxu0 %v2609
    %3486 = vmatpush1.bf16.msra.mxu0 %v2608
    %3487 = vmatprep.subr.bf16.mxu0 %v2611
    %3488 = vmatpush1.bf16.msra.mxu0 %v2610
    %3489 = vmatprep.subr.bf16.mxu0 %v2613
    %3490 = vmatpush1.bf16.msra.mxu0 %v2612
    %3491 = vmatprep.subr.bf16.mxu0 %v2615
    %3492 = vmatpush1.bf16.msra.mxu0 %v2614
    %3493 = vmatprep.subr.bf16.mxu0 %v2617
    %3494 = vmatpush1.bf16.msra.mxu0 %v2616
    %3495 = vmatprep.subr.bf16.mxu0 %v2619
    %3496 = vmatpush1.bf16.msra.mxu0 %v2618
    %3497 = vmatprep.subr.bf16.mxu0 %v2621
    %3498 = vmatpush1.bf16.msra.mxu0 %v2620
    %3499 = vmatprep.subr.bf16.mxu0 %v2623
    %3500 = vmatpush1.bf16.msra.mxu0 %v2622
    %3501 = vmatprep.subr.bf16.mxu0 %v2625
    %3502 = vmatpush1.bf16.msra.mxu0 %v2624
    %3503 = vmatprep.subr.bf16.mxu0 %v2627
    %3504 = vmatpush1.bf16.msra.mxu0 %v2626
    %3505 = vmatprep.subr.bf16.mxu0 %v2629
    %3506 = vmatpush1.bf16.msra.mxu0 %v2628
    %3507 = vmatprep.subr.bf16.mxu0 %v2631
    %3508 = vmatpush1.bf16.msra.mxu0 %v2630
    %3509 = vmatprep.subr.bf16.mxu0 %v2633
    %3510 = vmatpush1.bf16.msra.mxu0 %v2632
    %3511 = vmatprep.subr.bf16.mxu0 %v2635
    %3512 = vmatpush1.bf16.msra.mxu0 %v2634
    %3513 = vmatprep.subr.bf16.mxu0 %v2637
    %3514 = vmatpush1.bf16.msra.mxu0 %v2636
    %3515 = vmatprep.mubr.bf16.mxu0 %v760
    %3516 = vmatmul.mubr.bf16.gmra.mrb[0].mxu0 %v759
    %v3517 = vpop.f32.mrb[0].mxu0
    %v3518 = vadd.f32 %v3475, %v3517
    %v3519 = vpop.f32.mrb[0].mxu0
    %v3520 = vadd.f32 %v3477, %v3519
    %v3521 = vpop.f32.mrb[0].mxu0
    %v3522 = vadd.f32 %v3479, %v3521
    %v3523 = vpop.f32.mrb[0].mxu0
    %v3524 = vadd.f32 %v3481, %v3523
    %3525 = vdwg.mxu0
    %3526 = vmatprep.subr.bf16.mxu0 %v2639
    %3527 = vmatpush1.bf16.msra.mxu0 %v2638
    %3528 = vmatprep.subr.bf16.mxu0 %v2641
    %3529 = vmatpush1.bf16.msra.mxu0 %v2640
    %3530 = vmatprep.subr.bf16.mxu0 %v2643
    %3531 = vmatpush1.bf16.msra.mxu0 %v2642
    %3532 = vmatprep.subr.bf16.mxu0 %v2645
    %3533 = vmatpush1.bf16.msra.mxu0 %v2644
    %3534 = vmatprep.subr.bf16.mxu0 %v2647
    %3535 = vmatpush1.bf16.msra.mxu0 %v2646
    %3536 = vmatprep.subr.bf16.mxu0 %v2649
    %3537 = vmatpush1.bf16.msra.mxu0 %v2648
    %3538 = vmatprep.subr.bf16.mxu0 %v2651
    %3539 = vmatpush1.bf16.msra.mxu0 %v2650
    %3540 = vmatprep.subr.bf16.mxu0 %v2653
    %3541 = vmatpush1.bf16.msra.mxu0 %v2652
    %3542 = vmatprep.subr.bf16.mxu0 %v2655
    %3543 = vmatpush1.bf16.msra.mxu0 %v2654
    %3544 = vmatprep.subr.bf16.mxu0 %v2657
    %3545 = vmatpush1.bf16.msra.mxu0 %v2656
    %3546 = vmatprep.subr.bf16.mxu0 %v2659
    %3547 = vmatpush1.bf16.msra.mxu0 %v2658
    %3548 = vmatprep.subr.bf16.mxu0 %v2661
    %3549 = vmatpush1.bf16.msra.mxu0 %v2660
    %3550 = vmatprep.subr.bf16.mxu0 %v2663
    %3551 = vmatpush1.bf16.msra.mxu0 %v2662
    %3552 = vmatprep.subr.bf16.mxu0 %v2665
    %3553 = vmatpush1.bf16.msra.mxu0 %v2664
    %3554 = vmatprep.subr.bf16.mxu0 %v2667
    %3555 = vmatpush1.bf16.msra.mxu0 %v2666
    %3556 = vmatprep.subr.bf16.mxu0 %v2669
    %3557 = vmatpush1.bf16.msra.mxu0 %v2668
    %3558 = vmatprep.mubr.bf16.mxu0 %v762
    %3559 = vmatmul.mubr.bf16.gmra.mrb[0].mxu0 %v761
    %v3560 = vpop.f32.mrb[0].mxu0
    %v3561 = vadd.f32 %v3518, %v3560
    %v3562 = vpop.f32.mrb[0].mxu0
    %v3563 = vadd.f32 %v3520, %v3562
    %v3564 = vpop.f32.mrb[0].mxu0
    %v3565 = vadd.f32 %v3522, %v3564
    %v3566 = vpop.f32.mrb[0].mxu0
    %v3567 = vadd.f32 %v3524, %v3566
    %3568 = vdwg.mxu0
    %3569 = vmatprep.subr.bf16.mxu0 %v2671
    %3570 = vmatpush1.bf16.msra.mxu0 %v2670
    %3571 = vmatprep.subr.bf16.mxu0 %v2673
    %3572 = vmatpush1.bf16.msra.mxu0 %v2672
    %3573 = vmatprep.subr.bf16.mxu0 %v2675
    %3574 = vmatpush1.bf16.msra.mxu0 %v2674
    %3575 = vmatprep.subr.bf16.mxu0 %v2677
    %3576 = vmatpush1.bf16.msra.mxu0 %v2676
    %3577 = vmatprep.subr.bf16.mxu0 %v2679
    %3578 = vmatpush1.bf16.msra.mxu0 %v2678
    %3579 = vmatprep.subr.bf16.mxu0 %v2681
    %3580 = vmatpush1.bf16.msra.mxu0 %v2680
    %3581 = vmatprep.subr.bf16.mxu0 %v2683
    %3582 = vmatpush1.bf16.msra.mxu0 %v2682
    %3583 = vmatprep.subr.bf16.mxu0 %v2685
    %3584 = vmatpush1.bf16.msra.mxu0 %v2684
    %3585 = vmatprep.subr.bf16.mxu0 %v2687
    %3586 = vmatpush1.bf16.msra.mxu0 %v2686
    %3587 = vmatprep.subr.bf16.mxu0 %v2689
    %3588 = vmatpush1.bf16.msra.mxu0 %v2688
    %3589 = vmatprep.subr.bf16.mxu0 %v2691
    %3590 = vmatpush1.bf16.msra.mxu0 %v2690
    %3591 = vmatprep.subr.bf16.mxu0 %v2693
    %3592 = vmatpush1.bf16.msra.mxu0 %v2692
    %3593 = vmatprep.subr.bf16.mxu0 %v2695
    %3594 = vmatpush1.bf16.msra.mxu0 %v2694
    %3595 = vmatprep.subr.bf16.mxu0 %v2697
    %3596 = vmatpush1.bf16.msra.mxu0 %v2696
    %3597 = vmatprep.subr.bf16.mxu0 %v2699
    %3598 = vmatpush1.bf16.msra.mxu0 %v2698
    %3599 = vmatprep.subr.bf16.mxu0 %v2701
    %3600 = vmatpush1.bf16.msra.mxu0 %v2700
    %3601 = vmatprep.mubr.bf16.mxu0 %v764
    %3602 = vmatmul.mubr.bf16.gmra.mrb[0].mxu0 %v763
    %v3603 = vpop.f32.mrb[0].mxu0
    %v3604 = vadd.f32 %v3561, %v3603
    %v3605 = vpop.f32.mrb[0].mxu0
    %v3606 = vadd.f32 %v3563, %v3605
    %v3607 = vpop.f32.mrb[0].mxu0
    %v3608 = vadd.f32 %v3565, %v3607
    %v3609 = vpop.f32.mrb[0].mxu0
    %v3610 = vadd.f32 %v3567, %v3609
    %3611 = vdwg.mxu0
    %3612 = vmatprep.subr.bf16.mxu0 %v2703
    %3613 = vmatpush1.bf16.msra.mxu0 %v2702
    %3614 = vmatprep.subr.bf16.mxu0 %v2705
    %3615 = vmatpush1.bf16.msra.mxu0 %v2704
    %3616 = vmatprep.subr.bf16.mxu0 %v2707
    %3617 = vmatpush1.bf16.msra.mxu0 %v2706
    %3618 = vmatprep.subr.bf16.mxu0 %v2709
    %3619 = vmatpush1.bf16.msra.mxu0 %v2708
    %3620 = vmatprep.subr.bf16.mxu0 %v2711
    %3621 = vmatpush1.bf16.msra.mxu0 %v2710
    %3622 = vmatprep.subr.bf16.mxu0 %v2713
    %3623 = vmatpush1.bf16.msra.mxu0 %v2712
    %3624 = vmatprep.subr.bf16.mxu0 %v2715
    %3625 = vmatpush1.bf16.msra.mxu0 %v2714
    %3626 = vmatprep.subr.bf16.mxu0 %v2717
    %3627 = vmatpush1.bf16.msra.mxu0 %v2716
    %3628 = vmatprep.subr.bf16.mxu0 %v2719
    %3629 = vmatpush1.bf16.msra.mxu0 %v2718
    %3630 = vmatprep.subr.bf16.mxu0 %v2721
    %3631 = vmatpush1.bf16.msra.mxu0 %v2720
    %3632 = vmatprep.subr.bf16.mxu0 %v2723
    %3633 = vmatpush1.bf16.msra.mxu0 %v2722
    %3634 = vmatprep.subr.bf16.mxu0 %v2725
    %3635 = vmatpush1.bf16.msra.mxu0 %v2724
    %3636 = vmatprep.subr.bf16.mxu0 %v2727
    %3637 = vmatpush1.bf16.msra.mxu0 %v2726
    %3638 = vmatprep.subr.bf16.mxu0 %v2729
    %3639 = vmatpush1.bf16.msra.mxu0 %v2728
    %3640 = vmatprep.subr.bf16.mxu0 %v2731
    %3641 = vmatpush1.bf16.msra.mxu0 %v2730
    %3642 = vmatprep.subr.bf16.mxu0 %v2733
    %3643 = vmatpush1.bf16.msra.mxu0 %v2732
    %3644 = vmatprep.mubr.bf16.mxu0 %v766
    %3645 = vmatmul.mubr.bf16.gmra.mrb[0].mxu0 %v765
    %v3646 = vpop.f32.mrb[0].mxu0
    %v3647 = vadd.f32 %v3604, %v3646
    %v3648 = vpop.f32.mrb[0].mxu0
    %v3649 = vadd.f32 %v3606, %v3648
    %v3650 = vpop.f32.mrb[0].mxu0
    %v3651 = vadd.f32 %v3608, %v3650
    %v3652 = vpop.f32.mrb[0].mxu0
    %v3653 = vadd.f32 %v3610, %v3652
    %3654 = vdwg.mxu0
    %3655 = vmatprep.subr.bf16.mxu0 %v2735
    %3656 = vmatpush1.bf16.msra.mxu0 %v2734
    %3657 = vmatprep.subr.bf16.mxu0 %v2737
    %3658 = vmatpush1.bf16.msra.mxu0 %v2736
    %3659 = vmatprep.subr.bf16.mxu0 %v2739
    %3660 = vmatpush1.bf16.msra.mxu0 %v2738
    %3661 = vmatprep.subr.bf16.mxu0 %v2741
    %3662 = vmatpush1.bf16.msra.mxu0 %v2740
    %3663 = vmatprep.subr.bf16.mxu0 %v2743
    %3664 = vmatpush1.bf16.msra.mxu0 %v2742
    %3665 = vmatprep.subr.bf16.mxu0 %v2745
    %3666 = vmatpush1.bf16.msra.mxu0 %v2744
    %3667 = vmatprep.subr.bf16.mxu0 %v2747
    %3668 = vmatpush1.bf16.msra.mxu0 %v2746
    %3669 = vmatprep.subr.bf16.mxu0 %v2749
    %3670 = vmatpush1.bf16.msra.mxu0 %v2748
    %3671 = vmatprep.subr.bf16.mxu0 %v2751
    %3672 = vmatpush1.bf16.msra.mxu0 %v2750
    %3673 = vmatprep.subr.bf16.mxu0 %v2753
    %3674 = vmatpush1.bf16.msra.mxu0 %v2752
    %3675 = vmatprep.subr.bf16.mxu0 %v2755
    %3676 = vmatpush1.bf16.msra.mxu0 %v2754
    %3677 = vmatprep.subr.bf16.mxu0 %v2757
    %3678 = vmatpush1.bf16.msra.mxu0 %v2756
    %3679 = vmatprep.subr.bf16.mxu0 %v2759
    %3680 = vmatpush1.bf16.msra.mxu0 %v2758
    %3681 = vmatprep.subr.bf16.mxu0 %v2761
    %3682 = vmatpush1.bf16.msra.mxu0 %v2760
    %3683 = vmatprep.subr.bf16.mxu0 %v2763
    %3684 = vmatpush1.bf16.msra.mxu0 %v2762
    %3685 = vmatprep.subr.bf16.mxu0 %v2765
    %3686 = vmatpush1.bf16.msra.mxu0 %v2764
    %3687 = vmatprep.mubr.bf16.mxu0 %v768
    %3688 = vmatmul.mubr.bf16.gmra.mrb[0].mxu0 %v767
    %v3689 = vpop.f32.mrb[0].mxu0
    %v3690 = vadd.f32 %v3647, %v3689
    %v3691 = vpop.f32.mrb[0].mxu0
    %v3692 = vadd.f32 %v3649, %v3691
    %v3693 = vpop.f32.mrb[0].mxu0
    %v3694 = vadd.f32 %v3651, %v3693
    %v3695 = vpop.f32.mrb[0].mxu0
    %v3696 = vadd.f32 %v3653, %v3695
    %3697 = vdwg.mxu0
    %3698 = vmatprep.subr.bf16.mxu0 %v2767
    %3699 = vmatpush1.bf16.msra.mxu0 %v2766
    %3700 = vmatprep.subr.bf16.mxu0 %v2769
    %3701 = vmatpush1.bf16.msra.mxu0 %v2768
    %3702 = vmatprep.subr.bf16.mxu0 %v2771
    %3703 = vmatpush1.bf16.msra.mxu0 %v2770
    %3704 = vmatprep.subr.bf16.mxu0 %v2773
    %3705 = vmatpush1.bf16.msra.mxu0 %v2772
    %3706 = vmatprep.subr.bf16.mxu0 %v2775
    %3707 = vmatpush1.bf16.msra.mxu0 %v2774
    %3708 = vmatprep.subr.bf16.mxu0 %v2777
    %3709 = vmatpush1.bf16.msra.mxu0 %v2776
    %3710 = vmatprep.subr.bf16.mxu0 %v2779
    %3711 = vmatpush1.bf16.msra.mxu0 %v2778
    %3712 = vmatprep.subr.bf16.mxu0 %v2781
    %3713 = vmatpush1.bf16.msra.mxu0 %v2780
    %3714 = vmatprep.subr.bf16.mxu0 0
    %3715 = vmatpush1.bf16.msra.mxu0 0
    %3716 = vmatprep.subr.bf16.mxu0 0
    %3717 = vmatpush1.bf16.msra.mxu0 0
    %3718 = vmatprep.subr.bf16.mxu0 0
    %3719 = vmatpush1.bf16.msra.mxu0 0
    %3720 = vmatprep.subr.bf16.mxu0 0
    %3721 = vmatpush1.bf16.msra.mxu0 0
    %3722 = vmatprep.subr.bf16.mxu0 0
    %3723 = vmatpush1.bf16.msra.mxu0 0
    %3724 = vmatprep.subr.bf16.mxu0 0
    %3725 = vmatpush1.bf16.msra.mxu0 0
    %3726 = vmatprep.subr.bf16.mxu0 0
    %3727 = vmatpush1.bf16.msra.mxu0 0
    %3728 = vmatprep.subr.bf16.mxu0 0
    %3729 = vmatpush1.bf16.msra.mxu0 0
    %3730 = vmatprep.mubr.bf16.mxu0 0
    %3731 = vmatmul.mubr.bf16.gmra.mrb[0].mxu0 %v769
    %v3732 = vpop.f32.mrb[0].mxu0
    %v3733 = vadd.f32 %v3690, %v3732
    %v3734 = vpop.f32.mrb[0].mxu0
    %v3735 = vadd.f32 %v3692, %v3734
    %v3736 = vpop.f32.mrb[0].mxu0
    %v3737 = vadd.f32 %v3694, %v3736
    %v3738 = vpop.f32.mrb[0].mxu0
    %v3739 = vadd.f32 %v3696, %v3738
    %3740 = vdwg.mxu0
    %v3741 = vmax.f32 %v3733, 0.0
    %v3742 = vmax.f32 %v3735, 0.0
    %v3743 = vmax.f32 %v3737, 0.0
    %v3744 = vmax.f32 %v3739, 0.0
    %v3745 = vpack.c.bf16 %v3743, %v3741
    %v3746 = vpack.c.bf16 %v3744, %v3742
    %v3747 = vld [vmem:[#allocation8] sm:$0xf]
    %v3748 = vld [vmem:[#allocation8 + $0x4] sm:$0xf]
    %v3749 = vld [vmem:[#allocation8 + $0x8] sm:$0xf]
    %v3750 = vld [vmem:[#allocation8 + $0xc] sm:$0xf]
    %v3751 = vld [vmem:[#allocation8 + $0x10] sm:$0xf]
    %v3752 = vld [vmem:[#allocation8 + $0x14] sm:$0xf]
    %v3753 = vld [vmem:[#allocation8 + $0x18] sm:$0xf]
    %v3754 = vld [vmem:[#allocation8 + $0x1c] sm:$0xf]
    %v3755 = vld [vmem:[#allocation8 + $0x20] sm:$0xf]
    %v3756 = vld [vmem:[#allocation8 + $0x24] sm:$0xf]
    %v3757 = vld [vmem:[#allocation8 + $0x28] sm:$0xf]
    %v3758 = vld [vmem:[#allocation8 + $0x2c] sm:$0xf]
    %v3759 = vld [vmem:[#allocation8 + $0x30] sm:$0xf]
    %v3760 = vld [vmem:[#allocation8 + $0x34] sm:$0xf]
    %v3761 = vld [vmem:[#allocation8 + $0x38] sm:$0xf]
    %v3762 = vld [vmem:[#allocation8 + $0x3c] sm:$0xf]
    %v3763 = vld [vmem:[#allocation8 + $0x40] sm:$0xf]
    %v3764 = vld [vmem:[#allocation8 + $0x44] sm:$0xf]
    %v3765 = vld [vmem:[#allocation8 + $0x48] sm:$0xf]
    %v3766 = vld [vmem:[#allocation8 + $0x4c] sm:$0xf]
    %v3767 = vld [vmem:[#allocation8 + $0x50] sm:$0xf]
    %v3768 = vld [vmem:[#allocation8 + $0x54] sm:$0xf]
    %v3769 = vld [vmem:[#allocation8 + $0x58] sm:$0xf]
    %v3770 = vld [vmem:[#allocation8 + $0x5c] sm:$0xf]
    %v3771 = vld [vmem:[#allocation8 + $0x60] sm:$0xf]
    %v3772 = vld [vmem:[#allocation8 + $0x64] sm:$0xf]
    %v3773 = vld [vmem:[#allocation8 + $0x68] sm:$0xf]
    %v3774 = vld [vmem:[#allocation8 + $0x6c] sm:$0xf]
    %v3775 = vld [vmem:[#allocation8 + $0x70] sm:$0xf]
    %v3776 = vld [vmem:[#allocation8 + $0x74] sm:$0xf]
    %v3777 = vld [vmem:[#allocation8 + $0x78] sm:$0xf]
    %v3778 = vld [vmem:[#allocation8 + $0x7c] sm:$0xf]
    %v3779 = vld [vmem:[#allocation10] sm:$0x1]
    %v3781 = vlaneseq
    %v3782 = vshrl.u32 %v3781, 7
    %v3783 = vsub.s32 0, %v3782
    %v3784 = vrot.slane %v3779, %v3783
    %v3818 = vunpack.c.l.b16 %v3747
    %v3819 = vunpack.c.l.b16 %v3748
    %v3820 = vunpack.c.l.b16 %v3749
    %v3821 = vunpack.c.l.b16 %v3750
    %v3822 = vunpack.c.l.b16 %v3751
    %v3823 = vunpack.c.l.b16 %v3752
    %v3824 = vunpack.c.l.b16 %v3753
    %v3825 = vunpack.c.l.b16 %v3754
    %v3826 = vunpack.c.l.b16 %v3755
    %v3827 = vunpack.c.l.b16 %v3756
    %v3828 = vunpack.c.l.b16 %v3757
    %v3829 = vunpack.c.l.b16 %v3758
    %v3830 = vunpack.c.l.b16 %v3759
    %v3831 = vunpack.c.l.b16 %v3760
    %v3832 = vunpack.c.l.b16 %v3761
    %v3833 = vunpack.c.l.b16 %v3762
    %v3834 = vunpack.c.l.b16 %v3763
    %v3835 = vunpack.c.l.b16 %v3764
    %v3836 = vunpack.c.l.b16 %v3765
    %v3837 = vunpack.c.l.b16 %v3766
    %v3838 = vunpack.c.l.b16 %v3767
    %v3839 = vunpack.c.l.b16 %v3768
    %v3840 = vunpack.c.l.b16 %v3769
    %v3841 = vunpack.c.l.b16 %v3770
    %v3842 = vunpack.c.l.b16 %v3771
    %v3843 = vunpack.c.l.b16 %v3772
    %v3844 = vunpack.c.l.b16 %v3773
    %v3845 = vunpack.c.l.b16 %v3774
    %v3846 = vunpack.c.l.b16 %v3775
    %v3847 = vunpack.c.l.b16 %v3776
    %v3848 = vunpack.c.l.b16 %v3777
    %v3849 = vunpack.c.l.b16 %v3778
    %v3850 = vpack.c.b16 %v3819, %v3818
    %v3851 = vpack.c.b16 %v3821, %v3820
    %v3852 = vpack.c.b16 %v3823, %v3822
    %v3853 = vpack.c.b16 %v3825, %v3824
    %v3854 = vpack.c.b16 %v3827, %v3826
    %v3855 = vpack.c.b16 %v3829, %v3828
    %v3856 = vpack.c.b16 %v3831, %v3830
    %v3857 = vpack.c.b16 %v3833, %v3832
    %v3858 = vpack.c.b16 %v3835, %v3834
    %v3859 = vpack.c.b16 %v3837, %v3836
    %v3860 = vpack.c.b16 %v3839, %v3838
    %v3861 = vpack.c.b16 %v3841, %v3840
    %v3862 = vpack.c.b16 %v3843, %v3842
    %v3863 = vpack.c.b16 %v3845, %v3844
    %v3864 = vpack.c.b16 %v3847, %v3846
    %v3865 = vpack.c.b16 %v3849, %v3848
    %3882 = vmatprep.subr.bf16.mxu0 0
    %3883 = vmatpush1.bf16.msra.mxu0 %v3850
    %3884 = vmatprep.subr.bf16.mxu0 0
    %3885 = vmatpush1.bf16.msra.mxu0 %v3851
    %3886 = vmatprep.subr.bf16.mxu0 0
    %3887 = vmatpush1.bf16.msra.mxu0 %v3852
    %3888 = vmatprep.subr.bf16.mxu0 0
    %3889 = vmatpush1.bf16.msra.mxu0 %v3853
    %3890 = vmatprep.subr.bf16.mxu0 0
    %3891 = vmatpush1.bf16.msra.mxu0 %v3854
    %3892 = vmatprep.subr.bf16.mxu0 0
    %3893 = vmatpush1.bf16.msra.mxu0 %v3855
    %3894 = vmatprep.subr.bf16.mxu0 0
    %3895 = vmatpush1.bf16.msra.mxu0 %v3856
    %3896 = vmatprep.subr.bf16.mxu0 0
    %3897 = vmatpush1.bf16.msra.mxu0 %v3857
    %3898 = vmatprep.subr.bf16.mxu0 0
    %3899 = vmatpush1.bf16.msra.mxu0 %v3858
    %3900 = vmatprep.subr.bf16.mxu0 0
    %3901 = vmatpush1.bf16.msra.mxu0 %v3859
    %3902 = vmatprep.subr.bf16.mxu0 0
    %3903 = vmatpush1.bf16.msra.mxu0 %v3860
    %3904 = vmatprep.subr.bf16.mxu0 0
    %3905 = vmatpush1.bf16.msra.mxu0 %v3861
    %3906 = vmatprep.subr.bf16.mxu0 0
    %3907 = vmatpush1.bf16.msra.mxu0 %v3862
    %3908 = vmatprep.subr.bf16.mxu0 0
    %3909 = vmatpush1.bf16.msra.mxu0 %v3863
    %3910 = vmatprep.subr.bf16.mxu0 0
    %3911 = vmatpush1.bf16.msra.mxu0 %v3864
    %3912 = vmatprep.subr.bf16.mxu0 0
    %3913 = vmatpush1.bf16.msra.mxu0 %v3865
    %3914 = vmatprep.mubr.bf16.mxu0 %v3746
    %3915 = vmatmul.mubr.bf16.gmra.mrb[0].mxu0 %v3745
    %v3916 = vpop.f32.mrb[0].mxu0
    %v3917 = vadd.f32 %v3784, %v3916
    %v3918 = vpop.f32.mrb[0].mxu0
    %v3919 = vpop.f32.mrb[0].mxu0
    %v3920 = vadd.f32 %v3784, %v3919
    %v3921 = vpop.f32.mrb[0].mxu0
    %3922 = vdwg.mxu0
    %v3923 = vmax.f32 %v3917, 0.0
    %v3924 = vmax.f32 %v3920, 0.0
    %v3925 = vpack.c.bf16 %v3924, %v3923
    %v3926 = vld [vmem:[#allocation11] sm:$0xf]
    %v3927 = vld [vmem:[#allocation11 + $0x4] sm:$0xf]
    %v3928 = vld [vmem:[#allocation11 + $0x8] sm:$0xf]
    %v3929 = vld [vmem:[#allocation11 + $0xc] sm:$0xf]
    %v3930 = vld [vmem:[#allocation11 + $0x10] sm:$0xf]
    %v3931 = vld [vmem:[#allocation11 + $0x14] sm:$0xf]
    %v3932 = vld [vmem:[#allocation11 + $0x18] sm:$0xf]
    %v3933 = vld [vmem:[#allocation11 + $0x1c] sm:$0xf]
    %v3934 = vld [vmem:[#allocation11 + $0x20] sm:$0xf]
    %v3935 = vld [vmem:[#allocation11 + $0x24] sm:$0xf]
    %v3936 = vld [vmem:[#allocation11 + $0x28] sm:$0xf]
    %v3937 = vld [vmem:[#allocation11 + $0x2c] sm:$0xf]
    %v3938 = vld [vmem:[#allocation11 + $0x30] sm:$0xf]
    %v3939 = vld [vmem:[#allocation11 + $0x34] sm:$0xf]
    %v3940 = vld [vmem:[#allocation11 + $0x38] sm:$0xf]
    %v3941 = vld [vmem:[#allocation11 + $0x3c] sm:$0xf]
    %v3942 = vld [vmem:[#allocation13] sm:$0x1]
    %v3944 = vlaneseq
    %v3945 = vshrl.u32 %v3944, 7
    %v3946 = vsub.s32 0, %v3945
    %v3947 = vrot.slane %v3942, %v3946
    %v3965 = vunpack.c.l.b16 %v3926
    %v3966 = vunpack.c.l.b16 %v3927
    %v3967 = vunpack.c.l.b16 %v3928
    %v3968 = vunpack.c.l.b16 %v3929
    %v3969 = vunpack.c.l.b16 %v3930
    %v3970 = vunpack.c.l.b16 %v3931
    %v3971 = vunpack.c.l.b16 %v3932
    %v3972 = vunpack.c.l.b16 %v3933
    %v3973 = vunpack.c.l.b16 %v3934
    %v3974 = vunpack.c.l.b16 %v3935
    %v3975 = vunpack.c.l.b16 %v3936
    %v3976 = vunpack.c.l.b16 %v3937
    %v3977 = vunpack.c.l.b16 %v3938
    %v3978 = vunpack.c.l.b16 %v3939
    %v3979 = vunpack.c.l.b16 %v3940
    %v3980 = vunpack.c.l.b16 %v3941
    %v3981 = vpack.c.b16 %v3966, %v3965
    %v3982 = vpack.c.b16 %v3968, %v3967
    %v3983 = vpack.c.b16 %v3970, %v3969
    %v3984 = vpack.c.b16 %v3972, %v3971
    %v3985 = vpack.c.b16 %v3974, %v3973
    %v3986 = vpack.c.b16 %v3976, %v3975
    %v3987 = vpack.c.b16 %v3978, %v3977
    %v3988 = vpack.c.b16 %v3980, %v3979
    %3997 = vmatprep.subr.bf16.mxu0 0
    %3998 = vmatpush1.bf16.msra.mxu0 %v3981
    %3999 = vmatprep.subr.bf16.mxu0 0
    %4000 = vmatpush1.bf16.msra.mxu0 %v3982
    %4001 = vmatprep.subr.bf16.mxu0 0
    %4002 = vmatpush1.bf16.msra.mxu0 %v3983
    %4003 = vmatprep.subr.bf16.mxu0 0
    %4004 = vmatpush1.bf16.msra.mxu0 %v3984
    %4005 = vmatprep.subr.bf16.mxu0 0
    %4006 = vmatpush1.bf16.msra.mxu0 %v3985
    %4007 = vmatprep.subr.bf16.mxu0 0
    %4008 = vmatpush1.bf16.msra.mxu0 %v3986
    %4009 = vmatprep.subr.bf16.mxu0 0
    %4010 = vmatpush1.bf16.msra.mxu0 %v3987
    %4011 = vmatprep.subr.bf16.mxu0 0
    %4012 = vmatpush1.bf16.msra.mxu0 %v3988
    %4013 = vmatprep.subr.bf16.mxu0 0
    %4014 = vmatpush1.bf16.msra.mxu0 0
    %4015 = vmatprep.subr.bf16.mxu0 0
    %4016 = vmatpush1.bf16.msra.mxu0 0
    %4017 = vmatprep.subr.bf16.mxu0 0
    %4018 = vmatpush1.bf16.msra.mxu0 0
    %4019 = vmatprep.subr.bf16.mxu0 0
    %4020 = vmatpush1.bf16.msra.mxu0 0
    %4021 = vmatprep.subr.bf16.mxu0 0
    %4022 = vmatpush1.bf16.msra.mxu0 0
    %4023 = vmatprep.subr.bf16.mxu0 0
    %4024 = vmatpush1.bf16.msra.mxu0 0
    %4025 = vmatprep.subr.bf16.mxu0 0
    %4026 = vmatpush1.bf16.msra.mxu0 0
    %4027 = vmatprep.subr.bf16.mxu0 0
    %4028 = vmatpush1.bf16.msra.mxu0 0
    %4029 = vmatprep.mubr.bf16.mxu0 0
    %4030 = vmatmul.mubr.bf16.gmra.mrb[0].mxu0 %v3925
    %v4031 = vpop.f32.mrb[0].mxu0
    %v4032 = vadd.f32 %v3947, %v4031
    %v4033 = vpop.f32.mrb[0].mxu0
    %v4034 = vpop.f32.mrb[0].mxu0
    %v4035 = vadd.f32 %v3947, %v4034
    %v4036 = vpop.f32.mrb[0].mxu0
    %4037 = vdwg.mxu0
    %v4038 = vpack.c.bf16 %v4035, %v4032
    %v4040 = vcombine.high %v4038, %v4038
    %v4042 = vunpack.c.l.s4 1966171168
    %v4043 = vunpack.c.0.s8 %v4042
    %v4044 = vlaneseq
    %v4045 = vshrl.u32 %v4044, 7
    %v4046 = vsub.s32 %v4043, %v4045
    %v4047 = vrot.slane %v4038, %v4046
    %v4049 = vunpack.c.l.s4 1966171168
    %v4050 = vunpack.c.0.s8 %v4049
    %v4051 = vlaneseq
    %v4052 = vshrl.u32 %v4051, 7
    %v4053 = vsub.s32 %v4050, %v4052
    %v4054 = vrot.slane %v4040, %v4053
    %v4055 = vcombine.high %v4047, %v4047
    %v4056 = vcombine.high %v4054, %v4054
    %v4058 = vunpack.c.l.s4 1966171168
    %v4059 = vunpack.c.0.s8 %v4058
    %v4060 = vlaneseq
    %v4061 = vshrl.u32 %v4060, 7
    %v4062 = vsub.s32 %v4059, %v4061
    %v4063 = vrot.slane %v4047, %v4062
    %v4065 = vunpack.c.l.s4 1966171168
    %v4066 = vunpack.c.0.s8 %v4065
    %v4067 = vlaneseq
    %v4068 = vshrl.u32 %v4067, 7
    %v4069 = vsub.s32 %v4066, %v4068
    %v4070 = vrot.slane %v4054, %v4069
    %v4072 = vunpack.c.l.s4 1966171168
    %v4073 = vunpack.c.0.s8 %v4072
    %v4074 = vlaneseq
    %v4075 = vshrl.u32 %v4074, 7
    %v4076 = vsub.s32 %v4073, %v4075
    %v4077 = vrot.slane %v4055, %v4076
    %v4079 = vunpack.c.l.s4 1966171168
    %v4080 = vunpack.c.0.s8 %v4079
    %v4081 = vlaneseq
    %v4082 = vshrl.u32 %v4081, 7
    %v4083 = vsub.s32 %v4080, %v4082
    %v4084 = vrot.slane %v4056, %v4083
    %v4085 = vcombine.high %v4063, %v4063
    %v4086 = vcombine.high %v4070, %v4070
    %v4087 = vcombine.high %v4077, %v4077
    %v4088 = vcombine.high %v4084, %v4084
    %4097 = vst [vmem:[#allocation14] sm:$0x1] %v4063
    %4098 = vst [vmem:[#allocation14 + $0x1] sm:$0x1] %v4077
    %4099 = vst [vmem:[#allocation14 + $0x2] sm:$0x1] %v4085
    %4100 = vst [vmem:[#allocation14 + $0x3] sm:$0x1] %v4087
    %4101 = vst [vmem:[#allocation14 + $0x4] sm:$0x1] %v4070
    %4102 = vst [vmem:[#allocation14 + $0x5] sm:$0x1] %v4084
    %4103 = vst [vmem:[#allocation14 + $0x6] sm:$0x1] %v4086
    %4104 = vst [vmem:[#allocation14 + $0x7] sm:$0x1] %v4088
    // Predicated region
    $region58: #{adda_classifier_forward.1} parent=1 // pred_check
      _
    $region59: #{adda_classifier_forward.1} parent=1 // pred_check_branch
      %4106 = sbr.rel (0) target = $region61
    $region60: #{adda_classifier_forward.1} parent=1 // pred_region
      %s4108 = ssub.s32 128, 16
      %4109 = vsyncadd [#allocation4], %s4108
      %s4110 = sshll.u32 [#allocation14], 4
      %s4111 = int_to_ptr.vmem [resolvable:$true] %s4110
      %4116 = dma.vmem_to_hbm [thread:$0]  %s4111, 16, %s7, [#allocation4], 16, 16, 1
    $region61: #{adda_classifier_forward.1} parent=1 // pred_fallthru
      _
    // Predicated region
    $region62: #{adda_classifier_forward.1} parent=1 // pred_check
      _
    $region63: #{adda_classifier_forward.1} parent=1 // pred_check_branch
      %4118 = sbr.rel (0) target = $region65
    $region64: #{adda_classifier_forward.1} parent=1 // pred_region
      %4119 = dma.done [#allocation4], 128
    $region65: #{adda_classifier_forward.1} parent=1 // pred_fallthru
      _
    %4120 = vsyncpa [#allocation3], 1
    %4121 = vsyncpa [#allocation6], 1
    %4122 = vsyncpa [#allocation9], 1
    %4123 = vsyncpa [#allocation12], 1
    %4124 = vsyncpa [#allocation4], 1

</llo_original>
